<compile_context>
chip_gen: v7x
topology: tpu7x:2x2x1
jax: 0.10.0
libtpu: 0.0.40
codegen_flags: <defaults>
</compile_context>

<pallas_src>
import jax
import jax.numpy as jnp
from jax.experimental import pallas as pl
from jax.experimental.pallas import tpu as pltpu

IMG_STACK = 4
CONV_CFG = [  # (cin, cout, kernel, stride)
    (IMG_STACK, 8, 4, 2),
    (8, 16, 3, 2),
    (16, 32, 3, 2),
    (32, 64, 3, 2),
    (64, 128, 3, 1),
    (128, 256, 3, 1),
]
ACT_DTYPE = jnp.bfloat16


# ----------------------------------------------------------------------------
# Pallas kernel 1: fused  y = relu(patches @ W + b), M-gridded
# ----------------------------------------------------------------------------
def _mm_bias_relu_kernel(p_ref, w_ref, b_ref, o_ref):
    y = jnp.dot(p_ref[...], w_ref[...], preferred_element_type=jnp.float32)
    o_ref[...] = jnp.maximum(y + b_ref[...], 0.0).astype(o_ref.dtype)


def mm_bias_relu(patches, w, b, out_dtype=ACT_DTYPE, block_m=512):
    M, K = patches.shape
    K2, N = w.shape
    assert K == K2, (K, K2)
    bm = block_m if M > block_m else M        # 512 (8-aligned) or the full M
    grid = (pl.cdiv(M, bm),)
    return pl.pallas_call(
        _mm_bias_relu_kernel,
        out_shape=jax.ShapeDtypeStruct((M, N), out_dtype),
        grid=grid,
        in_specs=[
            pl.BlockSpec((bm, K), lambda i: (i, 0)),
            pl.BlockSpec((K, N), lambda i: (0, 0)),
            pl.BlockSpec((1, N), lambda i: (0, 0)),
        ],
        out_specs=pl.BlockSpec((bm, N), lambda i: (i, 0)),
        compiler_params=pltpu.CompilerParams(
            dimension_semantics=("parallel",),
            vmem_limit_bytes=32 * 1024 * 1024,
        ),
    )(patches, w, b)


# ----------------------------------------------------------------------------
# Pallas kernel 2: fused tail = conv5 + conv6 + v / fc / alpha / beta heads
# ----------------------------------------------------------------------------
def _tail_kernel(p5_ref, w5_ref, b5_ref, w6_ref, b6_ref,
                 w1_ref, b1_ref, w2_ref, b2_ref, out_ref, a5_scr):
    batch = out_ref.shape[0]
    # conv5: all 9 output positions + batch in ONE matmul (rows are s-major).
    a5 = jnp.dot(p5_ref[...], w5_ref[...], preferred_element_type=jnp.float32)
    a5 = jnp.maximum(a5 + b5_ref[...], 0.0).astype(ACT_DTYPE)        # (9B, 128)
    # relayout (9B,128) -> (B, 9*128): 9 lane-aligned static stores to scratch
    for s in range(9):
        a5_scr[:, s * 128:(s + 1) * 128] = a5[s * batch:(s + 1) * batch, :]
    # conv6 (3x3 -> 1x1): ONE matmul with the (1152, 256) packed weight.
    a6 = jnp.dot(a5_scr[...], w6_ref[...], preferred_element_type=jnp.float32)
    a6 = jnp.maximum(a6 + b6_ref[...], 0.0).astype(ACT_DTYPE)        # (B, 256)
    # fused heads stage 1: [v-hidden | fc-hidden], each zero-padded 100 -> 128
    h = jnp.dot(a6, w1_ref[...], preferred_element_type=jnp.float32)
    h = jnp.maximum(h + b1_ref[...], 0.0).astype(ACT_DTYPE)          # (B, 256)
    # fused heads stage 2: columns = [alpha(3) | beta(3) | v(1) | pad(1)]
    z = jnp.dot(h, w2_ref[...], preferred_element_type=jnp.float32) + b2_ref[...]
    # stable softplus(z)+1 (f32, log1p form) on the alpha/beta lanes only
    sp1 = jnp.maximum(z, 0.0) + jnp.log1p(jnp.exp(-jnp.abs(z))) + 1.0
    lane = jax.lax.broadcasted_iota(jnp.int32, z.shape, 1)
    out_ref[...] = jnp.where(lane < 6, sp1, z)


def tail_forward(p5, pr):
    M, K5 = p5.shape                   # (9*B, 576)
    B = M // 9
    full = lambda shape: pl.BlockSpec(shape, lambda: (0, 0))
    return pl.pallas_call(
        _tail_kernel,
        out_shape=jax.ShapeDtypeStruct((B, 8), jnp.float32),
        in_specs=[
            full((M, K5)),
            full(pr["w5"].shape), full(pr["b5"].shape),
            full(pr["w6"].shape), full(pr["b6"].shape),
            full(pr["w1c"].shape), full(pr["b1c"].shape),
            full(pr["w2c"].shape), full(pr["b2c"].shape),
        ],
        out_specs=full((B, 8)),
        scratch_shapes=[pltpu.VMEM((B, 9 * 128), ACT_DTYPE)],
    )(p5, pr["w5"], pr["b5"], pr["w6"], pr["b6"],
      pr["w1c"], pr["b1c"], pr["w2c"], pr["b2c"])


# ----------------------------------------------------------------------------
# Transpose-free NHWC im2col (cheap strided slices + channel concat, XLA-side)
# ----------------------------------------------------------------------------
def _im2col_nhwc(x, k, stride):
    """x: (B,H,W,C) -> patches (B*OH*OW, k*k*C); column order = (ki, kj, c)."""
    B, H, W, C = x.shape
    OH = (H - k) // stride + 1
    OW = (W - k) // stride + 1
    cols = [x[:, i:i + stride * OH:stride, j:j + stride * OW:stride, :]
            for i in range(k) for j in range(k)]
    patches = jnp.concatenate(cols, axis=-1)          # (B, OH, OW, k*k*C)
    return patches.reshape(B * OH * OW, k * k * C), OH, OW


# ----------------------------------------------------------------------------
# Parameter initialization (deterministic, mirrors the PyTorch __init__),
# with weights pre-packed into matmul-ready bf16 layouts.
# ----------------------------------------------------------------------------
def _xavier_uniform_conv(key, cout, cin, k, gain):
    fan_in = cin * k * k
    fan_out = cout * k * k
    limit = gain * (6.0 / (fan_in + fan_out)) ** 0.5
    return jax.random.uniform(key, (cout, cin, k, k), jnp.float32, -limit, limit)


def _pack_conv(w):
    """(Cout, Cin, kh, kw) -> matmul-ready (kh*kw*Cin, Cout) bf16 ((i,j,c) order)."""
    cout, cin, kh, kw = w.shape
    return jnp.transpose(w, (2, 3, 1, 0)).reshape(kh * kw * cin, cout).astype(ACT_DTYPE)


def _linear_init(key, fan_in, fan_out):
    # PyTorch Linear default: U(-1/sqrt(fan_in), 1/sqrt(fan_in))
    kw_, kb_ = jax.random.split(key)
    lim = 1.0 / (fan_in ** 0.5)
    w = jax.random.uniform(kw_, (fan_in, fan_out), jnp.float32, -lim, lim)
    b = jax.random.uniform(kb_, (fan_out,), jnp.float32, -lim, lim)
    return w, b


def init_params(key):
    relu_gain = 2.0 ** 0.5              # nn.init.calculate_gain('relu')
    conv_raw = []
    for (cin, cout, k, _s) in CONV_CFG:
        key, wk = jax.random.split(key)
        w = _xavier_uniform_conv(wk, cout, cin, k, relu_gain)
        b = jnp.full((cout,), 0.1, jnp.float32)
        conv_raw.append((w, b))

    key, k1, k2, k3, k4, k5 = jax.random.split(key, 6)
    v1_w, v1_b = _linear_init(k1, 256, 100)
    v2_w, v2_b = _linear_init(k2, 100, 1)
    fc_w, fc_b = _linear_init(k3, 256, 100)
    a_w, a_b = _linear_init(k4, 100, 3)
    b_w, b_b = _linear_init(k5, 100, 3)

    raw = dict(convs=conv_raw, v1_w=v1_w, v1_b=v1_b, v2_w=v2_w, v2_b=v2_b,
               fc_w=fc_w, fc_b=fc_b, a_w=a_w, a_b=a_b, b_w=b_w, b_b=b_b)

    params = {"convs": []}
    for idx in range(4):                # stride-2 layers
        w, b = conv_raw[idx]
        params["convs"].append((_pack_conv(w), b.reshape(1, -1)))

    # fused-tail conv layers
    w5, b5 = conv_raw[4]
    w6, b6 = conv_raw[5]
    params["w5"] = _pack_conv(w5)                                       # (576, 128)
    params["b5"] = b5.reshape(1, -1)                                    # (1, 128)
    params["w6"] = (jnp.transpose(w6, (2, 3, 1, 0))
                    .reshape(9 * 128, 256).astype(ACT_DTYPE))           # (1152, 256)
    params["b6"] = b6.reshape(1, -1)                                    # (1, 256)

    # fused heads: hidden padded 100 -> 128; stage1 = [v1 | fc], stage2 = [a|b|v|pad]
    H = 128
    w1c = jnp.zeros((256, 2 * H), jnp.float32)
    w1c = w1c.at[:, 0:100].set(v1_w).at[:, H:H + 100].set(fc_w)
    b1c = jnp.zeros((1, 2 * H), jnp.float32)
    b1c = b1c.at[0, 0:100].set(v1_b).at[0, H:H + 100].set(fc_b)
    w2c = jnp.zeros((2 * H, 8), jnp.float32)
    w2c = w2c.at[0:100, 6:7].set(v2_w)
    w2c = w2c.at[H:H + 100, 0:3].set(a_w)
    w2c = w2c.at[H:H + 100, 3:6].set(b_w)
    b2c = jnp.zeros((1, 8), jnp.float32)
    b2c = b2c.at[0, 0:3].set(a_b).at[0, 3:6].set(b_b).at[0, 6].set(v2_b[0])
    params["w1c"] = w1c.astype(ACT_DTYPE)
    params["b1c"] = b1c
    params["w2c"] = w2c.astype(ACT_DTYPE)
    params["b2c"] = b2c
    return params, raw, key


# ----------------------------------------------------------------------------
# Forward pass: ((alpha, beta), v)
# ----------------------------------------------------------------------------
@jax.jit
def net_forward(x_nchw, params):
    x = jnp.transpose(x_nchw, (0, 2, 3, 1)).astype(ACT_DTYPE)   # NHWC, bf16 (once)
    B = x.shape[0]

    # stride-2 conv stack (layers 1-4): one gridded matmul+bias+ReLU kernel each
    for idx in range(4):
        _cin, cout, k, stride = CONV_CFG[idx]
        w, b = params["convs"][idx]
        patches, OH, OW = _im2col_nhwc(x, k, stride)
        y = mm_bias_relu(patches, w, b)            # (B*OH*OW, cout) bf16
        x = y.reshape(B, OH, OW, cout)             # free leading-dim reshape

    # conv5 patches in s-major 2D layout (9*B, 576): rows ordered (spatial, batch)
    cols = [x[:, i:i + 3, j:j + 3, :] for i in range(3) for j in range(3)]
    p5 = jnp.concatenate(cols, axis=-1)            # (B, 3, 3, 576)
    p5 = jnp.transpose(p5, (1, 2, 0, 3)).reshape(9 * B, 9 * 64)

    out = tail_forward(p5, params)                 # (B, 8) f32
    alpha = out[:, 0:3]
    beta = out[:, 3:6]
    v = out[:, 6:7]
    return (alpha, beta), v


# ----------------------------------------------------------------------------
# Pure-JAX f32 reference (lax.conv) for a loose-tolerance correctness check
# ----------------------------------------------------------------------------
def ref_forward(x_nchw, raw):
    x = x_nchw.astype(jnp.float32)
    for (w, b), (_cin, _cout, _k, s) in zip(raw["convs"], CONV_CFG):
        x = jax.lax.conv_general_dilated(
            x, w, window_strides=(s, s), padding="VALID",
            dimension_numbers=("NCHW", "OIHW", "NCHW"))
        x = jax.nn.relu(x + b[None, :, None, None])
    feat = x.reshape(x.shape[0], 256)
    hv = jax.nn.relu(feat @ raw["v1_w"] + raw["v1_b"])
    v = hv @ raw["v2_w"] + raw["v2_b"]
    hf = jax.nn.relu(feat @ raw["fc_w"] + raw["fc_b"])
    alpha = jax.nn.softplus(hf @ raw["a_w"] + raw["a_b"]) + 1.0
    beta = jax.nn.softplus(hf @ raw["b_w"] + raw["b_b"]) + 1.0
    return alpha, beta, v


if __name__ == "__main__":
    key = jax.random.PRNGKey(0)
    params, raw, key = init_params(key)
    key, xk = jax.random.split(key)
    # 96x96 input is required so the conv stack ends at 1x1 (view(-1, 256)).
    x = jax.random.normal(xk, (2, IMG_STACK, 96, 96), dtype=jnp.float32)

    (alpha, beta), v = net_forward(x, params)
    jax.block_until_ready((alpha, beta, v))

    assert alpha.shape == (2, 3) and beta.shape == (2, 3) and v.shape == (2, 1)
    assert bool(jnp.all(alpha >= 1.0)) and bool(jnp.all(beta >= 1.0))
    assert bool(jnp.all(jnp.isfinite(alpha)))
    assert bool(jnp.all(jnp.isfinite(beta)))
    assert bool(jnp.all(jnp.isfinite(v)))

    # Loose-tolerance check vs. pure-JAX f32 reference (Pallas path holds
    # weights/activations in bf16, so exact agreement is not expected).
    a_r, b_r, v_r = ref_forward(x, raw)
    for name, got, want in (("alpha", alpha, a_r), ("beta", beta, b_r), ("v", v, v_r)):
        err = float(jnp.max(jnp.abs(got - want)))
        assert err < 0.15, f"{name} mismatch vs reference: max abs err {err}"

    print("KERNEL_OK")
</pallas_src>

<mosaic_0001>
module attributes {stable_mosaic.version = 11 : i64} {
  func.func @_mm_bias_relu_kernel(%arg0: i32, %arg1: memref<512x64xbf16, #tpu.memory_space<vmem>>, %arg2: memref<64x8xbf16, #tpu.memory_space<vmem>>, %arg3: memref<1x8xf32, #tpu.memory_space<vmem>>, %arg4: memref<512x8xbf16, #tpu.memory_space<vmem>>) attributes {dimension_semantics = [#tpu.dimension_semantics<parallel>], iteration_bounds = array<i64: 9>, scalar_prefetch = 0 : i64, scratch_operands = 0 : i64, tpu.core_type = #tpu.core_type<tc>, window_params = [{transform_indices = @transform_0, window_bounds = array<i64: 512, 64>}, {pipeline_mode = #tpu.pipeline_mode<synchronous>, transform_indices = @transform_1, window_bounds = array<i64: 64, 8>}, {pipeline_mode = #tpu.pipeline_mode<synchronous>, transform_indices = @transform_2, window_bounds = array<i64: 1, 8>}, {transform_indices = @transform_3, window_bounds = array<i64: 512, 8>}]} {
    %c0 = arith.constant 0 : index
    %c0_0 = arith.constant 0 : index
    %0 = vector.load %arg1[%c0, %c0_0] : memref<512x64xbf16, #tpu.memory_space<vmem>>, vector<512x64xbf16>
    %c0_1 = arith.constant 0 : index
    %c0_2 = arith.constant 0 : index
    %1 = vector.load %arg2[%c0_1, %c0_2] : memref<64x8xbf16, #tpu.memory_space<vmem>>, vector<64x8xbf16>
    %cst = arith.constant dense<0.000000e+00> : vector<512x8xf32>
    %2 = tpu.matmul %0, %1, %cst {dimension_numbers = #tpu.dot_dimension_numbers<[1], [0], [0], [1], [0, 0, 1, 1], [], []>} : vector<512x64xbf16>, vector<64x8xbf16>, vector<512x8xf32> -> vector<512x8xf32>
    %c0_3 = arith.constant 0 : index
    %c0_4 = arith.constant 0 : index
    %3 = vector.load %arg3[%c0_3, %c0_4] : memref<1x8xf32, #tpu.memory_space<vmem>>, vector<1x8xf32>
    %4 = vector.broadcast %3 : vector<1x8xf32> to vector<512x8xf32>
    %5 = arith.addf %2, %4 : vector<512x8xf32>
    %cst_5 = arith.constant 0.000000e+00 : f32
    %6 = vector.broadcast %cst_5 : f32 to vector<512x8xf32>
    %7 = arith.maximumf %5, %6 : vector<512x8xf32>
    %8 = arith.truncf %7 : vector<512x8xf32> to vector<512x8xbf16>
    %c0_6 = arith.constant 0 : index
    %c0_7 = arith.constant 0 : index
    %9 = vector.load %arg4[%c0_6, %c0_7] : memref<512x8xbf16, #tpu.memory_space<vmem>>, vector<512x8xbf16>
    tpu.vector_store %arg4[%c0_6, %c0_7], %8 {strides = array<i32>} : memref<512x8xbf16, #tpu.memory_space<vmem>>, vector<512x8xbf16>,
    return
  }
  func.func @transform_0(%arg0: i32) -> (i32, i32) {
    %c0_i32 = arith.constant 0 : i32
    %c0_i32_0 = arith.constant 0 : i32
    return %arg0, %c0_i32 : i32, i32
  }
  func.func @transform_1(%arg0: i32) -> (i32, i32) {
    %c0_i32 = arith.constant 0 : i32
    %c0_i32_0 = arith.constant 0 : i32
    %c0_i32_1 = arith.constant 0 : i32
    return %c0_i32, %c0_i32_0 : i32, i32
  }
  func.func @transform_2(%arg0: i32) -> (i32, i32) {
    %c0_i32 = arith.constant 0 : i32
    %c0_i32_0 = arith.constant 0 : i32
    %c0_i32_1 = arith.constant 0 : i32
    return %c0_i32, %c0_i32_0 : i32, i32
  }
  func.func @transform_3(%arg0: i32) -> (i32, i32) {
    %c0_i32 = arith.constant 0 : i32
    %c0_i32_0 = arith.constant 0 : i32
    return %arg0, %c0_i32 : i32, i32
  }
}

module attributes {stable_mosaic.version = 11 : i64} {
  func.func @_mm_bias_relu_kernel(%arg0: i32, %arg1: memref<512x72xbf16, #tpu.memory_space<vmem>>, %arg2: memref<72x16xbf16, #tpu.memory_space<vmem>>, %arg3: memref<1x16xf32, #tpu.memory_space<vmem>>, %arg4: memref<512x16xbf16, #tpu.memory_space<vmem>>) attributes {dimension_semantics = [#tpu.dimension_semantics<parallel>], iteration_bounds = array<i64: 3>, scalar_prefetch = 0 : i64, scratch_operands = 0 : i64, tpu.core_type = #tpu.core_type<tc>, window_params = [{transform_indices = @transform_0, window_bounds = array<i64: 512, 72>}, {pipeline_mode = #tpu.pipeline_mode<synchronous>, transform_indices = @transform_1, window_bounds = array<i64: 72, 16>}, {pipeline_mode = #tpu.pipeline_mode<synchronous>, transform_indices = @transform_2, window_bounds = array<i64: 1, 16>}, {transform_indices = @transform_3, window_bounds = array<i64: 512, 16>}]} {
    %c0 = arith.constant 0 : index
    %c0_0 = arith.constant 0 : index
    %0 = vector.load %arg1[%c0, %c0_0] : memref<512x72xbf16, #tpu.memory_space<vmem>>, vector<512x72xbf16>
    %c0_1 = arith.constant 0 : index
    %c0_2 = arith.constant 0 : index
    %1 = vector.load %arg2[%c0_1, %c0_2] : memref<72x16xbf16, #tpu.memory_space<vmem>>, vector<72x16xbf16>
    %cst = arith.constant dense<0.000000e+00> : vector<512x16xf32>
    %2 = tpu.matmul %0, %1, %cst {dimension_numbers = #tpu.dot_dimension_numbers<[1], [0], [0], [1], [0, 0, 1, 1], [], []>} : vector<512x72xbf16>, vector<72x16xbf16>, vector<512x16xf32> -> vector<512x16xf32>
    %c0_3 = arith.constant 0 : index
    %c0_4 = arith.constant 0 : index
    %3 = vector.load %arg3[%c0_3, %c0_4] : memref<1x16xf32, #tpu.memory_space<vmem>>, vector<1x16xf32>
    %4 = vector.broadcast %3 : vector<1x16xf32> to vector<512x16xf32>
    %5 = arith.addf %2, %4 : vector<512x16xf32>
    %cst_5 = arith.constant 0.000000e+00 : f32
    %6 = vector.broadcast %cst_5 : f32 to vector<512x16xf32>
    %7 = arith.maximumf %5, %6 : vector<512x16xf32>
    %8 = arith.truncf %7 : vector<512x16xf32> to vector<512x16xbf16>
    %c0_6 = arith.constant 0 : index
    %c0_7 = arith.constant 0 : index
    %9 = vector.load %arg4[%c0_6, %c0_7] : memref<512x16xbf16, #tpu.memory_space<vmem>>, vector<512x16xbf16>
    tpu.vector_store %arg4[%c0_6, %c0_7], %8 {strides = array<i32>} : memref<512x16xbf16, #tpu.memory_space<vmem>>, vector<512x16xbf16>,
    return
  }
  func.func @transform_0(%arg0: i32) -> (i32, i32) {
    %c0_i32 = arith.constant 0 : i32
    %c0_i32_0 = arith.constant 0 : i32
    return %arg0, %c0_i32 : i32, i32
  }
  func.func @transform_1(%arg0: i32) -> (i32, i32) {
    %c0_i32 = arith.constant 0 : i32
    %c0_i32_0 = arith.constant 0 : i32
    %c0_i32_1 = arith.constant 0 : i32
    return %c0_i32, %c0_i32_0 : i32, i32
  }
  func.func @transform_2(%arg0: i32) -> (i32, i32) {
    %c0_i32 = arith.constant 0 : i32
    %c0_i32_0 = arith.constant 0 : i32
    %c0_i32_1 = arith.constant 0 : i32
    return %c0_i32, %c0_i32_0 : i32, i32
  }
  func.func @transform_3(%arg0: i32) -> (i32, i32) {
    %c0_i32 = arith.constant 0 : i32
    %c0_i32_0 = arith.constant 0 : i32
    return %arg0, %c0_i32 : i32, i32
  }
}

module attributes {stable_mosaic.version = 11 : i64} {
  func.func @_mm_bias_relu_kernel(%arg0: i32, %arg1: memref<242x144xbf16, #tpu.memory_space<vmem>>, %arg2: memref<144x32xbf16, #tpu.memory_space<vmem>>, %arg3: memref<1x32xf32, #tpu.memory_space<vmem>>, %arg4: memref<242x32xbf16, #tpu.memory_space<vmem>>) attributes {dimension_semantics = [#tpu.dimension_semantics<parallel>], iteration_bounds = array<i64: 1>, scalar_prefetch = 0 : i64, scratch_operands = 0 : i64, tpu.core_type = #tpu.core_type<tc>, window_params = [{transform_indices = @transform_0, window_bounds = array<i64: 242, 144>}, {pipeline_mode = #tpu.pipeline_mode<synchronous>, transform_indices = @transform_1, window_bounds = array<i64: 144, 32>}, {pipeline_mode = #tpu.pipeline_mode<synchronous>, transform_indices = @transform_2, window_bounds = array<i64: 1, 32>}, {transform_indices = @transform_3, window_bounds = array<i64: 242, 32>}]} {
    %c0 = arith.constant 0 : index
    %c0_0 = arith.constant 0 : index
    %0 = vector.load %arg1[%c0, %c0_0] : memref<242x144xbf16, #tpu.memory_space<vmem>>, vector<242x144xbf16>
    %c0_1 = arith.constant 0 : index
    %c0_2 = arith.constant 0 : index
    %1 = vector.load %arg2[%c0_1, %c0_2] : memref<144x32xbf16, #tpu.memory_space<vmem>>, vector<144x32xbf16>
    %cst = arith.constant dense<0.000000e+00> : vector<242x32xf32>
    %2 = tpu.matmul %0, %1, %cst {dimension_numbers = #tpu.dot_dimension_numbers<[1], [0], [0], [1], [0, 0, 1, 1], [], []>} : vector<242x144xbf16>, vector<144x32xbf16>, vector<242x32xf32> -> vector<242x32xf32>
    %c0_3 = arith.constant 0 : index
    %c0_4 = arith.constant 0 : index
    %3 = vector.load %arg3[%c0_3, %c0_4] : memref<1x32xf32, #tpu.memory_space<vmem>>, vector<1x32xf32>
    %4 = vector.broadcast %3 : vector<1x32xf32> to vector<242x32xf32>
    %5 = arith.addf %2, %4 : vector<242x32xf32>
    %cst_5 = arith.constant 0.000000e+00 : f32
    %6 = vector.broadcast %cst_5 : f32 to vector<242x32xf32>
    %7 = arith.maximumf %5, %6 : vector<242x32xf32>
    %8 = arith.truncf %7 : vector<242x32xf32> to vector<242x32xbf16>
    %c0_6 = arith.constant 0 : index
    %c0_7 = arith.constant 0 : index
    %9 = vector.load %arg4[%c0_6, %c0_7] : memref<242x32xbf16, #tpu.memory_space<vmem>>, vector<242x32xbf16>
    tpu.vector_store %arg4[%c0_6, %c0_7], %8 {strides = array<i32>} : memref<242x32xbf16, #tpu.memory_space<vmem>>, vector<242x32xbf16>,
    return
  }
  func.func @transform_0(%arg0: i32) -> (i32, i32) {
    %c0_i32 = arith.constant 0 : i32
    %c0_i32_0 = arith.constant 0 : i32
    return %arg0, %c0_i32 : i32, i32
  }
  func.func @transform_1(%arg0: i32) -> (i32, i32) {
    %c0_i32 = arith.constant 0 : i32
    %c0_i32_0 = arith.constant 0 : i32
    %c0_i32_1 = arith.constant 0 : i32
    return %c0_i32, %c0_i32_0 : i32, i32
  }
  func.func @transform_2(%arg0: i32) -> (i32, i32) {
    %c0_i32 = arith.constant 0 : i32
    %c0_i32_0 = arith.constant 0 : i32
    %c0_i32_1 = arith.constant 0 : i32
    return %c0_i32, %c0_i32_0 : i32, i32
  }
  func.func @transform_3(%arg0: i32) -> (i32, i32) {
    %c0_i32 = arith.constant 0 : i32
    %c0_i32_0 = arith.constant 0 : i32
    return %arg0, %c0_i32 : i32, i32
  }
}

module attributes {stable_mosaic.version = 11 : i64} {
  func.func @_mm_bias_relu_kernel(%arg0: i32, %arg1: memref<50x288xbf16, #tpu.memory_space<vmem>>, %arg2: memref<288x64xbf16, #tpu.memory_space<vmem>>, %arg3: memref<1x64xf32, #tpu.memory_space<vmem>>, %arg4: memref<50x64xbf16, #tpu.memory_space<vmem>>) attributes {dimension_semantics = [#tpu.dimension_semantics<parallel>], iteration_bounds = array<i64: 1>, scalar_prefetch = 0 : i64, scratch_operands = 0 : i64, tpu.core_type = #tpu.core_type<tc>, window_params = [{transform_indices = @transform_0, window_bounds = array<i64: 50, 288>}, {pipeline_mode = #tpu.pipeline_mode<synchronous>, transform_indices = @transform_1, window_bounds = array<i64: 288, 64>}, {pipeline_mode = #tpu.pipeline_mode<synchronous>, transform_indices = @transform_2, window_bounds = array<i64: 1, 64>}, {transform_indices = @transform_3, window_bounds = array<i64: 50, 64>}]} {
    %c0 = arith.constant 0 : index
    %c0_0 = arith.constant 0 : index
    %0 = vector.load %arg1[%c0, %c0_0] : memref<50x288xbf16, #tpu.memory_space<vmem>>, vector<50x288xbf16>
    %c0_1 = arith.constant 0 : index
    %c0_2 = arith.constant 0 : index
    %1 = vector.load %arg2[%c0_1, %c0_2] : memref<288x64xbf16, #tpu.memory_space<vmem>>, vector<288x64xbf16>
    %cst = arith.constant dense<0.000000e+00> : vector<50x64xf32>
    %2 = tpu.matmul %0, %1, %cst {dimension_numbers = #tpu.dot_dimension_numbers<[1], [0], [0], [1], [0, 0, 1, 1], [], []>} : vector<50x288xbf16>, vector<288x64xbf16>, vector<50x64xf32> -> vector<50x64xf32>
    %c0_3 = arith.constant 0 : index
    %c0_4 = arith.constant 0 : index
    %3 = vector.load %arg3[%c0_3, %c0_4] : memref<1x64xf32, #tpu.memory_space<vmem>>, vector<1x64xf32>
    %4 = vector.broadcast %3 : vector<1x64xf32> to vector<50x64xf32>
    %5 = arith.addf %2, %4 : vector<50x64xf32>
    %cst_5 = arith.constant 0.000000e+00 : f32
    %6 = vector.broadcast %cst_5 : f32 to vector<50x64xf32>
    %7 = arith.maximumf %5, %6 : vector<50x64xf32>
    %8 = arith.truncf %7 : vector<50x64xf32> to vector<50x64xbf16>
    %c0_6 = arith.constant 0 : index
    %c0_7 = arith.constant 0 : index
    %9 = vector.load %arg4[%c0_6, %c0_7] : memref<50x64xbf16, #tpu.memory_space<vmem>>, vector<50x64xbf16>
    tpu.vector_store %arg4[%c0_6, %c0_7], %8 {strides = array<i32>} : memref<50x64xbf16, #tpu.memory_space<vmem>>, vector<50x64xbf16>,
    return
  }
  func.func @transform_0(%arg0: i32) -> (i32, i32) {
    %c0_i32 = arith.constant 0 : i32
    %c0_i32_0 = arith.constant 0 : i32
    return %arg0, %c0_i32 : i32, i32
  }
  func.func @transform_1(%arg0: i32) -> (i32, i32) {
    %c0_i32 = arith.constant 0 : i32
    %c0_i32_0 = arith.constant 0 : i32
    %c0_i32_1 = arith.constant 0 : i32
    return %c0_i32, %c0_i32_0 : i32, i32
  }
  func.func @transform_2(%arg0: i32) -> (i32, i32) {
    %c0_i32 = arith.constant 0 : i32
    %c0_i32_0 = arith.constant 0 : i32
    %c0_i32_1 = arith.constant 0 : i32
    return %c0_i32, %c0_i32_0 : i32, i32
  }
  func.func @transform_3(%arg0: i32) -> (i32, i32) {
    %c0_i32 = arith.constant 0 : i32
    %c0_i32_0 = arith.constant 0 : i32
    return %arg0, %c0_i32 : i32, i32
  }
}

module attributes {stable_mosaic.version = 11 : i64} {
  func.func @_tail_kernel(%arg0: memref<18x576xbf16, #tpu.memory_space<vmem>>, %arg1: memref<576x128xbf16, #tpu.memory_space<vmem>>, %arg2: memref<1x128xf32, #tpu.memory_space<vmem>>, %arg3: memref<1152x256xbf16, #tpu.memory_space<vmem>>, %arg4: memref<1x256xf32, #tpu.memory_space<vmem>>, %arg5: memref<256x256xbf16, #tpu.memory_space<vmem>>, %arg6: memref<1x256xf32, #tpu.memory_space<vmem>>, %arg7: memref<256x8xbf16, #tpu.memory_space<vmem>>, %arg8: memref<1x8xf32, #tpu.memory_space<vmem>>, %arg9: memref<2x8xf32, #tpu.memory_space<vmem>>, %arg10: memref<2x1152xbf16, #tpu.memory_space<vmem>>) attributes {dimension_semantics = [], scalar_prefetch = 0 : i64, scratch_operands = 1 : i64, tpu.core_type = #tpu.core_type<tc>} {
    %c0 = arith.constant 0 : index
    %c0_0 = arith.constant 0 : index
    %0 = vector.load %arg0[%c0, %c0_0] : memref<18x576xbf16, #tpu.memory_space<vmem>>, vector<18x576xbf16>
    %c0_1 = arith.constant 0 : index
    %c0_2 = arith.constant 0 : index
    %1 = vector.load %arg1[%c0_1, %c0_2] : memref<576x128xbf16, #tpu.memory_space<vmem>>, vector<576x128xbf16>
    %cst = arith.constant dense<0.000000e+00> : vector<18x128xf32>
    %2 = tpu.matmul %0, %1, %cst {dimension_numbers = #tpu.dot_dimension_numbers<[1], [0], [0], [1], [0, 0, 1, 1], [], []>} : vector<18x576xbf16>, vector<576x128xbf16>, vector<18x128xf32> -> vector<18x128xf32>
    %c0_3 = arith.constant 0 : index
    %c0_4 = arith.constant 0 : index
    %3 = vector.load %arg2[%c0_3, %c0_4] : memref<1x128xf32, #tpu.memory_space<vmem>>, vector<1x128xf32>
    %4 = vector.broadcast %3 : vector<1x128xf32> to vector<18x128xf32>
    %5 = arith.addf %2, %4 : vector<18x128xf32>
    %cst_5 = arith.constant 0.000000e+00 : f32
    %6 = vector.broadcast %cst_5 : f32 to vector<18x128xf32>
    %7 = arith.maximumf %5, %6 : vector<18x128xf32>
    %8 = arith.truncf %7 : vector<18x128xf32> to vector<18x128xbf16>
    %9 = vector.extract_strided_slice %8 {offsets = [0, 0], sizes = [2, 128], strides = [1, 1]} : vector<18x128xbf16> to vector<2x128xbf16>
    %c0_6 = arith.constant 0 : index
    %c0_7 = arith.constant 0 : index
    %10 = vector.load %arg10[%c0_6, %c0_7] : memref<2x1152xbf16, #tpu.memory_space<vmem>>, vector<2x128xbf16>
    tpu.vector_store %arg10[%c0_6, %c0_7], %9 {strides = array<i32>} : memref<2x1152xbf16, #tpu.memory_space<vmem>>, vector<2x128xbf16>,
    %11 = vector.extract_strided_slice %8 {offsets = [2, 0], sizes = [2, 128], strides = [1, 1]} : vector<18x128xbf16> to vector<2x128xbf16>
    %c0_8 = arith.constant 0 : index
    %c128 = arith.constant 128 : index
    %12 = vector.load %arg10[%c0_8, %c128] : memref<2x1152xbf16, #tpu.memory_space<vmem>>, vector<2x128xbf16>
    tpu.vector_store %arg10[%c0_8, %c128], %11 {strides = array<i32>} : memref<2x1152xbf16, #tpu.memory_space<vmem>>, vector<2x128xbf16>,
    %13 = vector.extract_strided_slice %8 {offsets = [4, 0], sizes = [2, 128], strides = [1, 1]} : vector<18x128xbf16> to vector<2x128xbf16>
    %c0_9 = arith.constant 0 : index
    %c256 = arith.constant 256 : index
    %14 = vector.load %arg10[%c0_9, %c256] : memref<2x1152xbf16, #tpu.memory_space<vmem>>, vector<2x128xbf16>
    tpu.vector_store %arg10[%c0_9, %c256], %13 {strides = array<i32>} : memref<2x1152xbf16, #tpu.memory_space<vmem>>, vector<2x128xbf16>,
    %15 = vector.extract_strided_slice %8 {offsets = [6, 0], sizes = [2, 128], strides = [1, 1]} : vector<18x128xbf16> to vector<2x128xbf16>
    %c0_10 = arith.constant 0 : index
    %c384 = arith.constant 384 : index
    %16 = vector.load %arg10[%c0_10, %c384] : memref<2x1152xbf16, #tpu.memory_space<vmem>>, vector<2x128xbf16>
    tpu.vector_store %arg10[%c0_10, %c384], %15 {strides = array<i32>} : memref<2x1152xbf16, #tpu.memory_space<vmem>>, vector<2x128xbf16>,
    %17 = vector.extract_strided_slice %8 {offsets = [8, 0], sizes = [2, 128], strides = [1, 1]} : vector<18x128xbf16> to vector<2x128xbf16>
    %c0_11 = arith.constant 0 : index
    %c512 = arith.constant 512 : index
    %18 = vector.load %arg10[%c0_11, %c512] : memref<2x1152xbf16, #tpu.memory_space<vmem>>, vector<2x128xbf16>
    tpu.vector_store %arg10[%c0_11, %c512], %17 {strides = array<i32>} : memref<2x1152xbf16, #tpu.memory_space<vmem>>, vector<2x128xbf16>,
    %19 = vector.extract_strided_slice %8 {offsets = [10, 0], sizes = [2, 128], strides = [1, 1]} : vector<18x128xbf16> to vector<2x128xbf16>
    %c0_12 = arith.constant 0 : index
    %c640 = arith.constant 640 : index
    %20 = vector.load %arg10[%c0_12, %c640] : memref<2x1152xbf16, #tpu.memory_space<vmem>>, vector<2x128xbf16>
    tpu.vector_store %arg10[%c0_12, %c640], %19 {strides = array<i32>} : memref<2x1152xbf16, #tpu.memory_space<vmem>>, vector<2x128xbf16>,
    %21 = vector.extract_strided_slice %8 {offsets = [12, 0], sizes = [2, 128], strides = [1, 1]} : vector<18x128xbf16> to vector<2x128xbf16>
    %c0_13 = arith.constant 0 : index
    %c768 = arith.constant 768 : index
    %22 = vector.load %arg10[%c0_13, %c768] : memref<2x1152xbf16, #tpu.memory_space<vmem>>, vector<2x128xbf16>
    tpu.vector_store %arg10[%c0_13, %c768], %21 {strides = array<i32>} : memref<2x1152xbf16, #tpu.memory_space<vmem>>, vector<2x128xbf16>,
    %23 = vector.extract_strided_slice %8 {offsets = [14, 0], sizes = [2, 128], strides = [1, 1]} : vector<18x128xbf16> to vector<2x128xbf16>
    %c0_14 = arith.constant 0 : index
    %c896 = arith.constant 896 : index
    %24 = vector.load %arg10[%c0_14, %c896] : memref<2x1152xbf16, #tpu.memory_space<vmem>>, vector<2x128xbf16>
    tpu.vector_store %arg10[%c0_14, %c896], %23 {strides = array<i32>} : memref<2x1152xbf16, #tpu.memory_space<vmem>>, vector<2x128xbf16>,
    %25 = vector.extract_strided_slice %8 {offsets = [16, 0], sizes = [2, 128], strides = [1, 1]} : vector<18x128xbf16> to vector<2x128xbf16>
    %c0_15 = arith.constant 0 : index
    %c1024 = arith.constant 1024 : index
    %26 = vector.load %arg10[%c0_15, %c1024] : memref<2x1152xbf16, #tpu.memory_space<vmem>>, vector<2x128xbf16>
    tpu.vector_store %arg10[%c0_15, %c1024], %25 {strides = array<i32>} : memref<2x1152xbf16, #tpu.memory_space<vmem>>, vector<2x128xbf16>,
    %c0_16 = arith.constant 0 : index
    %c0_17 = arith.constant 0 : index
    %27 = vector.load %arg10[%c0_16, %c0_17] : memref<2x1152xbf16, #tpu.memory_space<vmem>>, vector<2x1152xbf16>
    %c0_18 = arith.constant 0 : index
    %c0_19 = arith.constant 0 : index
    %28 = vector.load %arg3[%c0_18, %c0_19] : memref<1152x256xbf16, #tpu.memory_space<vmem>>, vector<1152x256xbf16>
    %cst_20 = arith.constant dense<0.000000e+00> : vector<2x256xf32>
    %29 = tpu.matmul %27, %28, %cst_20 {dimension_numbers = #tpu.dot_dimension_numbers<[1], [0], [0], [1], [0, 0, 1, 1], [], []>} : vector<2x1152xbf16>, vector<1152x256xbf16>, vector<2x256xf32> -> vector<2x256xf32>
    %c0_21 = arith.constant 0 : index
    %c0_22 = arith.constant 0 : index
    %30 = vector.load %arg4[%c0_21, %c0_22] : memref<1x256xf32, #tpu.memory_space<vmem>>, vector<1x256xf32>
    %31 = vector.broadcast %30 : vector<1x256xf32> to vector<2x256xf32>
    %32 = arith.addf %29, %31 : vector<2x256xf32>
    %cst_23 = arith.constant 0.000000e+00 : f32
    %33 = vector.broadcast %cst_23 : f32 to vector<2x256xf32>
    %34 = arith.maximumf %32, %33 : vector<2x256xf32>
    %35 = arith.truncf %34 : vector<2x256xf32> to vector<2x256xbf16>
    %c0_24 = arith.constant 0 : index
    %c0_25 = arith.constant 0 : index
    %36 = vector.load %arg5[%c0_24, %c0_25] : memref<256x256xbf16, #tpu.memory_space<vmem>>, vector<256x256xbf16>
    %cst_26 = arith.constant dense<0.000000e+00> : vector<2x256xf32>
    %37 = tpu.matmul %35, %36, %cst_26 {dimension_numbers = #tpu.dot_dimension_numbers<[1], [0], [0], [1], [0, 0, 1, 1], [], []>} : vector<2x256xbf16>, vector<256x256xbf16>, vector<2x256xf32> -> vector<2x256xf32>
    %c0_27 = arith.constant 0 : index
    %c0_28 = arith.constant 0 : index
    %38 = vector.load %arg6[%c0_27, %c0_28] : memref<1x256xf32, #tpu.memory_space<vmem>>, vector<1x256xf32>
    %39 = vector.broadcast %38 : vector<1x256xf32> to vector<2x256xf32>
    %40 = arith.addf %37, %39 : vector<2x256xf32>
    %cst_29 = arith.constant 0.000000e+00 : f32
    %41 = vector.broadcast %cst_29 : f32 to vector<2x256xf32>
    %42 = arith.maximumf %40, %41 : vector<2x256xf32>
    %43 = arith.truncf %42 : vector<2x256xf32> to vector<2x256xbf16>
    %c0_30 = arith.constant 0 : index
    %c0_31 = arith.constant 0 : index
    %44 = vector.load %arg7[%c0_30, %c0_31] : memref<256x8xbf16, #tpu.memory_space<vmem>>, vector<256x8xbf16>
    %cst_32 = arith.constant dense<0.000000e+00> : vector<2x8xf32>
    %45 = tpu.matmul %43, %44, %cst_32 {dimension_numbers = #tpu.dot_dimension_numbers<[1], [0], [0], [1], [0, 0, 1, 1], [], []>} : vector<2x256xbf16>, vector<256x8xbf16>, vector<2x8xf32> -> vector<2x8xf32>
    %c0_33 = arith.constant 0 : index
    %c0_34 = arith.constant 0 : index
    %46 = vector.load %arg8[%c0_33, %c0_34] : memref<1x8xf32, #tpu.memory_space<vmem>>, vector<1x8xf32>
    %47 = vector.broadcast %46 : vector<1x8xf32> to vector<2x8xf32>
    %48 = arith.addf %45, %47 : vector<2x8xf32>
    %cst_35 = arith.constant 0.000000e+00 : f32
    %49 = vector.broadcast %cst_35 : f32 to vector<2x8xf32>
    %50 = arith.maximumf %48, %49 : vector<2x8xf32>
    %51 = math.absf %48 : vector<2x8xf32>
    %cst_36 = arith.constant 0.000000e+00 : f32
    %52 = vector.broadcast %cst_36 : f32 to vector<2x8xf32>
    %53 = arith.subf %52, %51 : vector<2x8xf32>
    %54 = math.exp %53 : vector<2x8xf32>
    %55 = math.log1p %54 : vector<2x8xf32>
    %56 = arith.addf %50, %55 : vector<2x8xf32>
    %cst_37 = arith.constant 1.000000e+00 : f32
    %57 = vector.broadcast %cst_37 : f32 to vector<2x8xf32>
    %58 = arith.addf %56, %57 : vector<2x8xf32>
    %59 = tpu.iota {dimensions = array<i32: 1>} : vector<2x8xi32>
    %c6_i32 = arith.constant 6 : i32
    %60 = vector.broadcast %c6_i32 : i32 to vector<2x8xi32>
    %61 = arith.cmpi slt, %59, %60 : vector<2x8xi32>
    %62 = arith.select %61, %58, %48 : vector<2x8xi1>, vector<2x8xf32>
    %c0_38 = arith.constant 0 : index
    %c0_39 = arith.constant 0 : index
    %63 = vector.load %arg9[%c0_38, %c0_39] : memref<2x8xf32, #tpu.memory_space<vmem>>, vector<2x8xf32>
    tpu.vector_store %arg9[%c0_38, %c0_39], %62 {strides = array<i32>} : memref<2x8xf32, #tpu.memory_space<vmem>>, vector<2x8xf32>,
    return
  }
}

</mosaic_0001>

<llo_original>
// kernel: net_forward.5
$region0: #{net_forward.5}
  #allocation0 [shape = 'u32[]', space=smem, size = 0x4, offset = 0x4, fixed_abs, tag = 'smem constant byte address 0x4 - core index']
  #allocation1 [shape = 'u32[144,128]{1,0:T(1,128)}', space=vmem, size = 0x12000, scoped, tag = 'internal scratch']
  %s0 = inlined_call_operand.vmem [shape: bf16[4418,64], index: 0, kind: input, shape index: {}]
  %s1 = inlined_call_operand.vmem [shape: bf16[64,8], index: 1, kind: input, shape index: {}]
  %s2 = inlined_call_operand.vmem [shape: f32[1,8], index: 2, kind: input, shape index: {}]
  %s3 = inlined_call_operand.vmem [shape: bf16[4418,8], index: 3, kind: output, shape index: {}]
  %s4 = sld [smem:[#allocation0]]
  $region89: #{net_forward.5} parent=0
    _
  %s6 = ssub.s32 1, %s4
  %s7 = scalar_select 0, %s6, %s4
  $region1: #{net_forward.5} parent=0
    #allocation2 [shape = 'u8[262144]{0}', space=vmem, size = 0x40000, scoped, tag = 'output window, operand 0']
    loop: start=0, step=1, limit=11
    $region2: #{net_forward.5} parent=1 // loop_pre_header
      _
    $region3: #{net_forward.5} parent=1 // loop_header
      %s9 = sphi 0, %s13
      %p10 = scmp.ge.s32.totalorder %s9, 11
      %s19 = sphi 0, %s21
      %s22 = sphi 0, %s19
      %s23 = sphi 0, %s22
      %s39 = sphi 0, %s23
      %s43 = sphi 0, %s43
      %s45 = sphi 0, %s43
      %s46 = sphi 0, %s45
      %s60 = sphi 0, %s46
      %s64 = sphi 0, %s64
      %s66 = sphi 0, %s64
      %s67 = sphi 0, %s66
      %s81 = sphi 0, %s67
      %s87 = sphi 0, %s89
      %s90 = sphi 0, %s87
      %s91 = sphi 0, %s90
      %s107 = sphi 0, %s91
    $region4: #{net_forward.5} parent=1 // loop_header_branch
      %12 = sbr.rel (%p10) target = $region8
    $region5: #{net_forward.5} parent=1 // loop_body
      %s14 = ssub.s32 %s9, 1
      %s15 = ssub.s32 %s9, 2
      %s16 = sadd.s32 %s9, 1
      %s17 = ssub.s32 %s9, %s16
      %p18 = scmp.eq.s32.totalorder %s17, 0
      %s20 = sadd.s32 %s19, 1
      %s21 = scalar_select %p18, %s19, %s20
      %p24 = pneg %p18
      %p25 = scmp.eq.s32.totalorder %s9, 8
      %p26 = por %p24, %p25
      %p27 = scmp.ne.s32.totalorder %s19, %s22
      %p28 = scmp.eq.s32.totalorder %s9, 0
      %p29 = por %p27, %p28
      %p30 = scmp.ne.s32.totalorder %s19, %s22
      %p31 = scmp.eq.s32.totalorder %s14, 8
      %p32 = por %p30, %p31
      %p33 = scmp.ne.s32.totalorder %s22, %s23
      %p34 = scmp.eq.s32.totalorder %s14, 0
      %p35 = por %p33, %p34
      %p36 = scmp.ne.s32.totalorder %s22, %s23
      %p37 = scmp.eq.s32.totalorder %s15, 8
      %p38 = por %p36, %p37
      %p40 = scmp.ne.s32.totalorder %s23, %s39
      %p41 = scmp.eq.s32.totalorder %s15, 0
      %p42 = por %p40, %p41
      %s44 = sadd.s32 %s43, 1
      %p47 = scmp.eq.s32.totalorder %s9, 8
      %p48 = scmp.ne.s32.totalorder %s43, %s45
      %p49 = scmp.eq.s32.totalorder %s9, 0
      %p50 = por %p48, %p49
      %p51 = scmp.ne.s32.totalorder %s43, %s45
      %p52 = scmp.eq.s32.totalorder %s14, 8
      %p53 = por %p51, %p52
      %p54 = scmp.ne.s32.totalorder %s45, %s46
      %p55 = scmp.eq.s32.totalorder %s14, 0
      %p56 = por %p54, %p55
      %p57 = scmp.ne.s32.totalorder %s45, %s46
      %p58 = scmp.eq.s32.totalorder %s15, 8
      %p59 = por %p57, %p58
      %p61 = scmp.ne.s32.totalorder %s46, %s60
      %p62 = scmp.eq.s32.totalorder %s15, 0
      %p63 = por %p61, %p62
      %s65 = sadd.s32 %s64, 1
      %p68 = scmp.eq.s32.totalorder %s9, 8
      %p69 = scmp.ne.s32.totalorder %s64, %s66
      %p70 = scmp.eq.s32.totalorder %s9, 0
      %p71 = por %p69, %p70
      %p72 = scmp.ne.s32.totalorder %s64, %s66
      %p73 = scmp.eq.s32.totalorder %s14, 8
      %p74 = por %p72, %p73
      %p75 = scmp.ne.s32.totalorder %s66, %s67
      %p76 = scmp.eq.s32.totalorder %s14, 0
      %p77 = por %p75, %p76
      %p78 = scmp.ne.s32.totalorder %s66, %s67
      %p79 = scmp.eq.s32.totalorder %s15, 8
      %p80 = por %p78, %p79
      %p82 = scmp.ne.s32.totalorder %s67, %s81
      %p83 = scmp.eq.s32.totalorder %s15, 0
      %p84 = por %p82, %p83
      %s85 = ssub.s32 %s9, %s16
      %p86 = scmp.eq.s32.totalorder %s85, 0
      %s88 = sadd.s32 %s87, 1
      %s89 = scalar_select %p86, %s87, %s88
      %p92 = pneg %p86
      %p93 = scmp.eq.s32.totalorder %s9, 8
      %p94 = por %p92, %p93
      %p95 = scmp.ne.s32.totalorder %s87, %s90
      %p96 = scmp.eq.s32.totalorder %s9, 0
      %p97 = por %p95, %p96
      %p98 = scmp.ne.s32.totalorder %s87, %s90
      %p99 = scmp.eq.s32.totalorder %s14, 8
      %p100 = por %p98, %p99
      %p101 = scmp.ne.s32.totalorder %s90, %s91
      %p102 = scmp.eq.s32.totalorder %s14, 0
      %p103 = por %p101, %p102
      %p104 = scmp.ne.s32.totalorder %s90, %s91
      %p105 = scmp.eq.s32.totalorder %s15, 8
      %p106 = por %p104, %p105
      %p108 = scmp.ne.s32.totalorder %s91, %s107
      %p109 = scmp.eq.s32.totalorder %s15, 0
      %p110 = por %p108, %p109
      %p111 = scmp.le.s32.totalorder 1, %s9
      %p112 = scmp.lt.s32.totalorder %s9, 10
      %p113 = pnand %p111, %p112
      %p114 = pneg %p113
      // Predicated region
      $region9: #{net_forward.5} parent=5 // pred_check
        _
      $region10: #{net_forward.5} parent=5 // pred_check_branch
        %116 = sbr.rel (%p113) target = $region12
      $region11: #{net_forward.5} parent=5 // pred_region
        %s117 = ssub.s32 %s9, 1
        // Predicated region
        $region13: #{net_forward.5} parent=11 // pred_check
          %p118 = pneg %p56
        $region14: #{net_forward.5} parent=11 // pred_check_branch
          %120 = sbr.rel (%p118) target = $region16
        $region15: #{net_forward.5} parent=11 // pred_region
          _
        $region16: #{net_forward.5} parent=11 // pred_fallthru
          _
        // Predicated region
        $region17: #{net_forward.5} parent=11 // pred_check
          %p121 = pneg %p77
        $region18: #{net_forward.5} parent=11 // pred_check_branch
          %123 = sbr.rel (%p121) target = $region20
        $region19: #{net_forward.5} parent=11 // pred_region
          _
        $region20: #{net_forward.5} parent=11 // pred_fallthru
          _
      $region12: #{net_forward.5} parent=5 // pred_fallthru
        _
      %p124 = scmp.lt.s32.totalorder %s9, 9
      // Predicated region
      $region21: #{net_forward.5} parent=5 // pred_check
        %p125 = pneg %p124
      $region22: #{net_forward.5} parent=5 // pred_check_branch
        %127 = sbr.rel (%p125) target = $region24
      $region23: #{net_forward.5} parent=5 // pred_region
        // Predicated region
        $region25: #{net_forward.5} parent=23 // pred_check
          %p128 = pneg %p29
        $region26: #{net_forward.5} parent=23 // pred_check_branch
          %130 = sbr.rel (%p128) target = $region28
        $region27: #{net_forward.5} parent=23 // pred_region
          %s131 = smul.u32 64, %s9
          %s132 = ssub.s32 553, %s131
          %p133 = scmp.lt.s32.totalorder %s132, 64
          %s134 = scalar_select %p133, %s132, 64
          %s135 = smul.u32 64, %s134
          %p136 = scmp.lt.s32.totalorder %s131, 552
          %s137 = scalar_select %p136, %s131, 552
          %s138 = smul.addr %s137, 4
          %s139 = scalar_lea.vmem %s0, %s138
          %s140 = smul.u32 64, %s9
          %s141 = ssub.s32 553, %s140
          %p142 = scmp.lt.s32.totalorder %s141, 64
          %s143 = scalar_select %p142, %s141, 64
          %s144 = smul.u32 64, %s143
        $region28: #{net_forward.5} parent=23 // pred_fallthru
          _
      $region24: #{net_forward.5} parent=5 // pred_fallthru
        _
      %p145 = scmp.le.s32.totalorder 1, %s9
      %p146 = scmp.lt.s32.totalorder %s9, 10
      %p147 = pnand %p145, %p146
      %p148 = pneg %p147
      // Predicated region
      $region29: #{net_forward.5} parent=5 // pred_check
        _
      $region30: #{net_forward.5} parent=5 // pred_check_branch
        %150 = sbr.rel (%p147) target = $region32
      $region31: #{net_forward.5} parent=5 // pred_region
        %s151 = ssub.s32 %s9, 1
        %s152 = smul.u32 64, %s14
        %s153 = ssub.s32 553, %s152
        %p154 = scmp.lt.s32.totalorder %s153, 64
        %s155 = scalar_select %p154, %s153, 64
        %s156 = smul.u32 64, %s155
        %p157 = scmp.lt.s32.totalorder %s152, 552
        %s158 = scalar_select %p157, %s152, 552
        %s159 = smul.addr %s158, 4
        %s160 = scalar_lea.vmem %s0, %s159
        %p161 = pneg %p35
        %p162 = pneg %p32
        %p163 = pneg %p56
        %p164 = pneg %p53
        %p165 = pneg %p77
        %p166 = pneg %p74
        %p167 = pneg %p103
        %p168 = pneg %p100
        %s169 = sand.u32 %s90, 1
        %s170 = sand.u32 %s90, 1
        %s171 = smul.addr %s170, 256
        %s172 = scalar_lea.vmem [#allocation2], %s171
        %s173 = smul.u32 64, %s14
        %s174 = ssub.s32 553, %s173
        %p175 = scmp.lt.s32.totalorder %s174, 64
        %s176 = scalar_select %p175, %s174, 64
        %s177 = smul.u32 64, %s176
        %p178 = scmp.lt.s32.totalorder %s173, 552
        %s179 = scalar_select %p178, %s173, 552
        %s180 = smul.addr %s179, 4
        %s181 = scalar_lea.vmem %s0, %s180
        %s182 = smul.u32 64, %s14
        %s183 = ssub.s32 553, %s182
        %p184 = scmp.lt.s32.totalorder %s183, 64
        %s185 = scalar_select %p184, %s183, 64
        %s186 = smul.u32 64, %s185
        %s187 = smul.u32 64, %s14
        %s188 = ssub.s32 553, %s187
        %p189 = scmp.lt.s32.totalorder %s188, 64
        %s190 = scalar_select %p189, %s188, 64
        %s191 = smul.u32 64, %s190
        %v193 = vld [vmem:[%s181] sm:$0xf]
        %v194 = vld [vmem:[%s181 + $0x4] sm:$0xf]
        %v195 = vld [vmem:[%s181 + $0x8] sm:$0xf]
        %v196 = vld [vmem:[%s181 + $0xc] sm:$0xf]
        %v197 = vld [vmem:[%s181 + $0x10] sm:$0xf]
        %v198 = vld [vmem:[%s181 + $0x14] sm:$0xf]
        %v199 = vld [vmem:[%s181 + $0x18] sm:$0xf]
        %v200 = vld [vmem:[%s181 + $0x1c] sm:$0xf]
        %v201 = vld [vmem:[%s181 + $0x20] sm:$0xf]
        %v202 = vld [vmem:[%s181 + $0x24] sm:$0xf]
        %v203 = vld [vmem:[%s181 + $0x28] sm:$0xf]
        %v204 = vld [vmem:[%s181 + $0x2c] sm:$0xf]
        %v205 = vld [vmem:[%s181 + $0x30] sm:$0xf]
        %v206 = vld [vmem:[%s181 + $0x34] sm:$0xf]
        %v207 = vld [vmem:[%s181 + $0x38] sm:$0xf]
        %v208 = vld [vmem:[%s181 + $0x3c] sm:$0xf]
        %v209 = vld [vmem:[%s181 + $0x40] sm:$0xf]
        %v210 = vld [vmem:[%s181 + $0x44] sm:$0xf]
        %v211 = vld [vmem:[%s181 + $0x48] sm:$0xf]
        %v212 = vld [vmem:[%s181 + $0x4c] sm:$0xf]
        %v213 = vld [vmem:[%s181 + $0x50] sm:$0xf]
        %v214 = vld [vmem:[%s181 + $0x54] sm:$0xf]
        %v215 = vld [vmem:[%s181 + $0x58] sm:$0xf]
        %v216 = vld [vmem:[%s181 + $0x5c] sm:$0xf]
        %v217 = vld [vmem:[%s181 + $0x60] sm:$0xf]
        %v218 = vld [vmem:[%s181 + $0x64] sm:$0xf]
        %v219 = vld [vmem:[%s181 + $0x68] sm:$0xf]
        %v220 = vld [vmem:[%s181 + $0x6c] sm:$0xf]
        %v221 = vld [vmem:[%s181 + $0x70] sm:$0xf]
        %v222 = vld [vmem:[%s181 + $0x74] sm:$0xf]
        %v223 = vld [vmem:[%s181 + $0x78] sm:$0xf]
        %v224 = vld [vmem:[%s181 + $0x7c] sm:$0xf]
        %v225 = vld [vmem:[%s181 + $0x80] sm:$0xf]
        %v226 = vld [vmem:[%s181 + $0x84] sm:$0xf]
        %v227 = vld [vmem:[%s181 + $0x88] sm:$0xf]
        %v228 = vld [vmem:[%s181 + $0x8c] sm:$0xf]
        %v229 = vld [vmem:[%s181 + $0x90] sm:$0xf]
        %v230 = vld [vmem:[%s181 + $0x94] sm:$0xf]
        %v231 = vld [vmem:[%s181 + $0x98] sm:$0xf]
        %v232 = vld [vmem:[%s181 + $0x9c] sm:$0xf]
        %v233 = vld [vmem:[%s181 + $0xa0] sm:$0xf]
        %v234 = vld [vmem:[%s181 + $0xa4] sm:$0xf]
        %v235 = vld [vmem:[%s181 + $0xa8] sm:$0xf]
        %v236 = vld [vmem:[%s181 + $0xac] sm:$0xf]
        %v237 = vld [vmem:[%s181 + $0xb0] sm:$0xf]
        %v238 = vld [vmem:[%s181 + $0xb4] sm:$0xf]
        %v239 = vld [vmem:[%s181 + $0xb8] sm:$0xf]
        %v240 = vld [vmem:[%s181 + $0xbc] sm:$0xf]
        %v241 = vld [vmem:[%s181 + $0xc0] sm:$0xf]
        %v242 = vld [vmem:[%s181 + $0xc4] sm:$0xf]
        %v243 = vld [vmem:[%s181 + $0xc8] sm:$0xf]
        %v244 = vld [vmem:[%s181 + $0xcc] sm:$0xf]
        %v245 = vld [vmem:[%s181 + $0xd0] sm:$0xf]
        %v246 = vld [vmem:[%s181 + $0xd4] sm:$0xf]
        %v247 = vld [vmem:[%s181 + $0xd8] sm:$0xf]
        %v248 = vld [vmem:[%s181 + $0xdc] sm:$0xf]
        %v249 = vld [vmem:[%s181 + $0xe0] sm:$0xf]
        %v250 = vld [vmem:[%s181 + $0xe4] sm:$0xf]
        %v251 = vld [vmem:[%s181 + $0xe8] sm:$0xf]
        %v252 = vld [vmem:[%s181 + $0xec] sm:$0xf]
        %v253 = vld [vmem:[%s181 + $0xf0] sm:$0xf]
        %v254 = vld [vmem:[%s181 + $0xf4] sm:$0xf]
        %v255 = vld [vmem:[%s181 + $0xf8] sm:$0xf]
        %v256 = vld [vmem:[%s181 + $0xfc] sm:$0xf]
        %v257 = vld [vmem:[%s1] sm:$0xf]
        %v258 = vld [vmem:[%s1 + $0x4] sm:$0xf]
        %v259 = vld [vmem:[%s1 + $0x8] sm:$0xf]
        %v260 = vld [vmem:[%s1 + $0xc] sm:$0xf]
        %v261 = vld [vmem:[%s1 + $0x10] sm:$0xf]
        %v262 = vld [vmem:[%s1 + $0x14] sm:$0xf]
        %v263 = vld [vmem:[%s1 + $0x18] sm:$0xf]
        %v264 = vld [vmem:[%s1 + $0x1c] sm:$0xf]
        %v265 = vld [vmem:[%s2] sm:$0x1]
        %v267 = vlaneseq
        %v268 = vshrl.u32 %v267, 7
        %v269 = vsub.s32 0, %v268
        %v270 = vrot.slane %v265, %v269
        %v336 = vunpack.c.l.b16 %v193
        %v337 = vunpack.c.l.b16 %v194
        %v338 = vunpack.c.l.b16 %v195
        %v339 = vunpack.c.l.b16 %v196
        %v340 = vunpack.c.l.b16 %v197
        %v341 = vunpack.c.l.b16 %v198
        %v342 = vunpack.c.l.b16 %v199
        %v343 = vunpack.c.l.b16 %v200
        %v344 = vunpack.c.l.b16 %v201
        %v345 = vunpack.c.l.b16 %v202
        %v346 = vunpack.c.l.b16 %v203
        %v347 = vunpack.c.l.b16 %v204
        %v348 = vunpack.c.l.b16 %v205
        %v349 = vunpack.c.l.b16 %v206
        %v350 = vunpack.c.l.b16 %v207
        %v351 = vunpack.c.l.b16 %v208
        %v352 = vunpack.c.l.b16 %v209
        %v353 = vunpack.c.l.b16 %v210
        %v354 = vunpack.c.l.b16 %v211
        %v355 = vunpack.c.l.b16 %v212
        %v356 = vunpack.c.l.b16 %v213
        %v357 = vunpack.c.l.b16 %v214
        %v358 = vunpack.c.l.b16 %v215
        %v359 = vunpack.c.l.b16 %v216
        %v360 = vunpack.c.l.b16 %v217
        %v361 = vunpack.c.l.b16 %v218
        %v362 = vunpack.c.l.b16 %v219
        %v363 = vunpack.c.l.b16 %v220
        %v364 = vunpack.c.l.b16 %v221
        %v365 = vunpack.c.l.b16 %v222
        %v366 = vunpack.c.l.b16 %v223
        %v367 = vunpack.c.l.b16 %v224
        %v368 = vunpack.c.l.b16 %v225
        %v369 = vunpack.c.l.b16 %v226
        %v370 = vunpack.c.l.b16 %v227
        %v371 = vunpack.c.l.b16 %v228
        %v372 = vunpack.c.l.b16 %v229
        %v373 = vunpack.c.l.b16 %v230
        %v374 = vunpack.c.l.b16 %v231
        %v375 = vunpack.c.l.b16 %v232
        %v376 = vunpack.c.l.b16 %v233
        %v377 = vunpack.c.l.b16 %v234
        %v378 = vunpack.c.l.b16 %v235
        %v379 = vunpack.c.l.b16 %v236
        %v380 = vunpack.c.l.b16 %v237
        %v381 = vunpack.c.l.b16 %v238
        %v382 = vunpack.c.l.b16 %v239
        %v383 = vunpack.c.l.b16 %v240
        %v384 = vunpack.c.l.b16 %v241
        %v385 = vunpack.c.l.b16 %v242
        %v386 = vunpack.c.l.b16 %v243
        %v387 = vunpack.c.l.b16 %v244
        %v388 = vunpack.c.l.b16 %v245
        %v389 = vunpack.c.l.b16 %v246
        %v390 = vunpack.c.l.b16 %v247
        %v391 = vunpack.c.l.b16 %v248
        %v392 = vunpack.c.l.b16 %v249
        %v393 = vunpack.c.l.b16 %v250
        %v394 = vunpack.c.l.b16 %v251
        %v395 = vunpack.c.l.b16 %v252
        %v396 = vunpack.c.l.b16 %v253
        %v397 = vunpack.c.l.b16 %v254
        %v398 = vunpack.c.l.b16 %v255
        %v399 = vunpack.c.l.b16 %v256
        %v400 = vpack.c.b16 %v337, %v336
        %v401 = vpack.c.b16 %v339, %v338
        %v402 = vpack.c.b16 %v341, %v340
        %v403 = vpack.c.b16 %v343, %v342
        %v404 = vpack.c.b16 %v345, %v344
        %v405 = vpack.c.b16 %v347, %v346
        %v406 = vpack.c.b16 %v349, %v348
        %v407 = vpack.c.b16 %v351, %v350
        %v408 = vpack.c.b16 %v353, %v352
        %v409 = vpack.c.b16 %v355, %v354
        %v410 = vpack.c.b16 %v357, %v356
        %v411 = vpack.c.b16 %v359, %v358
        %v412 = vpack.c.b16 %v361, %v360
        %v413 = vpack.c.b16 %v363, %v362
        %v414 = vpack.c.b16 %v365, %v364
        %v415 = vpack.c.b16 %v367, %v366
        %v416 = vpack.c.b16 %v369, %v368
        %v417 = vpack.c.b16 %v371, %v370
        %v418 = vpack.c.b16 %v373, %v372
        %v419 = vpack.c.b16 %v375, %v374
        %v420 = vpack.c.b16 %v377, %v376
        %v421 = vpack.c.b16 %v379, %v378
        %v422 = vpack.c.b16 %v381, %v380
        %v423 = vpack.c.b16 %v383, %v382
        %v424 = vpack.c.b16 %v385, %v384
        %v425 = vpack.c.b16 %v387, %v386
        %v426 = vpack.c.b16 %v389, %v388
        %v427 = vpack.c.b16 %v391, %v390
        %v428 = vpack.c.b16 %v393, %v392
        %v429 = vpack.c.b16 %v395, %v394
        %v430 = vpack.c.b16 %v397, %v396
        %v431 = vpack.c.b16 %v399, %v398
        %v440 = vunpack.c.l.b16 %v257
        %v441 = vunpack.c.l.b16 %v258
        %v442 = vunpack.c.l.b16 %v259
        %v443 = vunpack.c.l.b16 %v260
        %v444 = vunpack.c.l.b16 %v261
        %v445 = vunpack.c.l.b16 %v262
        %v446 = vunpack.c.l.b16 %v263
        %v447 = vunpack.c.l.b16 %v264
        %v448 = vpack.c.b16 %v441, %v440
        %v449 = vpack.c.b16 %v443, %v442
        %v450 = vpack.c.b16 %v445, %v444
        %v451 = vpack.c.b16 %v447, %v446
        %vm456 = vcmask 523264
        %v458 = vsel %vm456, %v400, 0
        %v461 = vsel %vm456, %v401, 0
        %v464 = vsel %vm456, %v402, 0
        %v467 = vsel %vm456, %v403, 0
        %v470 = vsel %vm456, %v404, 0
        %v473 = vsel %vm456, %v405, 0
        %v476 = vsel %vm456, %v406, 0
        %v479 = vsel %vm456, %v407, 0
        %v482 = vsel %vm456, %v408, 0
        %v485 = vsel %vm456, %v409, 0
        %v488 = vsel %vm456, %v410, 0
        %v491 = vsel %vm456, %v411, 0
        %v494 = vsel %vm456, %v412, 0
        %v497 = vsel %vm456, %v413, 0
        %v500 = vsel %vm456, %v414, 0
        %v503 = vsel %vm456, %v415, 0
        %v506 = vsel %vm456, %v416, 0
        %v509 = vsel %vm456, %v417, 0
        %v512 = vsel %vm456, %v418, 0
        %v515 = vsel %vm456, %v419, 0
        %v518 = vsel %vm456, %v420, 0
        %v521 = vsel %vm456, %v421, 0
        %v524 = vsel %vm456, %v422, 0
        %v527 = vsel %vm456, %v423, 0
        %v530 = vsel %vm456, %v424, 0
        %v533 = vsel %vm456, %v425, 0
        %v536 = vsel %vm456, %v426, 0
        %v539 = vsel %vm456, %v427, 0
        %v542 = vsel %vm456, %v428, 0
        %v545 = vsel %vm456, %v429, 0
        %v548 = vsel %vm456, %v430, 0
        %v551 = vsel %vm456, %v431, 0
        %553 = vmatprep.subr.bf16.mxu0 0
        %554 = vmatpush1.bf16.msra.mxu0 %v448
        %555 = vmatprep.subr.bf16.mxu0 0
        %556 = vmatpush1.bf16.msra.mxu0 %v449
        %557 = vmatprep.subr.bf16.mxu0 0
        %558 = vmatpush1.bf16.msra.mxu0 %v450
        %559 = vmatprep.subr.bf16.mxu0 0
        %560 = vmatpush1.bf16.msra.mxu0 %v451
        %561 = vmatprep.subr.bf16.mxu0 0
        %562 = vmatpush1.bf16.msra.mxu0 0
        %563 = vmatprep.subr.bf16.mxu0 0
        %564 = vmatpush1.bf16.msra.mxu0 0
        %565 = vmatprep.subr.bf16.mxu0 0
        %566 = vmatpush1.bf16.msra.mxu0 0
        %567 = vmatprep.subr.bf16.mxu0 0
        %568 = vmatpush1.bf16.msra.mxu0 0
        %569 = vmatprep.subr.bf16.mxu0 0
        %570 = vmatpush1.bf16.msra.mxu0 0
        %571 = vmatprep.subr.bf16.mxu0 0
        %572 = vmatpush1.bf16.msra.mxu0 0
        %573 = vmatprep.subr.bf16.mxu0 0
        %574 = vmatpush1.bf16.msra.mxu0 0
        %575 = vmatprep.subr.bf16.mxu0 0
        %576 = vmatpush1.bf16.msra.mxu0 0
        %577 = vmatprep.subr.bf16.mxu0 0
        %578 = vmatpush1.bf16.msra.mxu0 0
        %579 = vmatprep.subr.bf16.mxu0 0
        %580 = vmatpush1.bf16.msra.mxu0 0
        %581 = vmatprep.subr.bf16.mxu0 0
        %582 = vmatpush1.bf16.msra.mxu0 0
        %583 = vmatprep.subr.bf16.mxu0 0
        %584 = vmatpush1.bf16.msra.mxu0 0
        %585 = vmatprep.mubr.bf16.mxu0 0
        %586 = vmatmul.mubr.bf16.gmra.mrb[0].mxu0 %v458
        %v587 = vpop.f32.mrb[0].mxu0
        %v588 = vadd.f32 %v270, %v587
        %v589 = vpop.f32.mrb[0].mxu0
        %v590 = vpop.f32.mrb[0].mxu0
        %v591 = vadd.f32 %v270, %v590
        %v592 = vpop.f32.mrb[0].mxu0
        %593 = vmatprep.mubr.bf16.mxu0 0
        %594 = vmatmul.mubr.bf16.gmra.mrb[0].mxu0 %v461
        %v595 = vpop.f32.mrb[0].mxu0
        %v596 = vadd.f32 %v270, %v595
        %v597 = vpop.f32.mrb[0].mxu0
        %v598 = vpop.f32.mrb[0].mxu0
        %v599 = vadd.f32 %v270, %v598
        %v600 = vpop.f32.mrb[0].mxu0
        %601 = vmatprep.mubr.bf16.mxu0 0
        %602 = vmatmul.mubr.bf16.gmra.mrb[0].mxu0 %v464
        %v603 = vpop.f32.mrb[0].mxu0
        %v604 = vadd.f32 %v270, %v603
        %v605 = vpop.f32.mrb[0].mxu0
        %v606 = vpop.f32.mrb[0].mxu0
        %v607 = vadd.f32 %v270, %v606
        %v608 = vpop.f32.mrb[0].mxu0
        %609 = vmatprep.mubr.bf16.mxu0 0
        %610 = vmatmul.mubr.bf16.gmra.mrb[0].mxu0 %v467
        %v611 = vpop.f32.mrb[0].mxu0
        %v612 = vadd.f32 %v270, %v611
        %v613 = vpop.f32.mrb[0].mxu0
        %v614 = vpop.f32.mrb[0].mxu0
        %v615 = vadd.f32 %v270, %v614
        %v616 = vpop.f32.mrb[0].mxu0
        %617 = vmatprep.mubr.bf16.mxu0 0
        %618 = vmatmul.mubr.bf16.gmra.mrb[0].mxu0 %v470
        %v619 = vpop.f32.mrb[0].mxu0
        %v620 = vadd.f32 %v270, %v619
        %v621 = vpop.f32.mrb[0].mxu0
        %v622 = vpop.f32.mrb[0].mxu0
        %v623 = vadd.f32 %v270, %v622
        %v624 = vpop.f32.mrb[0].mxu0
        %625 = vmatprep.mubr.bf16.mxu0 0
        %626 = vmatmul.mubr.bf16.gmra.mrb[0].mxu0 %v473
        %v627 = vpop.f32.mrb[0].mxu0
        %v628 = vadd.f32 %v270, %v627
        %v629 = vpop.f32.mrb[0].mxu0
        %v630 = vpop.f32.mrb[0].mxu0
        %v631 = vadd.f32 %v270, %v630
        %v632 = vpop.f32.mrb[0].mxu0
        %633 = vmatprep.mubr.bf16.mxu0 0
        %634 = vmatmul.mubr.bf16.gmra.mrb[0].mxu0 %v476
        %v635 = vpop.f32.mrb[0].mxu0
        %v636 = vadd.f32 %v270, %v635
        %v637 = vpop.f32.mrb[0].mxu0
        %v638 = vpop.f32.mrb[0].mxu0
        %v639 = vadd.f32 %v270, %v638
        %v640 = vpop.f32.mrb[0].mxu0
        %641 = vmatprep.mubr.bf16.mxu0 0
        %642 = vmatmul.mubr.bf16.gmra.mrb[0].mxu0 %v479
        %v643 = vpop.f32.mrb[0].mxu0
        %v644 = vadd.f32 %v270, %v643
        %v645 = vpop.f32.mrb[0].mxu0
        %v646 = vpop.f32.mrb[0].mxu0
        %v647 = vadd.f32 %v270, %v646
        %v648 = vpop.f32.mrb[0].mxu0
        %649 = vmatprep.mubr.bf16.mxu0 0
        %650 = vmatmul.mubr.bf16.gmra.mrb[0].mxu0 %v482
        %v651 = vpop.f32.mrb[0].mxu0
        %v652 = vadd.f32 %v270, %v651
        %v653 = vpop.f32.mrb[0].mxu0
        %v654 = vpop.f32.mrb[0].mxu0
        %v655 = vadd.f32 %v270, %v654
        %v656 = vpop.f32.mrb[0].mxu0
        %657 = vmatprep.mubr.bf16.mxu0 0
        %658 = vmatmul.mubr.bf16.gmra.mrb[0].mxu0 %v485
        %v659 = vpop.f32.mrb[0].mxu0
        %v660 = vadd.f32 %v270, %v659
        %v661 = vpop.f32.mrb[0].mxu0
        %v662 = vpop.f32.mrb[0].mxu0
        %v663 = vadd.f32 %v270, %v662
        %v664 = vpop.f32.mrb[0].mxu0
        %665 = vmatprep.mubr.bf16.mxu0 0
        %666 = vmatmul.mubr.bf16.gmra.mrb[0].mxu0 %v488
        %v667 = vpop.f32.mrb[0].mxu0
        %v668 = vadd.f32 %v270, %v667
        %v669 = vpop.f32.mrb[0].mxu0
        %v670 = vpop.f32.mrb[0].mxu0
        %v671 = vadd.f32 %v270, %v670
        %v672 = vpop.f32.mrb[0].mxu0
        %673 = vmatprep.mubr.bf16.mxu0 0
        %674 = vmatmul.mubr.bf16.gmra.mrb[0].mxu0 %v491
        %v675 = vpop.f32.mrb[0].mxu0
        %v676 = vadd.f32 %v270, %v675
        %v677 = vpop.f32.mrb[0].mxu0
        %v678 = vpop.f32.mrb[0].mxu0
        %v679 = vadd.f32 %v270, %v678
        %v680 = vpop.f32.mrb[0].mxu0
        %681 = vmatprep.mubr.bf16.mxu0 0
        %682 = vmatmul.mubr.bf16.gmra.mrb[0].mxu0 %v494
        %v683 = vpop.f32.mrb[0].mxu0
        %v684 = vadd.f32 %v270, %v683
        %v685 = vpop.f32.mrb[0].mxu0
        %v686 = vpop.f32.mrb[0].mxu0
        %v687 = vadd.f32 %v270, %v686
        %v688 = vpop.f32.mrb[0].mxu0
        %689 = vmatprep.mubr.bf16.mxu0 0
        %690 = vmatmul.mubr.bf16.gmra.mrb[0].mxu0 %v497
        %v691 = vpop.f32.mrb[0].mxu0
        %v692 = vadd.f32 %v270, %v691
        %v693 = vpop.f32.mrb[0].mxu0
        %v694 = vpop.f32.mrb[0].mxu0
        %v695 = vadd.f32 %v270, %v694
        %v696 = vpop.f32.mrb[0].mxu0
        %697 = vmatprep.mubr.bf16.mxu0 0
        %698 = vmatmul.mubr.bf16.gmra.mrb[0].mxu0 %v500
        %v699 = vpop.f32.mrb[0].mxu0
        %v700 = vadd.f32 %v270, %v699
        %v701 = vpop.f32.mrb[0].mxu0
        %v702 = vpop.f32.mrb[0].mxu0
        %v703 = vadd.f32 %v270, %v702
        %v704 = vpop.f32.mrb[0].mxu0
        %705 = vmatprep.mubr.bf16.mxu0 0
        %706 = vmatmul.mubr.bf16.gmra.mrb[0].mxu0 %v503
        %v707 = vpop.f32.mrb[0].mxu0
        %v708 = vadd.f32 %v270, %v707
        %v709 = vpop.f32.mrb[0].mxu0
        %v710 = vpop.f32.mrb[0].mxu0
        %v711 = vadd.f32 %v270, %v710
        %v712 = vpop.f32.mrb[0].mxu0
        %713 = vmatprep.mubr.bf16.mxu0 0
        %714 = vmatmul.mubr.bf16.gmra.mrb[0].mxu0 %v506
        %v715 = vpop.f32.mrb[0].mxu0
        %v716 = vadd.f32 %v270, %v715
        %v717 = vpop.f32.mrb[0].mxu0
        %v718 = vpop.f32.mrb[0].mxu0
        %v719 = vadd.f32 %v270, %v718
        %v720 = vpop.f32.mrb[0].mxu0
        %721 = vmatprep.mubr.bf16.mxu0 0
        %722 = vmatmul.mubr.bf16.gmra.mrb[0].mxu0 %v509
        %v723 = vpop.f32.mrb[0].mxu0
        %v724 = vadd.f32 %v270, %v723
        %v725 = vpop.f32.mrb[0].mxu0
        %v726 = vpop.f32.mrb[0].mxu0
        %v727 = vadd.f32 %v270, %v726
        %v728 = vpop.f32.mrb[0].mxu0
        %729 = vmatprep.mubr.bf16.mxu0 0
        %730 = vmatmul.mubr.bf16.gmra.mrb[0].mxu0 %v512
        %v731 = vpop.f32.mrb[0].mxu0
        %v732 = vadd.f32 %v270, %v731
        %v733 = vpop.f32.mrb[0].mxu0
        %v734 = vpop.f32.mrb[0].mxu0
        %v735 = vadd.f32 %v270, %v734
        %v736 = vpop.f32.mrb[0].mxu0
        %737 = vmatprep.mubr.bf16.mxu0 0
        %738 = vmatmul.mubr.bf16.gmra.mrb[0].mxu0 %v515
        %v739 = vpop.f32.mrb[0].mxu0
        %v740 = vadd.f32 %v270, %v739
        %v741 = vpop.f32.mrb[0].mxu0
        %v742 = vpop.f32.mrb[0].mxu0
        %v743 = vadd.f32 %v270, %v742
        %v744 = vpop.f32.mrb[0].mxu0
        %745 = vmatprep.mubr.bf16.mxu0 0
        %746 = vmatmul.mubr.bf16.gmra.mrb[0].mxu0 %v518
        %v747 = vpop.f32.mrb[0].mxu0
        %v748 = vadd.f32 %v270, %v747
        %v749 = vpop.f32.mrb[0].mxu0
        %v750 = vpop.f32.mrb[0].mxu0
        %v751 = vadd.f32 %v270, %v750
        %v752 = vpop.f32.mrb[0].mxu0
        %753 = vmatprep.mubr.bf16.mxu0 0
        %754 = vmatmul.mubr.bf16.gmra.mrb[0].mxu0 %v521
        %v755 = vpop.f32.mrb[0].mxu0
        %v756 = vadd.f32 %v270, %v755
        %v757 = vpop.f32.mrb[0].mxu0
        %v758 = vpop.f32.mrb[0].mxu0
        %v759 = vadd.f32 %v270, %v758
        %v760 = vpop.f32.mrb[0].mxu0
        %761 = vmatprep.mubr.bf16.mxu0 0
        %762 = vmatmul.mubr.bf16.gmra.mrb[0].mxu0 %v524
        %v763 = vpop.f32.mrb[0].mxu0
        %v764 = vadd.f32 %v270, %v763
        %v765 = vpop.f32.mrb[0].mxu0
        %v766 = vpop.f32.mrb[0].mxu0
        %v767 = vadd.f32 %v270, %v766
        %v768 = vpop.f32.mrb[0].mxu0
        %769 = vmatprep.mubr.bf16.mxu0 0
        %770 = vmatmul.mubr.bf16.gmra.mrb[0].mxu0 %v527
        %v771 = vpop.f32.mrb[0].mxu0
        %v772 = vadd.f32 %v270, %v771
        %v773 = vpop.f32.mrb[0].mxu0
        %v774 = vpop.f32.mrb[0].mxu0
        %v775 = vadd.f32 %v270, %v774
        %v776 = vpop.f32.mrb[0].mxu0
        %777 = vmatprep.mubr.bf16.mxu0 0
        %778 = vmatmul.mubr.bf16.gmra.mrb[0].mxu0 %v530
        %v779 = vpop.f32.mrb[0].mxu0
        %v780 = vadd.f32 %v270, %v779
        %v781 = vpop.f32.mrb[0].mxu0
        %v782 = vpop.f32.mrb[0].mxu0
        %v783 = vadd.f32 %v270, %v782
        %v784 = vpop.f32.mrb[0].mxu0
        %785 = vmatprep.mubr.bf16.mxu0 0
        %786 = vmatmul.mubr.bf16.gmra.mrb[0].mxu0 %v533
        %v787 = vpop.f32.mrb[0].mxu0
        %v788 = vadd.f32 %v270, %v787
        %v789 = vpop.f32.mrb[0].mxu0
        %v790 = vpop.f32.mrb[0].mxu0
        %v791 = vadd.f32 %v270, %v790
        %v792 = vpop.f32.mrb[0].mxu0
        %793 = vmatprep.mubr.bf16.mxu0 0
        %794 = vmatmul.mubr.bf16.gmra.mrb[0].mxu0 %v536
        %v795 = vpop.f32.mrb[0].mxu0
        %v796 = vadd.f32 %v270, %v795
        %v797 = vpop.f32.mrb[0].mxu0
        %v798 = vpop.f32.mrb[0].mxu0
        %v799 = vadd.f32 %v270, %v798
        %v800 = vpop.f32.mrb[0].mxu0
        %801 = vmatprep.mubr.bf16.mxu0 0
        %802 = vmatmul.mubr.bf16.gmra.mrb[0].mxu0 %v539
        %v803 = vpop.f32.mrb[0].mxu0
        %v804 = vadd.f32 %v270, %v803
        %v805 = vpop.f32.mrb[0].mxu0
        %v806 = vpop.f32.mrb[0].mxu0
        %v807 = vadd.f32 %v270, %v806
        %v808 = vpop.f32.mrb[0].mxu0
        %809 = vmatprep.mubr.bf16.mxu0 0
        %810 = vmatmul.mubr.bf16.gmra.mrb[0].mxu0 %v542
        %v811 = vpop.f32.mrb[0].mxu0
        %v812 = vadd.f32 %v270, %v811
        %v813 = vpop.f32.mrb[0].mxu0
        %v814 = vpop.f32.mrb[0].mxu0
        %v815 = vadd.f32 %v270, %v814
        %v816 = vpop.f32.mrb[0].mxu0
        %817 = vmatprep.mubr.bf16.mxu0 0
        %818 = vmatmul.mubr.bf16.gmra.mrb[0].mxu0 %v545
        %v819 = vpop.f32.mrb[0].mxu0
        %v820 = vadd.f32 %v270, %v819
        %v821 = vpop.f32.mrb[0].mxu0
        %v822 = vpop.f32.mrb[0].mxu0
        %v823 = vadd.f32 %v270, %v822
        %v824 = vpop.f32.mrb[0].mxu0
        %825 = vmatprep.mubr.bf16.mxu0 0
        %826 = vmatmul.mubr.bf16.gmra.mrb[0].mxu0 %v548
        %v827 = vpop.f32.mrb[0].mxu0
        %v828 = vadd.f32 %v270, %v827
        %v829 = vpop.f32.mrb[0].mxu0
        %v830 = vpop.f32.mrb[0].mxu0
        %v831 = vadd.f32 %v270, %v830
        %v832 = vpop.f32.mrb[0].mxu0
        %833 = vmatprep.mubr.bf16.mxu0 0
        %834 = vmatmul.mubr.bf16.gmra.mrb[0].mxu0 %v551
        %v835 = vpop.f32.mrb[0].mxu0
        %v836 = vadd.f32 %v270, %v835
        %v837 = vpop.f32.mrb[0].mxu0
        %v838 = vpop.f32.mrb[0].mxu0
        %v839 = vadd.f32 %v270, %v838
        %v840 = vpop.f32.mrb[0].mxu0
        %841 = vdwg.mxu0
        %v842 = vmax.f32 %v588, 0.0
        %v843 = vmax.f32 %v591, 0.0
        %v844 = vmax.f32 %v596, 0.0
        %v845 = vmax.f32 %v599, 0.0
        %v846 = vmax.f32 %v604, 0.0
        %v847 = vmax.f32 %v607, 0.0
        %v848 = vmax.f32 %v612, 0.0
        %v849 = vmax.f32 %v615, 0.0
        %v850 = vmax.f32 %v620, 0.0
        %v851 = vmax.f32 %v623, 0.0
        %v852 = vmax.f32 %v628, 0.0
        %v853 = vmax.f32 %v631, 0.0
        %v854 = vmax.f32 %v636, 0.0
        %v855 = vmax.f32 %v639, 0.0
        %v856 = vmax.f32 %v644, 0.0
        %v857 = vmax.f32 %v647, 0.0
        %v858 = vmax.f32 %v652, 0.0
        %v859 = vmax.f32 %v655, 0.0
        %v860 = vmax.f32 %v660, 0.0
        %v861 = vmax.f32 %v663, 0.0
        %v862 = vmax.f32 %v668, 0.0
        %v863 = vmax.f32 %v671, 0.0
        %v864 = vmax.f32 %v676, 0.0
        %v865 = vmax.f32 %v679, 0.0
        %v866 = vmax.f32 %v684, 0.0
        %v867 = vmax.f32 %v687, 0.0
        %v868 = vmax.f32 %v692, 0.0
        %v869 = vmax.f32 %v695, 0.0
        %v870 = vmax.f32 %v700, 0.0
        %v871 = vmax.f32 %v703, 0.0
        %v872 = vmax.f32 %v708, 0.0
        %v873 = vmax.f32 %v711, 0.0
        %v874 = vmax.f32 %v716, 0.0
        %v875 = vmax.f32 %v719, 0.0
        %v876 = vmax.f32 %v724, 0.0
        %v877 = vmax.f32 %v727, 0.0
        %v878 = vmax.f32 %v732, 0.0
        %v879 = vmax.f32 %v735, 0.0
        %v880 = vmax.f32 %v740, 0.0
        %v881 = vmax.f32 %v743, 0.0
        %v882 = vmax.f32 %v748, 0.0
        %v883 = vmax.f32 %v751, 0.0
        %v884 = vmax.f32 %v756, 0.0
        %v885 = vmax.f32 %v759, 0.0
        %v886 = vmax.f32 %v764, 0.0
        %v887 = vmax.f32 %v767, 0.0
        %v888 = vmax.f32 %v772, 0.0
        %v889 = vmax.f32 %v775, 0.0
        %v890 = vmax.f32 %v780, 0.0
        %v891 = vmax.f32 %v783, 0.0
        %v892 = vmax.f32 %v788, 0.0
        %v893 = vmax.f32 %v791, 0.0
        %v894 = vmax.f32 %v796, 0.0
        %v895 = vmax.f32 %v799, 0.0
        %v896 = vmax.f32 %v804, 0.0
        %v897 = vmax.f32 %v807, 0.0
        %v898 = vmax.f32 %v812, 0.0
        %v899 = vmax.f32 %v815, 0.0
        %v900 = vmax.f32 %v820, 0.0
        %v901 = vmax.f32 %v823, 0.0
        %v902 = vmax.f32 %v828, 0.0
        %v903 = vmax.f32 %v831, 0.0
        %v904 = vmax.f32 %v836, 0.0
        %v905 = vmax.f32 %v839, 0.0
        %v906 = vpack.c.bf16 %v843, %v842
        %v907 = vpack.c.bf16 %v845, %v844
        %v908 = vpack.c.bf16 %v847, %v846
        %v909 = vpack.c.bf16 %v849, %v848
        %v910 = vpack.c.bf16 %v851, %v850
        %v911 = vpack.c.bf16 %v853, %v852
        %v912 = vpack.c.bf16 %v855, %v854
        %v913 = vpack.c.bf16 %v857, %v856
        %v914 = vpack.c.bf16 %v859, %v858
        %v915 = vpack.c.bf16 %v861, %v860
        %v916 = vpack.c.bf16 %v863, %v862
        %v917 = vpack.c.bf16 %v865, %v864
        %v918 = vpack.c.bf16 %v867, %v866
        %v919 = vpack.c.bf16 %v869, %v868
        %v920 = vpack.c.bf16 %v871, %v870
        %v921 = vpack.c.bf16 %v873, %v872
        %v922 = vpack.c.bf16 %v875, %v874
        %v923 = vpack.c.bf16 %v877, %v876
        %v924 = vpack.c.bf16 %v879, %v878
        %v925 = vpack.c.bf16 %v881, %v880
        %v926 = vpack.c.bf16 %v883, %v882
        %v927 = vpack.c.bf16 %v885, %v884
        %v928 = vpack.c.bf16 %v887, %v886
        %v929 = vpack.c.bf16 %v889, %v888
        %v930 = vpack.c.bf16 %v891, %v890
        %v931 = vpack.c.bf16 %v893, %v892
        %v932 = vpack.c.bf16 %v895, %v894
        %v933 = vpack.c.bf16 %v897, %v896
        %v934 = vpack.c.bf16 %v899, %v898
        %v935 = vpack.c.bf16 %v901, %v900
        %v936 = vpack.c.bf16 %v903, %v902
        %v937 = vpack.c.bf16 %v905, %v904
        %v970 = vunpack.c.l.b16 %v906
        %v971 = vunpack.c.h.b16 %v906
        %v972 = vunpack.c.l.b16 %v907
        %v973 = vunpack.c.h.b16 %v907
        %v974 = vunpack.c.l.b16 %v908
        %v975 = vunpack.c.h.b16 %v908
        %v976 = vunpack.c.l.b16 %v909
        %v977 = vunpack.c.h.b16 %v909
        %v978 = vunpack.c.l.b16 %v910
        %v979 = vunpack.c.h.b16 %v910
        %v980 = vunpack.c.l.b16 %v911
        %v981 = vunpack.c.h.b16 %v911
        %v982 = vunpack.c.l.b16 %v912
        %v983 = vunpack.c.h.b16 %v912
        %v984 = vunpack.c.l.b16 %v913
        %v985 = vunpack.c.h.b16 %v913
        %v986 = vunpack.c.l.b16 %v914
        %v987 = vunpack.c.h.b16 %v914
        %v988 = vunpack.c.l.b16 %v915
        %v989 = vunpack.c.h.b16 %v915
        %v990 = vunpack.c.l.b16 %v916
        %v991 = vunpack.c.h.b16 %v916
        %v992 = vunpack.c.l.b16 %v917
        %v993 = vunpack.c.h.b16 %v917
        %v994 = vunpack.c.l.b16 %v918
        %v995 = vunpack.c.h.b16 %v918
        %v996 = vunpack.c.l.b16 %v919
        %v997 = vunpack.c.h.b16 %v919
        %v998 = vunpack.c.l.b16 %v920
        %v999 = vunpack.c.h.b16 %v920
        %v1000 = vunpack.c.l.b16 %v921
        %v1001 = vunpack.c.h.b16 %v921
        %v1002 = vunpack.c.l.b16 %v922
        %v1003 = vunpack.c.h.b16 %v922
        %v1004 = vunpack.c.l.b16 %v923
        %v1005 = vunpack.c.h.b16 %v923
        %v1006 = vunpack.c.l.b16 %v924
        %v1007 = vunpack.c.h.b16 %v924
        %v1008 = vunpack.c.l.b16 %v925
        %v1009 = vunpack.c.h.b16 %v925
        %v1010 = vunpack.c.l.b16 %v926
        %v1011 = vunpack.c.h.b16 %v926
        %v1012 = vunpack.c.l.b16 %v927
        %v1013 = vunpack.c.h.b16 %v927
        %v1014 = vunpack.c.l.b16 %v928
        %v1015 = vunpack.c.h.b16 %v928
        %v1016 = vunpack.c.l.b16 %v929
        %v1017 = vunpack.c.h.b16 %v929
        %v1018 = vunpack.c.l.b16 %v930
        %v1019 = vunpack.c.h.b16 %v930
        %v1020 = vunpack.c.l.b16 %v931
        %v1021 = vunpack.c.h.b16 %v931
        %v1022 = vunpack.c.l.b16 %v932
        %v1023 = vunpack.c.h.b16 %v932
        %v1024 = vunpack.c.l.b16 %v933
        %v1025 = vunpack.c.h.b16 %v933
        %v1026 = vunpack.c.l.b16 %v934
        %v1027 = vunpack.c.h.b16 %v934
        %v1028 = vunpack.c.l.b16 %v935
        %v1029 = vunpack.c.h.b16 %v935
        %v1030 = vunpack.c.l.b16 %v936
        %v1031 = vunpack.c.h.b16 %v936
        %v1032 = vunpack.c.l.b16 %v937
        %v1033 = vunpack.c.h.b16 %v937
        %v1034 = vpack.c.b16 %v970, %v970
        %v1035 = vpack.c.b16 %v971, %v971
        %v1036 = vpack.c.b16 %v972, %v972
        %v1037 = vpack.c.b16 %v973, %v973
        %v1038 = vpack.c.b16 %v974, %v974
        %v1039 = vpack.c.b16 %v975, %v975
        %v1040 = vpack.c.b16 %v976, %v976
        %v1041 = vpack.c.b16 %v977, %v977
        %v1042 = vpack.c.b16 %v978, %v978
        %v1043 = vpack.c.b16 %v979, %v979
        %v1044 = vpack.c.b16 %v980, %v980
        %v1045 = vpack.c.b16 %v981, %v981
        %v1046 = vpack.c.b16 %v982, %v982
        %v1047 = vpack.c.b16 %v983, %v983
        %v1048 = vpack.c.b16 %v984, %v984
        %v1049 = vpack.c.b16 %v985, %v985
        %v1050 = vpack.c.b16 %v986, %v986
        %v1051 = vpack.c.b16 %v987, %v987
        %v1052 = vpack.c.b16 %v988, %v988
        %v1053 = vpack.c.b16 %v989, %v989
        %v1054 = vpack.c.b16 %v990, %v990
        %v1055 = vpack.c.b16 %v991, %v991
        %v1056 = vpack.c.b16 %v992, %v992
        %v1057 = vpack.c.b16 %v993, %v993
        %v1058 = vpack.c.b16 %v994, %v994
        %v1059 = vpack.c.b16 %v995, %v995
        %v1060 = vpack.c.b16 %v996, %v996
        %v1061 = vpack.c.b16 %v997, %v997
        %v1062 = vpack.c.b16 %v998, %v998
        %v1063 = vpack.c.b16 %v999, %v999
        %v1064 = vpack.c.b16 %v1000, %v1000
        %v1065 = vpack.c.b16 %v1001, %v1001
        %v1066 = vpack.c.b16 %v1002, %v1002
        %v1067 = vpack.c.b16 %v1003, %v1003
        %v1068 = vpack.c.b16 %v1004, %v1004
        %v1069 = vpack.c.b16 %v1005, %v1005
        %v1070 = vpack.c.b16 %v1006, %v1006
        %v1071 = vpack.c.b16 %v1007, %v1007
        %v1072 = vpack.c.b16 %v1008, %v1008
        %v1073 = vpack.c.b16 %v1009, %v1009
        %v1074 = vpack.c.b16 %v1010, %v1010
        %v1075 = vpack.c.b16 %v1011, %v1011
        %v1076 = vpack.c.b16 %v1012, %v1012
        %v1077 = vpack.c.b16 %v1013, %v1013
        %v1078 = vpack.c.b16 %v1014, %v1014
        %v1079 = vpack.c.b16 %v1015, %v1015
        %v1080 = vpack.c.b16 %v1016, %v1016
        %v1081 = vpack.c.b16 %v1017, %v1017
        %v1082 = vpack.c.b16 %v1018, %v1018
        %v1083 = vpack.c.b16 %v1019, %v1019
        %v1084 = vpack.c.b16 %v1020, %v1020
        %v1085 = vpack.c.b16 %v1021, %v1021
        %v1086 = vpack.c.b16 %v1022, %v1022
        %v1087 = vpack.c.b16 %v1023, %v1023
        %v1088 = vpack.c.b16 %v1024, %v1024
        %v1089 = vpack.c.b16 %v1025, %v1025
        %v1090 = vpack.c.b16 %v1026, %v1026
        %v1091 = vpack.c.b16 %v1027, %v1027
        %v1092 = vpack.c.b16 %v1028, %v1028
        %v1093 = vpack.c.b16 %v1029, %v1029
        %v1094 = vpack.c.b16 %v1030, %v1030
        %v1095 = vpack.c.b16 %v1031, %v1031
        %v1096 = vpack.c.b16 %v1032, %v1032
        %v1097 = vpack.c.b16 %v1033, %v1033
        %vm1162 = vcmask 60416
        %1163 = vst.msk [vmem:[%s172] sm:$0xf] %vm1162, %v1034
        %1164 = vst.msk [vmem:[%s172 + $0x4] sm:$0xf] %vm1162, %v1035
        %1165 = vst.msk [vmem:[%s172 + $0x8] sm:$0xf] %vm1162, %v1036
        %1166 = vst.msk [vmem:[%s172 + $0xc] sm:$0xf] %vm1162, %v1037
        %1167 = vst.msk [vmem:[%s172 + $0x10] sm:$0xf] %vm1162, %v1038
        %1168 = vst.msk [vmem:[%s172 + $0x14] sm:$0xf] %vm1162, %v1039
        %1169 = vst.msk [vmem:[%s172 + $0x18] sm:$0xf] %vm1162, %v1040
        %1170 = vst.msk [vmem:[%s172 + $0x1c] sm:$0xf] %vm1162, %v1041
        %1171 = vst.msk [vmem:[%s172 + $0x20] sm:$0xf] %vm1162, %v1042
        %1172 = vst.msk [vmem:[%s172 + $0x24] sm:$0xf] %vm1162, %v1043
        %1173 = vst.msk [vmem:[%s172 + $0x28] sm:$0xf] %vm1162, %v1044
        %1174 = vst.msk [vmem:[%s172 + $0x2c] sm:$0xf] %vm1162, %v1045
        %1175 = vst.msk [vmem:[%s172 + $0x30] sm:$0xf] %vm1162, %v1046
        %1176 = vst.msk [vmem:[%s172 + $0x34] sm:$0xf] %vm1162, %v1047
        %1177 = vst.msk [vmem:[%s172 + $0x38] sm:$0xf] %vm1162, %v1048
        %1178 = vst.msk [vmem:[%s172 + $0x3c] sm:$0xf] %vm1162, %v1049
        %1179 = vst.msk [vmem:[%s172 + $0x40] sm:$0xf] %vm1162, %v1050
        %1180 = vst.msk [vmem:[%s172 + $0x44] sm:$0xf] %vm1162, %v1051
        %1181 = vst.msk [vmem:[%s172 + $0x48] sm:$0xf] %vm1162, %v1052
        %1182 = vst.msk [vmem:[%s172 + $0x4c] sm:$0xf] %vm1162, %v1053
        %1183 = vst.msk [vmem:[%s172 + $0x50] sm:$0xf] %vm1162, %v1054
        %1184 = vst.msk [vmem:[%s172 + $0x54] sm:$0xf] %vm1162, %v1055
        %1185 = vst.msk [vmem:[%s172 + $0x58] sm:$0xf] %vm1162, %v1056
        %1186 = vst.msk [vmem:[%s172 + $0x5c] sm:$0xf] %vm1162, %v1057
        %1187 = vst.msk [vmem:[%s172 + $0x60] sm:$0xf] %vm1162, %v1058
        %1188 = vst.msk [vmem:[%s172 + $0x64] sm:$0xf] %vm1162, %v1059
        %1189 = vst.msk [vmem:[%s172 + $0x68] sm:$0xf] %vm1162, %v1060
        %1190 = vst.msk [vmem:[%s172 + $0x6c] sm:$0xf] %vm1162, %v1061
        %1191 = vst.msk [vmem:[%s172 + $0x70] sm:$0xf] %vm1162, %v1062
        %1192 = vst.msk [vmem:[%s172 + $0x74] sm:$0xf] %vm1162, %v1063
        %1193 = vst.msk [vmem:[%s172 + $0x78] sm:$0xf] %vm1162, %v1064
        %1194 = vst.msk [vmem:[%s172 + $0x7c] sm:$0xf] %vm1162, %v1065
        %1195 = vst.msk [vmem:[%s172 + $0x80] sm:$0xf] %vm1162, %v1066
        %1196 = vst.msk [vmem:[%s172 + $0x84] sm:$0xf] %vm1162, %v1067
        %1197 = vst.msk [vmem:[%s172 + $0x88] sm:$0xf] %vm1162, %v1068
        %1198 = vst.msk [vmem:[%s172 + $0x8c] sm:$0xf] %vm1162, %v1069
        %1199 = vst.msk [vmem:[%s172 + $0x90] sm:$0xf] %vm1162, %v1070
        %1200 = vst.msk [vmem:[%s172 + $0x94] sm:$0xf] %vm1162, %v1071
        %1201 = vst.msk [vmem:[%s172 + $0x98] sm:$0xf] %vm1162, %v1072
        %1202 = vst.msk [vmem:[%s172 + $0x9c] sm:$0xf] %vm1162, %v1073
        %1203 = vst.msk [vmem:[%s172 + $0xa0] sm:$0xf] %vm1162, %v1074
        %1204 = vst.msk [vmem:[%s172 + $0xa4] sm:$0xf] %vm1162, %v1075
        %1205 = vst.msk [vmem:[%s172 + $0xa8] sm:$0xf] %vm1162, %v1076
        %1206 = vst.msk [vmem:[%s172 + $0xac] sm:$0xf] %vm1162, %v1077
        %1207 = vst.msk [vmem:[%s172 + $0xb0] sm:$0xf] %vm1162, %v1078
        %1208 = vst.msk [vmem:[%s172 + $0xb4] sm:$0xf] %vm1162, %v1079
        %1209 = vst.msk [vmem:[%s172 + $0xb8] sm:$0xf] %vm1162, %v1080
        %1210 = vst.msk [vmem:[%s172 + $0xbc] sm:$0xf] %vm1162, %v1081
        %1211 = vst.msk [vmem:[%s172 + $0xc0] sm:$0xf] %vm1162, %v1082
        %1212 = vst.msk [vmem:[%s172 + $0xc4] sm:$0xf] %vm1162, %v1083
        %1213 = vst.msk [vmem:[%s172 + $0xc8] sm:$0xf] %vm1162, %v1084
        %1214 = vst.msk [vmem:[%s172 + $0xcc] sm:$0xf] %vm1162, %v1085
        %1215 = vst.msk [vmem:[%s172 + $0xd0] sm:$0xf] %vm1162, %v1086
        %1216 = vst.msk [vmem:[%s172 + $0xd4] sm:$0xf] %vm1162, %v1087
        %1217 = vst.msk [vmem:[%s172 + $0xd8] sm:$0xf] %vm1162, %v1088
        %1218 = vst.msk [vmem:[%s172 + $0xdc] sm:$0xf] %vm1162, %v1089
        %1219 = vst.msk [vmem:[%s172 + $0xe0] sm:$0xf] %vm1162, %v1090
        %1220 = vst.msk [vmem:[%s172 + $0xe4] sm:$0xf] %vm1162, %v1091
        %1221 = vst.msk [vmem:[%s172 + $0xe8] sm:$0xf] %vm1162, %v1092
        %1222 = vst.msk [vmem:[%s172 + $0xec] sm:$0xf] %vm1162, %v1093
        %1223 = vst.msk [vmem:[%s172 + $0xf0] sm:$0xf] %vm1162, %v1094
        %1224 = vst.msk [vmem:[%s172 + $0xf4] sm:$0xf] %vm1162, %v1095
        %1225 = vst.msk [vmem:[%s172 + $0xf8] sm:$0xf] %vm1162, %v1096
        %1226 = vst.msk [vmem:[%s172 + $0xfc] sm:$0xf] %vm1162, %v1097
        %s1227 = sand.u32 %s90, 1
        %s1228 = sand.u32 %s90, 1
        %s1229 = smul.addr %s1228, 256
        %s1230 = scalar_lea.vmem [#allocation2], %s1229
        // Predicated region
        $region33: #{net_forward.5} parent=31 // pred_check
          %p1231 = pneg %p100
        $region34: #{net_forward.5} parent=31 // pred_check_branch
          %1233 = sbr.rel (%p1231) target = $region36
        $region35: #{net_forward.5} parent=31 // pred_region
          %s1234 = smul.u32 64, %s14
          %s1235 = ssub.s32 553, %s1234
          %p1236 = scmp.lt.s32.totalorder %s1235, 64
          %s1237 = scalar_select %p1236, %s1235, 64
          %s1238 = smul.u32 64, %s1237
          %p1239 = scmp.ne.s32.totalorder 0, %s1238
          %s1240 = smul.addr %s1234, 4
          %s1241 = scalar_lea.vmem %s3, %s1240
          // Predicated region
          $region37: #{net_forward.5} parent=35 // pred_check
            %p1242 = pneg %p1239
          $region38: #{net_forward.5} parent=35 // pred_check_branch
            %1244 = sbr.rel (%p1242) target = $region40
          $region39: #{net_forward.5} parent=35 // pred_region
            // Predicated region
            $region41: #{net_forward.5} parent=39 // pred_check
              _
            $region42: #{net_forward.5} parent=39 // pred_check_branch
              %1246 = sbr.rel target = $region44
            $region43: #{net_forward.5} parent=39 // pred_region
              // Predicated region
              $region63: #{net_forward.5} parent=43 // pred_check
                _
              $region64: #{net_forward.5} parent=43 // pred_check_branch
                %1421 = sbr.rel (0) target = $region66
              $region65: #{net_forward.5} parent=43 // pred_region
                %s1423 = sshrl.u32 %s1237, 6
                // While loop
                $region67: #{net_forward.5} parent=65 // loop_pre_header
                  _
                $region68: #{net_forward.5} parent=65 // loop_header
                  %s1425 = sphi 0, %s1427
                  %p1426 = scmp.ge.s32.totalorder %s1425, %s1423
                  %s1430 = sphi 0, %s1563
                  %s1431 = sphi %s1230, %s1566
                  %s1432 = sphi %s1241, %s1567
                $region69: #{net_forward.5} parent=65 // loop_header_branch
                  %1429 = sbr.rel (%p1426) target = $region73
                $region70: #{net_forward.5} parent=65 // loop_body
                  %v1433 = vld [vmem:[%s1431] sm:$0xf]
                  %1434 = vst [vmem:[%s1432] sm:$0xf] %v1433
                  %v1435 = vld [vmem:[%s1431 + $0x4] sm:$0xf]
                  %1436 = vst [vmem:[%s1432 + $0x4] sm:$0xf] %v1435
                  %v1437 = vld [vmem:[%s1431 + $0x8] sm:$0xf]
                  %1438 = vst [vmem:[%s1432 + $0x8] sm:$0xf] %v1437
                  %v1439 = vld [vmem:[%s1431 + $0xc] sm:$0xf]
                  %1440 = vst [vmem:[%s1432 + $0xc] sm:$0xf] %v1439
                  %v1441 = vld [vmem:[%s1431 + $0x10] sm:$0xf]
                  %1442 = vst [vmem:[%s1432 + $0x10] sm:$0xf] %v1441
                  %v1443 = vld [vmem:[%s1431 + $0x14] sm:$0xf]
                  %1444 = vst [vmem:[%s1432 + $0x14] sm:$0xf] %v1443
                  %v1445 = vld [vmem:[%s1431 + $0x18] sm:$0xf]
                  %1446 = vst [vmem:[%s1432 + $0x18] sm:$0xf] %v1445
                  %v1447 = vld [vmem:[%s1431 + $0x1c] sm:$0xf]
                  %1448 = vst [vmem:[%s1432 + $0x1c] sm:$0xf] %v1447
                  %v1449 = vld [vmem:[%s1431 + $0x20] sm:$0xf]
                  %1450 = vst [vmem:[%s1432 + $0x20] sm:$0xf] %v1449
                  %v1451 = vld [vmem:[%s1431 + $0x24] sm:$0xf]
                  %1452 = vst [vmem:[%s1432 + $0x24] sm:$0xf] %v1451
                  %v1453 = vld [vmem:[%s1431 + $0x28] sm:$0xf]
                  %1454 = vst [vmem:[%s1432 + $0x28] sm:$0xf] %v1453
                  %v1455 = vld [vmem:[%s1431 + $0x2c] sm:$0xf]
                  %1456 = vst [vmem:[%s1432 + $0x2c] sm:$0xf] %v1455
                  %v1457 = vld [vmem:[%s1431 + $0x30] sm:$0xf]
                  %1458 = vst [vmem:[%s1432 + $0x30] sm:$0xf] %v1457
                  %v1459 = vld [vmem:[%s1431 + $0x34] sm:$0xf]
                  %1460 = vst [vmem:[%s1432 + $0x34] sm:$0xf] %v1459
                  %v1461 = vld [vmem:[%s1431 + $0x38] sm:$0xf]
                  %1462 = vst [vmem:[%s1432 + $0x38] sm:$0xf] %v1461
                  %v1463 = vld [vmem:[%s1431 + $0x3c] sm:$0xf]
                  %1464 = vst [vmem:[%s1432 + $0x3c] sm:$0xf] %v1463
                  %v1465 = vld [vmem:[%s1431 + $0x40] sm:$0xf]
                  %1466 = vst [vmem:[%s1432 + $0x40] sm:$0xf] %v1465
                  %v1467 = vld [vmem:[%s1431 + $0x44] sm:$0xf]
                  %1468 = vst [vmem:[%s1432 + $0x44] sm:$0xf] %v1467
                  %v1469 = vld [vmem:[%s1431 + $0x48] sm:$0xf]
                  %1470 = vst [vmem:[%s1432 + $0x48] sm:$0xf] %v1469
                  %v1471 = vld [vmem:[%s1431 + $0x4c] sm:$0xf]
                  %1472 = vst [vmem:[%s1432 + $0x4c] sm:$0xf] %v1471
                  %v1473 = vld [vmem:[%s1431 + $0x50] sm:$0xf]
                  %1474 = vst [vmem:[%s1432 + $0x50] sm:$0xf] %v1473
                  %v1475 = vld [vmem:[%s1431 + $0x54] sm:$0xf]
                  %1476 = vst [vmem:[%s1432 + $0x54] sm:$0xf] %v1475
                  %v1477 = vld [vmem:[%s1431 + $0x58] sm:$0xf]
                  %1478 = vst [vmem:[%s1432 + $0x58] sm:$0xf] %v1477
                  %v1479 = vld [vmem:[%s1431 + $0x5c] sm:$0xf]
                  %1480 = vst [vmem:[%s1432 + $0x5c] sm:$0xf] %v1479
                  %v1481 = vld [vmem:[%s1431 + $0x60] sm:$0xf]
                  %1482 = vst [vmem:[%s1432 + $0x60] sm:$0xf] %v1481
                  %v1483 = vld [vmem:[%s1431 + $0x64] sm:$0xf]
                  %1484 = vst [vmem:[%s1432 + $0x64] sm:$0xf] %v1483
                  %v1485 = vld [vmem:[%s1431 + $0x68] sm:$0xf]
                  %1486 = vst [vmem:[%s1432 + $0x68] sm:$0xf] %v1485
                  %v1487 = vld [vmem:[%s1431 + $0x6c] sm:$0xf]
                  %1488 = vst [vmem:[%s1432 + $0x6c] sm:$0xf] %v1487
                  %v1489 = vld [vmem:[%s1431 + $0x70] sm:$0xf]
                  %1490 = vst [vmem:[%s1432 + $0x70] sm:$0xf] %v1489
                  %v1491 = vld [vmem:[%s1431 + $0x74] sm:$0xf]
                  %1492 = vst [vmem:[%s1432 + $0x74] sm:$0xf] %v1491
                  %v1493 = vld [vmem:[%s1431 + $0x78] sm:$0xf]
                  %1494 = vst [vmem:[%s1432 + $0x78] sm:$0xf] %v1493
                  %v1495 = vld [vmem:[%s1431 + $0x7c] sm:$0xf]
                  %1496 = vst [vmem:[%s1432 + $0x7c] sm:$0xf] %v1495
                  %v1497 = vld [vmem:[%s1431 + $0x80] sm:$0xf]
                  %1498 = vst [vmem:[%s1432 + $0x80] sm:$0xf] %v1497
                  %v1499 = vld [vmem:[%s1431 + $0x84] sm:$0xf]
                  %1500 = vst [vmem:[%s1432 + $0x84] sm:$0xf] %v1499
                  %v1501 = vld [vmem:[%s1431 + $0x88] sm:$0xf]
                  %1502 = vst [vmem:[%s1432 + $0x88] sm:$0xf] %v1501
                  %v1503 = vld [vmem:[%s1431 + $0x8c] sm:$0xf]
                  %1504 = vst [vmem:[%s1432 + $0x8c] sm:$0xf] %v1503
                  %v1505 = vld [vmem:[%s1431 + $0x90] sm:$0xf]
                  %1506 = vst [vmem:[%s1432 + $0x90] sm:$0xf] %v1505
                  %v1507 = vld [vmem:[%s1431 + $0x94] sm:$0xf]
                  %1508 = vst [vmem:[%s1432 + $0x94] sm:$0xf] %v1507
                  %v1509 = vld [vmem:[%s1431 + $0x98] sm:$0xf]
                  %1510 = vst [vmem:[%s1432 + $0x98] sm:$0xf] %v1509
                  %v1511 = vld [vmem:[%s1431 + $0x9c] sm:$0xf]
                  %1512 = vst [vmem:[%s1432 + $0x9c] sm:$0xf] %v1511
                  %v1513 = vld [vmem:[%s1431 + $0xa0] sm:$0xf]
                  %1514 = vst [vmem:[%s1432 + $0xa0] sm:$0xf] %v1513
                  %v1515 = vld [vmem:[%s1431 + $0xa4] sm:$0xf]
                  %1516 = vst [vmem:[%s1432 + $0xa4] sm:$0xf] %v1515
                  %v1517 = vld [vmem:[%s1431 + $0xa8] sm:$0xf]
                  %1518 = vst [vmem:[%s1432 + $0xa8] sm:$0xf] %v1517
                  %v1519 = vld [vmem:[%s1431 + $0xac] sm:$0xf]
                  %1520 = vst [vmem:[%s1432 + $0xac] sm:$0xf] %v1519
                  %v1521 = vld [vmem:[%s1431 + $0xb0] sm:$0xf]
                  %1522 = vst [vmem:[%s1432 + $0xb0] sm:$0xf] %v1521
                  %v1523 = vld [vmem:[%s1431 + $0xb4] sm:$0xf]
                  %1524 = vst [vmem:[%s1432 + $0xb4] sm:$0xf] %v1523
                  %v1525 = vld [vmem:[%s1431 + $0xb8] sm:$0xf]
                  %1526 = vst [vmem:[%s1432 + $0xb8] sm:$0xf] %v1525
                  %v1527 = vld [vmem:[%s1431 + $0xbc] sm:$0xf]
                  %1528 = vst [vmem:[%s1432 + $0xbc] sm:$0xf] %v1527
                  %v1529 = vld [vmem:[%s1431 + $0xc0] sm:$0xf]
                  %1530 = vst [vmem:[%s1432 + $0xc0] sm:$0xf] %v1529
                  %v1531 = vld [vmem:[%s1431 + $0xc4] sm:$0xf]
                  %1532 = vst [vmem:[%s1432 + $0xc4] sm:$0xf] %v1531
                  %v1533 = vld [vmem:[%s1431 + $0xc8] sm:$0xf]
                  %1534 = vst [vmem:[%s1432 + $0xc8] sm:$0xf] %v1533
                  %v1535 = vld [vmem:[%s1431 + $0xcc] sm:$0xf]
                  %1536 = vst [vmem:[%s1432 + $0xcc] sm:$0xf] %v1535
                  %v1537 = vld [vmem:[%s1431 + $0xd0] sm:$0xf]
                  %1538 = vst [vmem:[%s1432 + $0xd0] sm:$0xf] %v1537
                  %v1539 = vld [vmem:[%s1431 + $0xd4] sm:$0xf]
                  %1540 = vst [vmem:[%s1432 + $0xd4] sm:$0xf] %v1539
                  %v1541 = vld [vmem:[%s1431 + $0xd8] sm:$0xf]
                  %1542 = vst [vmem:[%s1432 + $0xd8] sm:$0xf] %v1541
                  %v1543 = vld [vmem:[%s1431 + $0xdc] sm:$0xf]
                  %1544 = vst [vmem:[%s1432 + $0xdc] sm:$0xf] %v1543
                  %v1545 = vld [vmem:[%s1431 + $0xe0] sm:$0xf]
                  %1546 = vst [vmem:[%s1432 + $0xe0] sm:$0xf] %v1545
                  %v1547 = vld [vmem:[%s1431 + $0xe4] sm:$0xf]
                  %1548 = vst [vmem:[%s1432 + $0xe4] sm:$0xf] %v1547
                  %v1549 = vld [vmem:[%s1431 + $0xe8] sm:$0xf]
                  %1550 = vst [vmem:[%s1432 + $0xe8] sm:$0xf] %v1549
                  %v1551 = vld [vmem:[%s1431 + $0xec] sm:$0xf]
                  %1552 = vst [vmem:[%s1432 + $0xec] sm:$0xf] %v1551
                  %v1553 = vld [vmem:[%s1431 + $0xf0] sm:$0xf]
                  %1554 = vst [vmem:[%s1432 + $0xf0] sm:$0xf] %v1553
                  %v1555 = vld [vmem:[%s1431 + $0xf4] sm:$0xf]
                  %1556 = vst [vmem:[%s1432 + $0xf4] sm:$0xf] %v1555
                  %v1557 = vld [vmem:[%s1431 + $0xf8] sm:$0xf]
                  %1558 = vst [vmem:[%s1432 + $0xf8] sm:$0xf] %v1557
                  %v1559 = vld [vmem:[%s1431 + $0xfc] sm:$0xf]
                  %1560 = vst [vmem:[%s1432 + $0xfc] sm:$0xf] %v1559
                  %s1561 = sadd.s32 1, %s1430
                  %p1562 = scmp.ge.s32.totalorder %s1561, %s1423
                  %s1563 = scalar_select %p1562, 0, %s1561
                  %s1564 = smul.u32 %s1563, 256
                  %s1565 = smul.u32 %s1563, 256
                  %s1566 = scalar_lea.vmem %s1230, %s1564 [#allocation2]
                  %s1567 = scalar_lea.vmem %s1241, %s1565
                $region71: #{net_forward.5} parent=65 // loop_footer
                  %s1427 = sadd.s32 %s1425, 1
                $region72: #{net_forward.5} parent=65 // loop_footer_branch
                  %1424 = sbr.rel target = $region68
                $region73: #{net_forward.5} parent=65 // loop_exit
                  _
                %s1568 = sshrl.u32 %s1237, 6
                %s1569 = sand.u32 %s1237, 63
                %s1570 = smul.u32 %s1568, 64
                %s1571 = smul.u32 4, %s1570
                %s1572 = scalar_lea.vmem %s1230, %s1571 [#allocation2]
                %s1573 = smul.u32 4, %s1570
                %s1574 = scalar_lea.vmem %s1241, %s1573
                // While loop
                $region74: #{net_forward.5} parent=65 // loop_pre_header
                  _
                $region75: #{net_forward.5} parent=65 // loop_header
                  %s1576 = sphi 0, %s1578
                  %p1577 = scmp.ge.s32.totalorder %s1576, %s1569
                  %s1581 = sphi 0, %s1588
                  %s1582 = sphi %s1572, %s1591
                  %s1583 = sphi %s1574, %s1592
                $region76: #{net_forward.5} parent=65 // loop_header_branch
                  %1580 = sbr.rel (%p1577) target = $region80
                $region77: #{net_forward.5} parent=65 // loop_body
                  %v1584 = vld [vmem:[%s1582] sm:$0xf]
                  %1585 = vst [vmem:[%s1583] sm:$0xf] %v1584
                  %s1586 = sadd.s32 1, %s1581
                  %p1587 = scmp.ge.s32.totalorder %s1586, %s1569
                  %s1588 = scalar_select %p1587, 0, %s1586
                  %s1589 = smul.u32 %s1588, 4
                  %s1590 = smul.u32 %s1588, 4
                  %s1591 = scalar_lea.vmem %s1572, %s1589 [#allocation2]
                  %s1592 = scalar_lea.vmem %s1574, %s1590
                $region78: #{net_forward.5} parent=65 // loop_footer
                  %s1578 = sadd.s32 %s1576, 1
                $region79: #{net_forward.5} parent=65 // loop_footer_branch
                  %1575 = sbr.rel target = $region75
                $region80: #{net_forward.5} parent=65 // loop_exit
                  _
              $region66: #{net_forward.5} parent=43 // pred_fallthru
                _
            $region44: #{net_forward.5} parent=39 // pred_fallthru
              _
            // Predicated region
            $region45: #{net_forward.5} parent=39 // pred_check
              _
            $region46: #{net_forward.5} parent=39 // pred_check_branch
              %1248 = sbr.rel (0) target = $region48
            $region47: #{net_forward.5} parent=39 // pred_region
              %s1250 = sshrl.u32 %s1237, 6
              // While loop
              $region49: #{net_forward.5} parent=47 // loop_pre_header
                _
              $region50: #{net_forward.5} parent=47 // loop_header
                %s1252 = sphi 0, %s1254
                %p1253 = scmp.ge.s32.totalorder %s1252, %s1250
                %s1257 = sphi 0, %s1390
                %s1258 = sphi %s1230, %s1393
                %s1259 = sphi %s1241, %s1394
              $region51: #{net_forward.5} parent=47 // loop_header_branch
                %1256 = sbr.rel (%p1253) target = $region55
              $region52: #{net_forward.5} parent=47 // loop_body
                %v1260 = vld [vmem:[%s1258] sm:$0xf]
                %1261 = vst [vmem:[%s1259] sm:$0xf] %v1260
                %v1262 = vld [vmem:[%s1258 + $0x4] sm:$0xf]
                %1263 = vst [vmem:[%s1259 + $0x4] sm:$0xf] %v1262
                %v1264 = vld [vmem:[%s1258 + $0x8] sm:$0xf]
                %1265 = vst [vmem:[%s1259 + $0x8] sm:$0xf] %v1264
                %v1266 = vld [vmem:[%s1258 + $0xc] sm:$0xf]
                %1267 = vst [vmem:[%s1259 + $0xc] sm:$0xf] %v1266
                %v1268 = vld [vmem:[%s1258 + $0x10] sm:$0xf]
                %1269 = vst [vmem:[%s1259 + $0x10] sm:$0xf] %v1268
                %v1270 = vld [vmem:[%s1258 + $0x14] sm:$0xf]
                %1271 = vst [vmem:[%s1259 + $0x14] sm:$0xf] %v1270
                %v1272 = vld [vmem:[%s1258 + $0x18] sm:$0xf]
                %1273 = vst [vmem:[%s1259 + $0x18] sm:$0xf] %v1272
                %v1274 = vld [vmem:[%s1258 + $0x1c] sm:$0xf]
                %1275 = vst [vmem:[%s1259 + $0x1c] sm:$0xf] %v1274
                %v1276 = vld [vmem:[%s1258 + $0x20] sm:$0xf]
                %1277 = vst [vmem:[%s1259 + $0x20] sm:$0xf] %v1276
                %v1278 = vld [vmem:[%s1258 + $0x24] sm:$0xf]
                %1279 = vst [vmem:[%s1259 + $0x24] sm:$0xf] %v1278
                %v1280 = vld [vmem:[%s1258 + $0x28] sm:$0xf]
                %1281 = vst [vmem:[%s1259 + $0x28] sm:$0xf] %v1280
                %v1282 = vld [vmem:[%s1258 + $0x2c] sm:$0xf]
                %1283 = vst [vmem:[%s1259 + $0x2c] sm:$0xf] %v1282
                %v1284 = vld [vmem:[%s1258 + $0x30] sm:$0xf]
                %1285 = vst [vmem:[%s1259 + $0x30] sm:$0xf] %v1284
                %v1286 = vld [vmem:[%s1258 + $0x34] sm:$0xf]
                %1287 = vst [vmem:[%s1259 + $0x34] sm:$0xf] %v1286
                %v1288 = vld [vmem:[%s1258 + $0x38] sm:$0xf]
                %1289 = vst [vmem:[%s1259 + $0x38] sm:$0xf] %v1288
                %v1290 = vld [vmem:[%s1258 + $0x3c] sm:$0xf]
                %1291 = vst [vmem:[%s1259 + $0x3c] sm:$0xf] %v1290
                %v1292 = vld [vmem:[%s1258 + $0x40] sm:$0xf]
                %1293 = vst [vmem:[%s1259 + $0x40] sm:$0xf] %v1292
                %v1294 = vld [vmem:[%s1258 + $0x44] sm:$0xf]
                %1295 = vst [vmem:[%s1259 + $0x44] sm:$0xf] %v1294
                %v1296 = vld [vmem:[%s1258 + $0x48] sm:$0xf]
                %1297 = vst [vmem:[%s1259 + $0x48] sm:$0xf] %v1296
                %v1298 = vld [vmem:[%s1258 + $0x4c] sm:$0xf]
                %1299 = vst [vmem:[%s1259 + $0x4c] sm:$0xf] %v1298
                %v1300 = vld [vmem:[%s1258 + $0x50] sm:$0xf]
                %1301 = vst [vmem:[%s1259 + $0x50] sm:$0xf] %v1300
                %v1302 = vld [vmem:[%s1258 + $0x54] sm:$0xf]
                %1303 = vst [vmem:[%s1259 + $0x54] sm:$0xf] %v1302
                %v1304 = vld [vmem:[%s1258 + $0x58] sm:$0xf]
                %1305 = vst [vmem:[%s1259 + $0x58] sm:$0xf] %v1304
                %v1306 = vld [vmem:[%s1258 + $0x5c] sm:$0xf]
                %1307 = vst [vmem:[%s1259 + $0x5c] sm:$0xf] %v1306
                %v1308 = vld [vmem:[%s1258 + $0x60] sm:$0xf]
                %1309 = vst [vmem:[%s1259 + $0x60] sm:$0xf] %v1308
                %v1310 = vld [vmem:[%s1258 + $0x64] sm:$0xf]
                %1311 = vst [vmem:[%s1259 + $0x64] sm:$0xf] %v1310
                %v1312 = vld [vmem:[%s1258 + $0x68] sm:$0xf]
                %1313 = vst [vmem:[%s1259 + $0x68] sm:$0xf] %v1312
                %v1314 = vld [vmem:[%s1258 + $0x6c] sm:$0xf]
                %1315 = vst [vmem:[%s1259 + $0x6c] sm:$0xf] %v1314
                %v1316 = vld [vmem:[%s1258 + $0x70] sm:$0xf]
                %1317 = vst [vmem:[%s1259 + $0x70] sm:$0xf] %v1316
                %v1318 = vld [vmem:[%s1258 + $0x74] sm:$0xf]
                %1319 = vst [vmem:[%s1259 + $0x74] sm:$0xf] %v1318
                %v1320 = vld [vmem:[%s1258 + $0x78] sm:$0xf]
                %1321 = vst [vmem:[%s1259 + $0x78] sm:$0xf] %v1320
                %v1322 = vld [vmem:[%s1258 + $0x7c] sm:$0xf]
                %1323 = vst [vmem:[%s1259 + $0x7c] sm:$0xf] %v1322
                %v1324 = vld [vmem:[%s1258 + $0x80] sm:$0xf]
                %1325 = vst [vmem:[%s1259 + $0x80] sm:$0xf] %v1324
                %v1326 = vld [vmem:[%s1258 + $0x84] sm:$0xf]
                %1327 = vst [vmem:[%s1259 + $0x84] sm:$0xf] %v1326
                %v1328 = vld [vmem:[%s1258 + $0x88] sm:$0xf]
                %1329 = vst [vmem:[%s1259 + $0x88] sm:$0xf] %v1328
                %v1330 = vld [vmem:[%s1258 + $0x8c] sm:$0xf]
                %1331 = vst [vmem:[%s1259 + $0x8c] sm:$0xf] %v1330
                %v1332 = vld [vmem:[%s1258 + $0x90] sm:$0xf]
                %1333 = vst [vmem:[%s1259 + $0x90] sm:$0xf] %v1332
                %v1334 = vld [vmem:[%s1258 + $0x94] sm:$0xf]
                %1335 = vst [vmem:[%s1259 + $0x94] sm:$0xf] %v1334
                %v1336 = vld [vmem:[%s1258 + $0x98] sm:$0xf]
                %1337 = vst [vmem:[%s1259 + $0x98] sm:$0xf] %v1336
                %v1338 = vld [vmem:[%s1258 + $0x9c] sm:$0xf]
                %1339 = vst [vmem:[%s1259 + $0x9c] sm:$0xf] %v1338
                %v1340 = vld [vmem:[%s1258 + $0xa0] sm:$0xf]
                %1341 = vst [vmem:[%s1259 + $0xa0] sm:$0xf] %v1340
                %v1342 = vld [vmem:[%s1258 + $0xa4] sm:$0xf]
                %1343 = vst [vmem:[%s1259 + $0xa4] sm:$0xf] %v1342
                %v1344 = vld [vmem:[%s1258 + $0xa8] sm:$0xf]
                %1345 = vst [vmem:[%s1259 + $0xa8] sm:$0xf] %v1344
                %v1346 = vld [vmem:[%s1258 + $0xac] sm:$0xf]
                %1347 = vst [vmem:[%s1259 + $0xac] sm:$0xf] %v1346
                %v1348 = vld [vmem:[%s1258 + $0xb0] sm:$0xf]
                %1349 = vst [vmem:[%s1259 + $0xb0] sm:$0xf] %v1348
                %v1350 = vld [vmem:[%s1258 + $0xb4] sm:$0xf]
                %1351 = vst [vmem:[%s1259 + $0xb4] sm:$0xf] %v1350
                %v1352 = vld [vmem:[%s1258 + $0xb8] sm:$0xf]
                %1353 = vst [vmem:[%s1259 + $0xb8] sm:$0xf] %v1352
                %v1354 = vld [vmem:[%s1258 + $0xbc] sm:$0xf]
                %1355 = vst [vmem:[%s1259 + $0xbc] sm:$0xf] %v1354
                %v1356 = vld [vmem:[%s1258 + $0xc0] sm:$0xf]
                %1357 = vst [vmem:[%s1259 + $0xc0] sm:$0xf] %v1356
                %v1358 = vld [vmem:[%s1258 + $0xc4] sm:$0xf]
                %1359 = vst [vmem:[%s1259 + $0xc4] sm:$0xf] %v1358
                %v1360 = vld [vmem:[%s1258 + $0xc8] sm:$0xf]
                %1361 = vst [vmem:[%s1259 + $0xc8] sm:$0xf] %v1360
                %v1362 = vld [vmem:[%s1258 + $0xcc] sm:$0xf]
                %1363 = vst [vmem:[%s1259 + $0xcc] sm:$0xf] %v1362
                %v1364 = vld [vmem:[%s1258 + $0xd0] sm:$0xf]
                %1365 = vst [vmem:[%s1259 + $0xd0] sm:$0xf] %v1364
                %v1366 = vld [vmem:[%s1258 + $0xd4] sm:$0xf]
                %1367 = vst [vmem:[%s1259 + $0xd4] sm:$0xf] %v1366
                %v1368 = vld [vmem:[%s1258 + $0xd8] sm:$0xf]
                %1369 = vst [vmem:[%s1259 + $0xd8] sm:$0xf] %v1368
                %v1370 = vld [vmem:[%s1258 + $0xdc] sm:$0xf]
                %1371 = vst [vmem:[%s1259 + $0xdc] sm:$0xf] %v1370
                %v1372 = vld [vmem:[%s1258 + $0xe0] sm:$0xf]
                %1373 = vst [vmem:[%s1259 + $0xe0] sm:$0xf] %v1372
                %v1374 = vld [vmem:[%s1258 + $0xe4] sm:$0xf]
                %1375 = vst [vmem:[%s1259 + $0xe4] sm:$0xf] %v1374
                %v1376 = vld [vmem:[%s1258 + $0xe8] sm:$0xf]
                %1377 = vst [vmem:[%s1259 + $0xe8] sm:$0xf] %v1376
                %v1378 = vld [vmem:[%s1258 + $0xec] sm:$0xf]
                %1379 = vst [vmem:[%s1259 + $0xec] sm:$0xf] %v1378
                %v1380 = vld [vmem:[%s1258 + $0xf0] sm:$0xf]
                %1381 = vst [vmem:[%s1259 + $0xf0] sm:$0xf] %v1380
                %v1382 = vld [vmem:[%s1258 + $0xf4] sm:$0xf]
                %1383 = vst [vmem:[%s1259 + $0xf4] sm:$0xf] %v1382
                %v1384 = vld [vmem:[%s1258 + $0xf8] sm:$0xf]
                %1385 = vst [vmem:[%s1259 + $0xf8] sm:$0xf] %v1384
                %v1386 = vld [vmem:[%s1258 + $0xfc] sm:$0xf]
                %1387 = vst [vmem:[%s1259 + $0xfc] sm:$0xf] %v1386
                %s1388 = sadd.s32 1, %s1257
                %p1389 = scmp.ge.s32.totalorder %s1388, %s1250
                %s1390 = scalar_select %p1389, 0, %s1388
                %s1391 = smul.u32 %s1390, 256
                %s1392 = smul.u32 %s1390, 256
                %s1393 = scalar_lea.vmem %s1230, %s1391 [#allocation2]
                %s1394 = scalar_lea.vmem %s1241, %s1392
              $region53: #{net_forward.5} parent=47 // loop_footer
                %s1254 = sadd.s32 %s1252, 1
              $region54: #{net_forward.5} parent=47 // loop_footer_branch
                %1251 = sbr.rel target = $region50
              $region55: #{net_forward.5} parent=47 // loop_exit
                _
              %s1395 = sshrl.u32 %s1237, 6
              %s1396 = sand.u32 %s1237, 63
              %s1397 = smul.u32 %s1395, 64
              %s1398 = smul.u32 4, %s1397
              %s1399 = scalar_lea.vmem %s1230, %s1398 [#allocation2]
              %s1400 = smul.u32 4, %s1397
              %s1401 = scalar_lea.vmem %s1241, %s1400
              // While loop
              $region56: #{net_forward.5} parent=47 // loop_pre_header
                _
              $region57: #{net_forward.5} parent=47 // loop_header
                %s1403 = sphi 0, %s1405
                %p1404 = scmp.ge.s32.totalorder %s1403, %s1396
                %s1408 = sphi 0, %s1415
                %s1409 = sphi %s1399, %s1418
                %s1410 = sphi %s1401, %s1419
              $region58: #{net_forward.5} parent=47 // loop_header_branch
                %1407 = sbr.rel (%p1404) target = $region62
              $region59: #{net_forward.5} parent=47 // loop_body
                %v1411 = vld [vmem:[%s1409] sm:$0xf]
                %1412 = vst [vmem:[%s1410] sm:$0xf] %v1411
                %s1413 = sadd.s32 1, %s1408
                %p1414 = scmp.ge.s32.totalorder %s1413, %s1396
                %s1415 = scalar_select %p1414, 0, %s1413
                %s1416 = smul.u32 %s1415, 4
                %s1417 = smul.u32 %s1415, 4
                %s1418 = scalar_lea.vmem %s1399, %s1416 [#allocation2]
                %s1419 = scalar_lea.vmem %s1401, %s1417
              $region60: #{net_forward.5} parent=47 // loop_footer
                %s1405 = sadd.s32 %s1403, 1
              $region61: #{net_forward.5} parent=47 // loop_footer_branch
                %1402 = sbr.rel target = $region57
              $region62: #{net_forward.5} parent=47 // loop_exit
                _
            $region48: #{net_forward.5} parent=39 // pred_fallthru
              _
          $region40: #{net_forward.5} parent=35 // pred_fallthru
            _
          %1593 = vnop
        $region36: #{net_forward.5} parent=31 // pred_fallthru
          _
      $region32: #{net_forward.5} parent=5 // pred_fallthru
        _
      %p1594 = scmp.le.s32.totalorder 2, %s9
      // Predicated region
      $region81: #{net_forward.5} parent=5 // pred_check
        %p1595 = pneg %p1594
      $region82: #{net_forward.5} parent=5 // pred_check_branch
        %1597 = sbr.rel (%p1595) target = $region84
      $region83: #{net_forward.5} parent=5 // pred_region
        %s1598 = ssub.s32 %s9, 2
        // Predicated region
        $region85: #{net_forward.5} parent=83 // pred_check
          %p1599 = pneg %p106
        $region86: #{net_forward.5} parent=83 // pred_check_branch
          %1601 = sbr.rel (%p1599) target = $region88
        $region87: #{net_forward.5} parent=83 // pred_region
          %s1602 = sand.u32 %s91, 1
          %s1603 = sand.u32 %s91, 1
          %s1604 = smul.addr %s1603, 256
          %s1605 = scalar_lea.vmem [#allocation2], %s1604
        $region88: #{net_forward.5} parent=83 // pred_fallthru
          _
      $region84: #{net_forward.5} parent=5 // pred_fallthru
        _
    $region6: #{net_forward.5} parent=1 // loop_footer
      %s13 = sadd.s32 1, %s9
    $region7: #{net_forward.5} parent=1 // loop_footer_branch
      %8 = sbr.rel target = $region3
    $region8: #{net_forward.5} parent=1 // loop_exit
      _

// kernel: net_forward.6
$region0: #{net_forward.6}
  #allocation0 [shape = 'u32[]', space=smem, size = 0x4, offset = 0x4, fixed_abs, tag = 'smem constant byte address 0x4 - core index']
  #allocation1 [shape = 'u32[144,128]{1,0:T(1,128)}', space=vmem, size = 0x12000, scoped, tag = 'internal scratch']
  %s0 = inlined_call_operand.vmem [shape: bf16[1058,72], index: 0, kind: input, shape index: {}]
  %s1 = inlined_call_operand.vmem [shape: bf16[72,16], index: 1, kind: input, shape index: {}]
  %s2 = inlined_call_operand.vmem [shape: f32[1,16], index: 2, kind: input, shape index: {}]
  %s3 = inlined_call_operand.vmem [shape: bf16[1058,16], index: 3, kind: output, shape index: {}]
  %s4 = sld [smem:[#allocation0]]
  $region89: #{net_forward.6} parent=0
    _
  %s6 = ssub.s32 1, %s4
  %s7 = scalar_select 0, %s6, %s4
  $region1: #{net_forward.6} parent=0
    #allocation2 [shape = 'u8[262144]{0}', space=vmem, size = 0x40000, scoped, tag = 'output window, operand 0']
    loop: start=0, step=1, limit=5
    $region2: #{net_forward.6} parent=1 // loop_pre_header
      _
    $region3: #{net_forward.6} parent=1 // loop_header
      %s9 = sphi 0, %s13
      %p10 = scmp.ge.s32.totalorder %s9, 5
      %s19 = sphi 0, %s21
      %s22 = sphi 0, %s19
      %s23 = sphi 0, %s22
      %s39 = sphi 0, %s23
      %s43 = sphi 0, %s43
      %s45 = sphi 0, %s43
      %s46 = sphi 0, %s45
      %s60 = sphi 0, %s46
      %s64 = sphi 0, %s64
      %s66 = sphi 0, %s64
      %s67 = sphi 0, %s66
      %s81 = sphi 0, %s67
      %s87 = sphi 0, %s89
      %s90 = sphi 0, %s87
      %s91 = sphi 0, %s90
      %s107 = sphi 0, %s91
    $region4: #{net_forward.6} parent=1 // loop_header_branch
      %12 = sbr.rel (%p10) target = $region8
    $region5: #{net_forward.6} parent=1 // loop_body
      %s14 = ssub.s32 %s9, 1
      %s15 = ssub.s32 %s9, 2
      %s16 = sadd.s32 %s9, 1
      %s17 = ssub.s32 %s9, %s16
      %p18 = scmp.eq.s32.totalorder %s17, 0
      %s20 = sadd.s32 %s19, 1
      %s21 = scalar_select %p18, %s19, %s20
      %p24 = pneg %p18
      %p25 = scmp.eq.s32.totalorder %s9, 2
      %p26 = por %p24, %p25
      %p27 = scmp.ne.s32.totalorder %s19, %s22
      %p28 = scmp.eq.s32.totalorder %s9, 0
      %p29 = por %p27, %p28
      %p30 = scmp.ne.s32.totalorder %s19, %s22
      %p31 = scmp.eq.s32.totalorder %s14, 2
      %p32 = por %p30, %p31
      %p33 = scmp.ne.s32.totalorder %s22, %s23
      %p34 = scmp.eq.s32.totalorder %s14, 0
      %p35 = por %p33, %p34
      %p36 = scmp.ne.s32.totalorder %s22, %s23
      %p37 = scmp.eq.s32.totalorder %s15, 2
      %p38 = por %p36, %p37
      %p40 = scmp.ne.s32.totalorder %s23, %s39
      %p41 = scmp.eq.s32.totalorder %s15, 0
      %p42 = por %p40, %p41
      %s44 = sadd.s32 %s43, 1
      %p47 = scmp.eq.s32.totalorder %s9, 2
      %p48 = scmp.ne.s32.totalorder %s43, %s45
      %p49 = scmp.eq.s32.totalorder %s9, 0
      %p50 = por %p48, %p49
      %p51 = scmp.ne.s32.totalorder %s43, %s45
      %p52 = scmp.eq.s32.totalorder %s14, 2
      %p53 = por %p51, %p52
      %p54 = scmp.ne.s32.totalorder %s45, %s46
      %p55 = scmp.eq.s32.totalorder %s14, 0
      %p56 = por %p54, %p55
      %p57 = scmp.ne.s32.totalorder %s45, %s46
      %p58 = scmp.eq.s32.totalorder %s15, 2
      %p59 = por %p57, %p58
      %p61 = scmp.ne.s32.totalorder %s46, %s60
      %p62 = scmp.eq.s32.totalorder %s15, 0
      %p63 = por %p61, %p62
      %s65 = sadd.s32 %s64, 1
      %p68 = scmp.eq.s32.totalorder %s9, 2
      %p69 = scmp.ne.s32.totalorder %s64, %s66
      %p70 = scmp.eq.s32.totalorder %s9, 0
      %p71 = por %p69, %p70
      %p72 = scmp.ne.s32.totalorder %s64, %s66
      %p73 = scmp.eq.s32.totalorder %s14, 2
      %p74 = por %p72, %p73
      %p75 = scmp.ne.s32.totalorder %s66, %s67
      %p76 = scmp.eq.s32.totalorder %s14, 0
      %p77 = por %p75, %p76
      %p78 = scmp.ne.s32.totalorder %s66, %s67
      %p79 = scmp.eq.s32.totalorder %s15, 2
      %p80 = por %p78, %p79
      %p82 = scmp.ne.s32.totalorder %s67, %s81
      %p83 = scmp.eq.s32.totalorder %s15, 0
      %p84 = por %p82, %p83
      %s85 = ssub.s32 %s9, %s16
      %p86 = scmp.eq.s32.totalorder %s85, 0
      %s88 = sadd.s32 %s87, 1
      %s89 = scalar_select %p86, %s87, %s88
      %p92 = pneg %p86
      %p93 = scmp.eq.s32.totalorder %s9, 2
      %p94 = por %p92, %p93
      %p95 = scmp.ne.s32.totalorder %s87, %s90
      %p96 = scmp.eq.s32.totalorder %s9, 0
      %p97 = por %p95, %p96
      %p98 = scmp.ne.s32.totalorder %s87, %s90
      %p99 = scmp.eq.s32.totalorder %s14, 2
      %p100 = por %p98, %p99
      %p101 = scmp.ne.s32.totalorder %s90, %s91
      %p102 = scmp.eq.s32.totalorder %s14, 0
      %p103 = por %p101, %p102
      %p104 = scmp.ne.s32.totalorder %s90, %s91
      %p105 = scmp.eq.s32.totalorder %s15, 2
      %p106 = por %p104, %p105
      %p108 = scmp.ne.s32.totalorder %s91, %s107
      %p109 = scmp.eq.s32.totalorder %s15, 0
      %p110 = por %p108, %p109
      %p111 = scmp.le.s32.totalorder 1, %s9
      %p112 = scmp.lt.s32.totalorder %s9, 4
      %p113 = pnand %p111, %p112
      %p114 = pneg %p113
      // Predicated region
      $region9: #{net_forward.6} parent=5 // pred_check
        _
      $region10: #{net_forward.6} parent=5 // pred_check_branch
        %116 = sbr.rel (%p113) target = $region12
      $region11: #{net_forward.6} parent=5 // pred_region
        %s117 = ssub.s32 %s9, 1
        // Predicated region
        $region13: #{net_forward.6} parent=11 // pred_check
          %p118 = pneg %p56
        $region14: #{net_forward.6} parent=11 // pred_check_branch
          %120 = sbr.rel (%p118) target = $region16
        $region15: #{net_forward.6} parent=11 // pred_region
          _
        $region16: #{net_forward.6} parent=11 // pred_fallthru
          _
        // Predicated region
        $region17: #{net_forward.6} parent=11 // pred_check
          %p121 = pneg %p77
        $region18: #{net_forward.6} parent=11 // pred_check_branch
          %123 = sbr.rel (%p121) target = $region20
        $region19: #{net_forward.6} parent=11 // pred_region
          _
        $region20: #{net_forward.6} parent=11 // pred_fallthru
          _
      $region12: #{net_forward.6} parent=5 // pred_fallthru
        _
      %p124 = scmp.lt.s32.totalorder %s9, 3
      // Predicated region
      $region21: #{net_forward.6} parent=5 // pred_check
        %p125 = pneg %p124
      $region22: #{net_forward.6} parent=5 // pred_check_branch
        %127 = sbr.rel (%p125) target = $region24
      $region23: #{net_forward.6} parent=5 // pred_region
        // Predicated region
        $region25: #{net_forward.6} parent=23 // pred_check
          %p128 = pneg %p29
        $region26: #{net_forward.6} parent=23 // pred_check_branch
          %130 = sbr.rel (%p128) target = $region28
        $region27: #{net_forward.6} parent=23 // pred_region
          %s131 = smul.u32 64, %s9
          %s132 = ssub.s32 133, %s131
          %p133 = scmp.lt.s32.totalorder %s132, 64
          %s134 = scalar_select %p133, %s132, 64
          %s135 = smul.u32 64, %s134
          %p136 = scmp.lt.s32.totalorder %s131, 132
          %s137 = scalar_select %p136, %s131, 132
          %s138 = smul.addr %s137, 4
          %s139 = scalar_lea.vmem %s0, %s138
          %s140 = smul.u32 64, %s9
          %s141 = ssub.s32 133, %s140
          %p142 = scmp.lt.s32.totalorder %s141, 64
          %s143 = scalar_select %p142, %s141, 64
          %s144 = smul.u32 64, %s143
        $region28: #{net_forward.6} parent=23 // pred_fallthru
          _
      $region24: #{net_forward.6} parent=5 // pred_fallthru
        _
      %p145 = scmp.le.s32.totalorder 1, %s9
      %p146 = scmp.lt.s32.totalorder %s9, 4
      %p147 = pnand %p145, %p146
      %p148 = pneg %p147
      // Predicated region
      $region29: #{net_forward.6} parent=5 // pred_check
        _
      $region30: #{net_forward.6} parent=5 // pred_check_branch
        %150 = sbr.rel (%p147) target = $region32
      $region31: #{net_forward.6} parent=5 // pred_region
        %s151 = ssub.s32 %s9, 1
        %s152 = smul.u32 64, %s14
        %s153 = ssub.s32 133, %s152
        %p154 = scmp.lt.s32.totalorder %s153, 64
        %s155 = scalar_select %p154, %s153, 64
        %s156 = smul.u32 64, %s155
        %p157 = scmp.lt.s32.totalorder %s152, 132
        %s158 = scalar_select %p157, %s152, 132
        %s159 = smul.addr %s158, 4
        %s160 = scalar_lea.vmem %s0, %s159
        %p161 = pneg %p35
        %p162 = pneg %p32
        %p163 = pneg %p56
        %p164 = pneg %p53
        %p165 = pneg %p77
        %p166 = pneg %p74
        %p167 = pneg %p103
        %p168 = pneg %p100
        %s169 = sand.u32 %s90, 1
        %s170 = sand.u32 %s90, 1
        %s171 = smul.addr %s170, 256
        %s172 = scalar_lea.vmem [#allocation2], %s171
        %s173 = smul.u32 64, %s14
        %s174 = ssub.s32 133, %s173
        %p175 = scmp.lt.s32.totalorder %s174, 64
        %s176 = scalar_select %p175, %s174, 64
        %s177 = smul.u32 64, %s176
        %p178 = scmp.lt.s32.totalorder %s173, 132
        %s179 = scalar_select %p178, %s173, 132
        %s180 = smul.addr %s179, 4
        %s181 = scalar_lea.vmem %s0, %s180
        %s182 = smul.u32 64, %s14
        %s183 = ssub.s32 133, %s182
        %p184 = scmp.lt.s32.totalorder %s183, 64
        %s185 = scalar_select %p184, %s183, 64
        %s186 = smul.u32 64, %s185
        %s187 = smul.u32 64, %s14
        %s188 = ssub.s32 133, %s187
        %p189 = scmp.lt.s32.totalorder %s188, 64
        %s190 = scalar_select %p189, %s188, 64
        %s191 = smul.u32 64, %s190
        %v193 = vld [vmem:[%s181] sm:$0xf]
        %v194 = vld [vmem:[%s181 + $0x4] sm:$0xf]
        %v195 = vld [vmem:[%s181 + $0x8] sm:$0xf]
        %v196 = vld [vmem:[%s181 + $0xc] sm:$0xf]
        %v197 = vld [vmem:[%s181 + $0x10] sm:$0xf]
        %v198 = vld [vmem:[%s181 + $0x14] sm:$0xf]
        %v199 = vld [vmem:[%s181 + $0x18] sm:$0xf]
        %v200 = vld [vmem:[%s181 + $0x1c] sm:$0xf]
        %v201 = vld [vmem:[%s181 + $0x20] sm:$0xf]
        %v202 = vld [vmem:[%s181 + $0x24] sm:$0xf]
        %v203 = vld [vmem:[%s181 + $0x28] sm:$0xf]
        %v204 = vld [vmem:[%s181 + $0x2c] sm:$0xf]
        %v205 = vld [vmem:[%s181 + $0x30] sm:$0xf]
        %v206 = vld [vmem:[%s181 + $0x34] sm:$0xf]
        %v207 = vld [vmem:[%s181 + $0x38] sm:$0xf]
        %v208 = vld [vmem:[%s181 + $0x3c] sm:$0xf]
        %v209 = vld [vmem:[%s181 + $0x40] sm:$0xf]
        %v210 = vld [vmem:[%s181 + $0x44] sm:$0xf]
        %v211 = vld [vmem:[%s181 + $0x48] sm:$0xf]
        %v212 = vld [vmem:[%s181 + $0x4c] sm:$0xf]
        %v213 = vld [vmem:[%s181 + $0x50] sm:$0xf]
        %v214 = vld [vmem:[%s181 + $0x54] sm:$0xf]
        %v215 = vld [vmem:[%s181 + $0x58] sm:$0xf]
        %v216 = vld [vmem:[%s181 + $0x5c] sm:$0xf]
        %v217 = vld [vmem:[%s181 + $0x60] sm:$0xf]
        %v218 = vld [vmem:[%s181 + $0x64] sm:$0xf]
        %v219 = vld [vmem:[%s181 + $0x68] sm:$0xf]
        %v220 = vld [vmem:[%s181 + $0x6c] sm:$0xf]
        %v221 = vld [vmem:[%s181 + $0x70] sm:$0xf]
        %v222 = vld [vmem:[%s181 + $0x74] sm:$0xf]
        %v223 = vld [vmem:[%s181 + $0x78] sm:$0xf]
        %v224 = vld [vmem:[%s181 + $0x7c] sm:$0xf]
        %v225 = vld [vmem:[%s181 + $0x80] sm:$0xf]
        %v226 = vld [vmem:[%s181 + $0x84] sm:$0xf]
        %v227 = vld [vmem:[%s181 + $0x88] sm:$0xf]
        %v228 = vld [vmem:[%s181 + $0x8c] sm:$0xf]
        %v229 = vld [vmem:[%s181 + $0x90] sm:$0xf]
        %v230 = vld [vmem:[%s181 + $0x94] sm:$0xf]
        %v231 = vld [vmem:[%s181 + $0x98] sm:$0xf]
        %v232 = vld [vmem:[%s181 + $0x9c] sm:$0xf]
        %v233 = vld [vmem:[%s181 + $0xa0] sm:$0xf]
        %v234 = vld [vmem:[%s181 + $0xa4] sm:$0xf]
        %v235 = vld [vmem:[%s181 + $0xa8] sm:$0xf]
        %v236 = vld [vmem:[%s181 + $0xac] sm:$0xf]
        %v237 = vld [vmem:[%s181 + $0xb0] sm:$0xf]
        %v238 = vld [vmem:[%s181 + $0xb4] sm:$0xf]
        %v239 = vld [vmem:[%s181 + $0xb8] sm:$0xf]
        %v240 = vld [vmem:[%s181 + $0xbc] sm:$0xf]
        %v241 = vld [vmem:[%s181 + $0xc0] sm:$0xf]
        %v242 = vld [vmem:[%s181 + $0xc4] sm:$0xf]
        %v243 = vld [vmem:[%s181 + $0xc8] sm:$0xf]
        %v244 = vld [vmem:[%s181 + $0xcc] sm:$0xf]
        %v245 = vld [vmem:[%s181 + $0xd0] sm:$0xf]
        %v246 = vld [vmem:[%s181 + $0xd4] sm:$0xf]
        %v247 = vld [vmem:[%s181 + $0xd8] sm:$0xf]
        %v248 = vld [vmem:[%s181 + $0xdc] sm:$0xf]
        %v249 = vld [vmem:[%s181 + $0xe0] sm:$0xf]
        %v250 = vld [vmem:[%s181 + $0xe4] sm:$0xf]
        %v251 = vld [vmem:[%s181 + $0xe8] sm:$0xf]
        %v252 = vld [vmem:[%s181 + $0xec] sm:$0xf]
        %v253 = vld [vmem:[%s181 + $0xf0] sm:$0xf]
        %v254 = vld [vmem:[%s181 + $0xf4] sm:$0xf]
        %v255 = vld [vmem:[%s181 + $0xf8] sm:$0xf]
        %v256 = vld [vmem:[%s181 + $0xfc] sm:$0xf]
        %v257 = vld [vmem:[%s1] sm:$0xf]
        %v258 = vld [vmem:[%s1 + $0x4] sm:$0xf]
        %v259 = vld [vmem:[%s1 + $0x8] sm:$0xf]
        %v260 = vld [vmem:[%s1 + $0xc] sm:$0xf]
        %v261 = vld [vmem:[%s1 + $0x10] sm:$0xf]
        %v262 = vld [vmem:[%s1 + $0x14] sm:$0xf]
        %v263 = vld [vmem:[%s1 + $0x18] sm:$0xf]
        %v264 = vld [vmem:[%s1 + $0x1c] sm:$0xf]
        %v265 = vld [vmem:[%s1 + $0x20] sm:$0xf]
        %v266 = vld [vmem:[%s2] sm:$0x1]
        %v268 = vlaneseq
        %v269 = vshrl.u32 %v268, 7
        %v270 = vsub.s32 0, %v269
        %v271 = vrot.slane %v266, %v270
        %v337 = vunpack.c.l.b16 %v193
        %v338 = vunpack.c.l.b16 %v194
        %v339 = vunpack.c.l.b16 %v195
        %v340 = vunpack.c.l.b16 %v196
        %v341 = vunpack.c.l.b16 %v197
        %v342 = vunpack.c.l.b16 %v198
        %v343 = vunpack.c.l.b16 %v199
        %v344 = vunpack.c.l.b16 %v200
        %v345 = vunpack.c.l.b16 %v201
        %v346 = vunpack.c.l.b16 %v202
        %v347 = vunpack.c.l.b16 %v203
        %v348 = vunpack.c.l.b16 %v204
        %v349 = vunpack.c.l.b16 %v205
        %v350 = vunpack.c.l.b16 %v206
        %v351 = vunpack.c.l.b16 %v207
        %v352 = vunpack.c.l.b16 %v208
        %v353 = vunpack.c.l.b16 %v209
        %v354 = vunpack.c.l.b16 %v210
        %v355 = vunpack.c.l.b16 %v211
        %v356 = vunpack.c.l.b16 %v212
        %v357 = vunpack.c.l.b16 %v213
        %v358 = vunpack.c.l.b16 %v214
        %v359 = vunpack.c.l.b16 %v215
        %v360 = vunpack.c.l.b16 %v216
        %v361 = vunpack.c.l.b16 %v217
        %v362 = vunpack.c.l.b16 %v218
        %v363 = vunpack.c.l.b16 %v219
        %v364 = vunpack.c.l.b16 %v220
        %v365 = vunpack.c.l.b16 %v221
        %v366 = vunpack.c.l.b16 %v222
        %v367 = vunpack.c.l.b16 %v223
        %v368 = vunpack.c.l.b16 %v224
        %v369 = vunpack.c.l.b16 %v225
        %v370 = vunpack.c.l.b16 %v226
        %v371 = vunpack.c.l.b16 %v227
        %v372 = vunpack.c.l.b16 %v228
        %v373 = vunpack.c.l.b16 %v229
        %v374 = vunpack.c.l.b16 %v230
        %v375 = vunpack.c.l.b16 %v231
        %v376 = vunpack.c.l.b16 %v232
        %v377 = vunpack.c.l.b16 %v233
        %v378 = vunpack.c.l.b16 %v234
        %v379 = vunpack.c.l.b16 %v235
        %v380 = vunpack.c.l.b16 %v236
        %v381 = vunpack.c.l.b16 %v237
        %v382 = vunpack.c.l.b16 %v238
        %v383 = vunpack.c.l.b16 %v239
        %v384 = vunpack.c.l.b16 %v240
        %v385 = vunpack.c.l.b16 %v241
        %v386 = vunpack.c.l.b16 %v242
        %v387 = vunpack.c.l.b16 %v243
        %v388 = vunpack.c.l.b16 %v244
        %v389 = vunpack.c.l.b16 %v245
        %v390 = vunpack.c.l.b16 %v246
        %v391 = vunpack.c.l.b16 %v247
        %v392 = vunpack.c.l.b16 %v248
        %v393 = vunpack.c.l.b16 %v249
        %v394 = vunpack.c.l.b16 %v250
        %v395 = vunpack.c.l.b16 %v251
        %v396 = vunpack.c.l.b16 %v252
        %v397 = vunpack.c.l.b16 %v253
        %v398 = vunpack.c.l.b16 %v254
        %v399 = vunpack.c.l.b16 %v255
        %v400 = vunpack.c.l.b16 %v256
        %v401 = vpack.c.b16 %v338, %v337
        %v402 = vpack.c.b16 %v340, %v339
        %v403 = vpack.c.b16 %v342, %v341
        %v404 = vpack.c.b16 %v344, %v343
        %v405 = vpack.c.b16 %v346, %v345
        %v406 = vpack.c.b16 %v348, %v347
        %v407 = vpack.c.b16 %v350, %v349
        %v408 = vpack.c.b16 %v352, %v351
        %v409 = vpack.c.b16 %v354, %v353
        %v410 = vpack.c.b16 %v356, %v355
        %v411 = vpack.c.b16 %v358, %v357
        %v412 = vpack.c.b16 %v360, %v359
        %v413 = vpack.c.b16 %v362, %v361
        %v414 = vpack.c.b16 %v364, %v363
        %v415 = vpack.c.b16 %v366, %v365
        %v416 = vpack.c.b16 %v368, %v367
        %v417 = vpack.c.b16 %v370, %v369
        %v418 = vpack.c.b16 %v372, %v371
        %v419 = vpack.c.b16 %v374, %v373
        %v420 = vpack.c.b16 %v376, %v375
        %v421 = vpack.c.b16 %v378, %v377
        %v422 = vpack.c.b16 %v380, %v379
        %v423 = vpack.c.b16 %v382, %v381
        %v424 = vpack.c.b16 %v384, %v383
        %v425 = vpack.c.b16 %v386, %v385
        %v426 = vpack.c.b16 %v388, %v387
        %v427 = vpack.c.b16 %v390, %v389
        %v428 = vpack.c.b16 %v392, %v391
        %v429 = vpack.c.b16 %v394, %v393
        %v430 = vpack.c.b16 %v396, %v395
        %v431 = vpack.c.b16 %v398, %v397
        %v432 = vpack.c.b16 %v400, %v399
        %v442 = vunpack.c.l.b16 %v257
        %v443 = vunpack.c.l.b16 %v258
        %v444 = vunpack.c.l.b16 %v259
        %v445 = vunpack.c.l.b16 %v260
        %v446 = vunpack.c.l.b16 %v261
        %v447 = vunpack.c.l.b16 %v262
        %v448 = vunpack.c.l.b16 %v263
        %v449 = vunpack.c.l.b16 %v264
        %v450 = vunpack.c.l.b16 %v265
        %v451 = vpack.c.b16 %v443, %v442
        %v452 = vpack.c.b16 %v445, %v444
        %v453 = vpack.c.b16 %v447, %v446
        %v454 = vpack.c.b16 %v449, %v448
        %v455 = vpack.c.b16 %v450, %v450
        %vm460 = vcmask 588800
        %v462 = vsel %vm460, %v401, 0
        %v465 = vsel %vm460, %v402, 0
        %v468 = vsel %vm460, %v403, 0
        %v471 = vsel %vm460, %v404, 0
        %v474 = vsel %vm460, %v405, 0
        %v477 = vsel %vm460, %v406, 0
        %v480 = vsel %vm460, %v407, 0
        %v483 = vsel %vm460, %v408, 0
        %v486 = vsel %vm460, %v409, 0
        %v489 = vsel %vm460, %v410, 0
        %v492 = vsel %vm460, %v411, 0
        %v495 = vsel %vm460, %v412, 0
        %v498 = vsel %vm460, %v413, 0
        %v501 = vsel %vm460, %v414, 0
        %v504 = vsel %vm460, %v415, 0
        %v507 = vsel %vm460, %v416, 0
        %v510 = vsel %vm460, %v417, 0
        %v513 = vsel %vm460, %v418, 0
        %v516 = vsel %vm460, %v419, 0
        %v519 = vsel %vm460, %v420, 0
        %v522 = vsel %vm460, %v421, 0
        %v525 = vsel %vm460, %v422, 0
        %v528 = vsel %vm460, %v423, 0
        %v531 = vsel %vm460, %v424, 0
        %v534 = vsel %vm460, %v425, 0
        %v537 = vsel %vm460, %v426, 0
        %v540 = vsel %vm460, %v427, 0
        %v543 = vsel %vm460, %v428, 0
        %v546 = vsel %vm460, %v429, 0
        %v549 = vsel %vm460, %v430, 0
        %v552 = vsel %vm460, %v431, 0
        %v555 = vsel %vm460, %v432, 0
        %vm557 = vcmask 1043456
        %v559 = vsel %vm557, %v455, 0
        %561 = vmatprep.subr.bf16.mxu0 0
        %562 = vmatpush1.bf16.msra.mxu0 %v451
        %563 = vmatprep.subr.bf16.mxu0 0
        %564 = vmatpush1.bf16.msra.mxu0 %v452
        %565 = vmatprep.subr.bf16.mxu0 0
        %566 = vmatpush1.bf16.msra.mxu0 %v453
        %567 = vmatprep.subr.bf16.mxu0 0
        %568 = vmatpush1.bf16.msra.mxu0 %v454
        %569 = vmatprep.subr.bf16.mxu0 0
        %570 = vmatpush1.bf16.msra.mxu0 %v559
        %571 = vmatprep.subr.bf16.mxu0 0
        %572 = vmatpush1.bf16.msra.mxu0 0
        %573 = vmatprep.subr.bf16.mxu0 0
        %574 = vmatpush1.bf16.msra.mxu0 0
        %575 = vmatprep.subr.bf16.mxu0 0
        %576 = vmatpush1.bf16.msra.mxu0 0
        %577 = vmatprep.subr.bf16.mxu0 0
        %578 = vmatpush1.bf16.msra.mxu0 0
        %579 = vmatprep.subr.bf16.mxu0 0
        %580 = vmatpush1.bf16.msra.mxu0 0
        %581 = vmatprep.subr.bf16.mxu0 0
        %582 = vmatpush1.bf16.msra.mxu0 0
        %583 = vmatprep.subr.bf16.mxu0 0
        %584 = vmatpush1.bf16.msra.mxu0 0
        %585 = vmatprep.subr.bf16.mxu0 0
        %586 = vmatpush1.bf16.msra.mxu0 0
        %587 = vmatprep.subr.bf16.mxu0 0
        %588 = vmatpush1.bf16.msra.mxu0 0
        %589 = vmatprep.subr.bf16.mxu0 0
        %590 = vmatpush1.bf16.msra.mxu0 0
        %591 = vmatprep.subr.bf16.mxu0 0
        %592 = vmatpush1.bf16.msra.mxu0 0
        %593 = vmatprep.mubr.bf16.mxu0 0
        %594 = vmatmul.mubr.bf16.gmra.mrb[0].mxu0 %v462
        %v595 = vpop.f32.mrb[0].mxu0
        %v596 = vadd.f32 %v271, %v595
        %v597 = vpop.f32.mrb[0].mxu0
        %v598 = vpop.f32.mrb[0].mxu0
        %v599 = vadd.f32 %v271, %v598
        %v600 = vpop.f32.mrb[0].mxu0
        %601 = vmatprep.mubr.bf16.mxu0 0
        %602 = vmatmul.mubr.bf16.gmra.mrb[0].mxu0 %v465
        %v603 = vpop.f32.mrb[0].mxu0
        %v604 = vadd.f32 %v271, %v603
        %v605 = vpop.f32.mrb[0].mxu0
        %v606 = vpop.f32.mrb[0].mxu0
        %v607 = vadd.f32 %v271, %v606
        %v608 = vpop.f32.mrb[0].mxu0
        %609 = vmatprep.mubr.bf16.mxu0 0
        %610 = vmatmul.mubr.bf16.gmra.mrb[0].mxu0 %v468
        %v611 = vpop.f32.mrb[0].mxu0
        %v612 = vadd.f32 %v271, %v611
        %v613 = vpop.f32.mrb[0].mxu0
        %v614 = vpop.f32.mrb[0].mxu0
        %v615 = vadd.f32 %v271, %v614
        %v616 = vpop.f32.mrb[0].mxu0
        %617 = vmatprep.mubr.bf16.mxu0 0
        %618 = vmatmul.mubr.bf16.gmra.mrb[0].mxu0 %v471
        %v619 = vpop.f32.mrb[0].mxu0
        %v620 = vadd.f32 %v271, %v619
        %v621 = vpop.f32.mrb[0].mxu0
        %v622 = vpop.f32.mrb[0].mxu0
        %v623 = vadd.f32 %v271, %v622
        %v624 = vpop.f32.mrb[0].mxu0
        %625 = vmatprep.mubr.bf16.mxu0 0
        %626 = vmatmul.mubr.bf16.gmra.mrb[0].mxu0 %v474
        %v627 = vpop.f32.mrb[0].mxu0
        %v628 = vadd.f32 %v271, %v627
        %v629 = vpop.f32.mrb[0].mxu0
        %v630 = vpop.f32.mrb[0].mxu0
        %v631 = vadd.f32 %v271, %v630
        %v632 = vpop.f32.mrb[0].mxu0
        %633 = vmatprep.mubr.bf16.mxu0 0
        %634 = vmatmul.mubr.bf16.gmra.mrb[0].mxu0 %v477
        %v635 = vpop.f32.mrb[0].mxu0
        %v636 = vadd.f32 %v271, %v635
        %v637 = vpop.f32.mrb[0].mxu0
        %v638 = vpop.f32.mrb[0].mxu0
        %v639 = vadd.f32 %v271, %v638
        %v640 = vpop.f32.mrb[0].mxu0
        %641 = vmatprep.mubr.bf16.mxu0 0
        %642 = vmatmul.mubr.bf16.gmra.mrb[0].mxu0 %v480
        %v643 = vpop.f32.mrb[0].mxu0
        %v644 = vadd.f32 %v271, %v643
        %v645 = vpop.f32.mrb[0].mxu0
        %v646 = vpop.f32.mrb[0].mxu0
        %v647 = vadd.f32 %v271, %v646
        %v648 = vpop.f32.mrb[0].mxu0
        %649 = vmatprep.mubr.bf16.mxu0 0
        %650 = vmatmul.mubr.bf16.gmra.mrb[0].mxu0 %v483
        %v651 = vpop.f32.mrb[0].mxu0
        %v652 = vadd.f32 %v271, %v651
        %v653 = vpop.f32.mrb[0].mxu0
        %v654 = vpop.f32.mrb[0].mxu0
        %v655 = vadd.f32 %v271, %v654
        %v656 = vpop.f32.mrb[0].mxu0
        %657 = vmatprep.mubr.bf16.mxu0 0
        %658 = vmatmul.mubr.bf16.gmra.mrb[0].mxu0 %v486
        %v659 = vpop.f32.mrb[0].mxu0
        %v660 = vadd.f32 %v271, %v659
        %v661 = vpop.f32.mrb[0].mxu0
        %v662 = vpop.f32.mrb[0].mxu0
        %v663 = vadd.f32 %v271, %v662
        %v664 = vpop.f32.mrb[0].mxu0
        %665 = vmatprep.mubr.bf16.mxu0 0
        %666 = vmatmul.mubr.bf16.gmra.mrb[0].mxu0 %v489
        %v667 = vpop.f32.mrb[0].mxu0
        %v668 = vadd.f32 %v271, %v667
        %v669 = vpop.f32.mrb[0].mxu0
        %v670 = vpop.f32.mrb[0].mxu0
        %v671 = vadd.f32 %v271, %v670
        %v672 = vpop.f32.mrb[0].mxu0
        %673 = vmatprep.mubr.bf16.mxu0 0
        %674 = vmatmul.mubr.bf16.gmra.mrb[0].mxu0 %v492
        %v675 = vpop.f32.mrb[0].mxu0
        %v676 = vadd.f32 %v271, %v675
        %v677 = vpop.f32.mrb[0].mxu0
        %v678 = vpop.f32.mrb[0].mxu0
        %v679 = vadd.f32 %v271, %v678
        %v680 = vpop.f32.mrb[0].mxu0
        %681 = vmatprep.mubr.bf16.mxu0 0
        %682 = vmatmul.mubr.bf16.gmra.mrb[0].mxu0 %v495
        %v683 = vpop.f32.mrb[0].mxu0
        %v684 = vadd.f32 %v271, %v683
        %v685 = vpop.f32.mrb[0].mxu0
        %v686 = vpop.f32.mrb[0].mxu0
        %v687 = vadd.f32 %v271, %v686
        %v688 = vpop.f32.mrb[0].mxu0
        %689 = vmatprep.mubr.bf16.mxu0 0
        %690 = vmatmul.mubr.bf16.gmra.mrb[0].mxu0 %v498
        %v691 = vpop.f32.mrb[0].mxu0
        %v692 = vadd.f32 %v271, %v691
        %v693 = vpop.f32.mrb[0].mxu0
        %v694 = vpop.f32.mrb[0].mxu0
        %v695 = vadd.f32 %v271, %v694
        %v696 = vpop.f32.mrb[0].mxu0
        %697 = vmatprep.mubr.bf16.mxu0 0
        %698 = vmatmul.mubr.bf16.gmra.mrb[0].mxu0 %v501
        %v699 = vpop.f32.mrb[0].mxu0
        %v700 = vadd.f32 %v271, %v699
        %v701 = vpop.f32.mrb[0].mxu0
        %v702 = vpop.f32.mrb[0].mxu0
        %v703 = vadd.f32 %v271, %v702
        %v704 = vpop.f32.mrb[0].mxu0
        %705 = vmatprep.mubr.bf16.mxu0 0
        %706 = vmatmul.mubr.bf16.gmra.mrb[0].mxu0 %v504
        %v707 = vpop.f32.mrb[0].mxu0
        %v708 = vadd.f32 %v271, %v707
        %v709 = vpop.f32.mrb[0].mxu0
        %v710 = vpop.f32.mrb[0].mxu0
        %v711 = vadd.f32 %v271, %v710
        %v712 = vpop.f32.mrb[0].mxu0
        %713 = vmatprep.mubr.bf16.mxu0 0
        %714 = vmatmul.mubr.bf16.gmra.mrb[0].mxu0 %v507
        %v715 = vpop.f32.mrb[0].mxu0
        %v716 = vadd.f32 %v271, %v715
        %v717 = vpop.f32.mrb[0].mxu0
        %v718 = vpop.f32.mrb[0].mxu0
        %v719 = vadd.f32 %v271, %v718
        %v720 = vpop.f32.mrb[0].mxu0
        %721 = vmatprep.mubr.bf16.mxu0 0
        %722 = vmatmul.mubr.bf16.gmra.mrb[0].mxu0 %v510
        %v723 = vpop.f32.mrb[0].mxu0
        %v724 = vadd.f32 %v271, %v723
        %v725 = vpop.f32.mrb[0].mxu0
        %v726 = vpop.f32.mrb[0].mxu0
        %v727 = vadd.f32 %v271, %v726
        %v728 = vpop.f32.mrb[0].mxu0
        %729 = vmatprep.mubr.bf16.mxu0 0
        %730 = vmatmul.mubr.bf16.gmra.mrb[0].mxu0 %v513
        %v731 = vpop.f32.mrb[0].mxu0
        %v732 = vadd.f32 %v271, %v731
        %v733 = vpop.f32.mrb[0].mxu0
        %v734 = vpop.f32.mrb[0].mxu0
        %v735 = vadd.f32 %v271, %v734
        %v736 = vpop.f32.mrb[0].mxu0
        %737 = vmatprep.mubr.bf16.mxu0 0
        %738 = vmatmul.mubr.bf16.gmra.mrb[0].mxu0 %v516
        %v739 = vpop.f32.mrb[0].mxu0
        %v740 = vadd.f32 %v271, %v739
        %v741 = vpop.f32.mrb[0].mxu0
        %v742 = vpop.f32.mrb[0].mxu0
        %v743 = vadd.f32 %v271, %v742
        %v744 = vpop.f32.mrb[0].mxu0
        %745 = vmatprep.mubr.bf16.mxu0 0
        %746 = vmatmul.mubr.bf16.gmra.mrb[0].mxu0 %v519
        %v747 = vpop.f32.mrb[0].mxu0
        %v748 = vadd.f32 %v271, %v747
        %v749 = vpop.f32.mrb[0].mxu0
        %v750 = vpop.f32.mrb[0].mxu0
        %v751 = vadd.f32 %v271, %v750
        %v752 = vpop.f32.mrb[0].mxu0
        %753 = vmatprep.mubr.bf16.mxu0 0
        %754 = vmatmul.mubr.bf16.gmra.mrb[0].mxu0 %v522
        %v755 = vpop.f32.mrb[0].mxu0
        %v756 = vadd.f32 %v271, %v755
        %v757 = vpop.f32.mrb[0].mxu0
        %v758 = vpop.f32.mrb[0].mxu0
        %v759 = vadd.f32 %v271, %v758
        %v760 = vpop.f32.mrb[0].mxu0
        %761 = vmatprep.mubr.bf16.mxu0 0
        %762 = vmatmul.mubr.bf16.gmra.mrb[0].mxu0 %v525
        %v763 = vpop.f32.mrb[0].mxu0
        %v764 = vadd.f32 %v271, %v763
        %v765 = vpop.f32.mrb[0].mxu0
        %v766 = vpop.f32.mrb[0].mxu0
        %v767 = vadd.f32 %v271, %v766
        %v768 = vpop.f32.mrb[0].mxu0
        %769 = vmatprep.mubr.bf16.mxu0 0
        %770 = vmatmul.mubr.bf16.gmra.mrb[0].mxu0 %v528
        %v771 = vpop.f32.mrb[0].mxu0
        %v772 = vadd.f32 %v271, %v771
        %v773 = vpop.f32.mrb[0].mxu0
        %v774 = vpop.f32.mrb[0].mxu0
        %v775 = vadd.f32 %v271, %v774
        %v776 = vpop.f32.mrb[0].mxu0
        %777 = vmatprep.mubr.bf16.mxu0 0
        %778 = vmatmul.mubr.bf16.gmra.mrb[0].mxu0 %v531
        %v779 = vpop.f32.mrb[0].mxu0
        %v780 = vadd.f32 %v271, %v779
        %v781 = vpop.f32.mrb[0].mxu0
        %v782 = vpop.f32.mrb[0].mxu0
        %v783 = vadd.f32 %v271, %v782
        %v784 = vpop.f32.mrb[0].mxu0
        %785 = vmatprep.mubr.bf16.mxu0 0
        %786 = vmatmul.mubr.bf16.gmra.mrb[0].mxu0 %v534
        %v787 = vpop.f32.mrb[0].mxu0
        %v788 = vadd.f32 %v271, %v787
        %v789 = vpop.f32.mrb[0].mxu0
        %v790 = vpop.f32.mrb[0].mxu0
        %v791 = vadd.f32 %v271, %v790
        %v792 = vpop.f32.mrb[0].mxu0
        %793 = vmatprep.mubr.bf16.mxu0 0
        %794 = vmatmul.mubr.bf16.gmra.mrb[0].mxu0 %v537
        %v795 = vpop.f32.mrb[0].mxu0
        %v796 = vadd.f32 %v271, %v795
        %v797 = vpop.f32.mrb[0].mxu0
        %v798 = vpop.f32.mrb[0].mxu0
        %v799 = vadd.f32 %v271, %v798
        %v800 = vpop.f32.mrb[0].mxu0
        %801 = vmatprep.mubr.bf16.mxu0 0
        %802 = vmatmul.mubr.bf16.gmra.mrb[0].mxu0 %v540
        %v803 = vpop.f32.mrb[0].mxu0
        %v804 = vadd.f32 %v271, %v803
        %v805 = vpop.f32.mrb[0].mxu0
        %v806 = vpop.f32.mrb[0].mxu0
        %v807 = vadd.f32 %v271, %v806
        %v808 = vpop.f32.mrb[0].mxu0
        %809 = vmatprep.mubr.bf16.mxu0 0
        %810 = vmatmul.mubr.bf16.gmra.mrb[0].mxu0 %v543
        %v811 = vpop.f32.mrb[0].mxu0
        %v812 = vadd.f32 %v271, %v811
        %v813 = vpop.f32.mrb[0].mxu0
        %v814 = vpop.f32.mrb[0].mxu0
        %v815 = vadd.f32 %v271, %v814
        %v816 = vpop.f32.mrb[0].mxu0
        %817 = vmatprep.mubr.bf16.mxu0 0
        %818 = vmatmul.mubr.bf16.gmra.mrb[0].mxu0 %v546
        %v819 = vpop.f32.mrb[0].mxu0
        %v820 = vadd.f32 %v271, %v819
        %v821 = vpop.f32.mrb[0].mxu0
        %v822 = vpop.f32.mrb[0].mxu0
        %v823 = vadd.f32 %v271, %v822
        %v824 = vpop.f32.mrb[0].mxu0
        %825 = vmatprep.mubr.bf16.mxu0 0
        %826 = vmatmul.mubr.bf16.gmra.mrb[0].mxu0 %v549
        %v827 = vpop.f32.mrb[0].mxu0
        %v828 = vadd.f32 %v271, %v827
        %v829 = vpop.f32.mrb[0].mxu0
        %v830 = vpop.f32.mrb[0].mxu0
        %v831 = vadd.f32 %v271, %v830
        %v832 = vpop.f32.mrb[0].mxu0
        %833 = vmatprep.mubr.bf16.mxu0 0
        %834 = vmatmul.mubr.bf16.gmra.mrb[0].mxu0 %v552
        %v835 = vpop.f32.mrb[0].mxu0
        %v836 = vadd.f32 %v271, %v835
        %v837 = vpop.f32.mrb[0].mxu0
        %v838 = vpop.f32.mrb[0].mxu0
        %v839 = vadd.f32 %v271, %v838
        %v840 = vpop.f32.mrb[0].mxu0
        %841 = vmatprep.mubr.bf16.mxu0 0
        %842 = vmatmul.mubr.bf16.gmra.mrb[0].mxu0 %v555
        %v843 = vpop.f32.mrb[0].mxu0
        %v844 = vadd.f32 %v271, %v843
        %v845 = vpop.f32.mrb[0].mxu0
        %v846 = vpop.f32.mrb[0].mxu0
        %v847 = vadd.f32 %v271, %v846
        %v848 = vpop.f32.mrb[0].mxu0
        %849 = vdwg.mxu0
        %v850 = vmax.f32 %v596, 0.0
        %v851 = vmax.f32 %v599, 0.0
        %v852 = vmax.f32 %v604, 0.0
        %v853 = vmax.f32 %v607, 0.0
        %v854 = vmax.f32 %v612, 0.0
        %v855 = vmax.f32 %v615, 0.0
        %v856 = vmax.f32 %v620, 0.0
        %v857 = vmax.f32 %v623, 0.0
        %v858 = vmax.f32 %v628, 0.0
        %v859 = vmax.f32 %v631, 0.0
        %v860 = vmax.f32 %v636, 0.0
        %v861 = vmax.f32 %v639, 0.0
        %v862 = vmax.f32 %v644, 0.0
        %v863 = vmax.f32 %v647, 0.0
        %v864 = vmax.f32 %v652, 0.0
        %v865 = vmax.f32 %v655, 0.0
        %v866 = vmax.f32 %v660, 0.0
        %v867 = vmax.f32 %v663, 0.0
        %v868 = vmax.f32 %v668, 0.0
        %v869 = vmax.f32 %v671, 0.0
        %v870 = vmax.f32 %v676, 0.0
        %v871 = vmax.f32 %v679, 0.0
        %v872 = vmax.f32 %v684, 0.0
        %v873 = vmax.f32 %v687, 0.0
        %v874 = vmax.f32 %v692, 0.0
        %v875 = vmax.f32 %v695, 0.0
        %v876 = vmax.f32 %v700, 0.0
        %v877 = vmax.f32 %v703, 0.0
        %v878 = vmax.f32 %v708, 0.0
        %v879 = vmax.f32 %v711, 0.0
        %v880 = vmax.f32 %v716, 0.0
        %v881 = vmax.f32 %v719, 0.0
        %v882 = vmax.f32 %v724, 0.0
        %v883 = vmax.f32 %v727, 0.0
        %v884 = vmax.f32 %v732, 0.0
        %v885 = vmax.f32 %v735, 0.0
        %v886 = vmax.f32 %v740, 0.0
        %v887 = vmax.f32 %v743, 0.0
        %v888 = vmax.f32 %v748, 0.0
        %v889 = vmax.f32 %v751, 0.0
        %v890 = vmax.f32 %v756, 0.0
        %v891 = vmax.f32 %v759, 0.0
        %v892 = vmax.f32 %v764, 0.0
        %v893 = vmax.f32 %v767, 0.0
        %v894 = vmax.f32 %v772, 0.0
        %v895 = vmax.f32 %v775, 0.0
        %v896 = vmax.f32 %v780, 0.0
        %v897 = vmax.f32 %v783, 0.0
        %v898 = vmax.f32 %v788, 0.0
        %v899 = vmax.f32 %v791, 0.0
        %v900 = vmax.f32 %v796, 0.0
        %v901 = vmax.f32 %v799, 0.0
        %v902 = vmax.f32 %v804, 0.0
        %v903 = vmax.f32 %v807, 0.0
        %v904 = vmax.f32 %v812, 0.0
        %v905 = vmax.f32 %v815, 0.0
        %v906 = vmax.f32 %v820, 0.0
        %v907 = vmax.f32 %v823, 0.0
        %v908 = vmax.f32 %v828, 0.0
        %v909 = vmax.f32 %v831, 0.0
        %v910 = vmax.f32 %v836, 0.0
        %v911 = vmax.f32 %v839, 0.0
        %v912 = vmax.f32 %v844, 0.0
        %v913 = vmax.f32 %v847, 0.0
        %v914 = vpack.c.bf16 %v851, %v850
        %v915 = vpack.c.bf16 %v853, %v852
        %v916 = vpack.c.bf16 %v855, %v854
        %v917 = vpack.c.bf16 %v857, %v856
        %v918 = vpack.c.bf16 %v859, %v858
        %v919 = vpack.c.bf16 %v861, %v860
        %v920 = vpack.c.bf16 %v863, %v862
        %v921 = vpack.c.bf16 %v865, %v864
        %v922 = vpack.c.bf16 %v867, %v866
        %v923 = vpack.c.bf16 %v869, %v868
        %v924 = vpack.c.bf16 %v871, %v870
        %v925 = vpack.c.bf16 %v873, %v872
        %v926 = vpack.c.bf16 %v875, %v874
        %v927 = vpack.c.bf16 %v877, %v876
        %v928 = vpack.c.bf16 %v879, %v878
        %v929 = vpack.c.bf16 %v881, %v880
        %v930 = vpack.c.bf16 %v883, %v882
        %v931 = vpack.c.bf16 %v885, %v884
        %v932 = vpack.c.bf16 %v887, %v886
        %v933 = vpack.c.bf16 %v889, %v888
        %v934 = vpack.c.bf16 %v891, %v890
        %v935 = vpack.c.bf16 %v893, %v892
        %v936 = vpack.c.bf16 %v895, %v894
        %v937 = vpack.c.bf16 %v897, %v896
        %v938 = vpack.c.bf16 %v899, %v898
        %v939 = vpack.c.bf16 %v901, %v900
        %v940 = vpack.c.bf16 %v903, %v902
        %v941 = vpack.c.bf16 %v905, %v904
        %v942 = vpack.c.bf16 %v907, %v906
        %v943 = vpack.c.bf16 %v909, %v908
        %v944 = vpack.c.bf16 %v911, %v910
        %v945 = vpack.c.bf16 %v913, %v912
        %v978 = vunpack.c.l.b16 %v914
        %v979 = vunpack.c.h.b16 %v914
        %v980 = vunpack.c.l.b16 %v915
        %v981 = vunpack.c.h.b16 %v915
        %v982 = vunpack.c.l.b16 %v916
        %v983 = vunpack.c.h.b16 %v916
        %v984 = vunpack.c.l.b16 %v917
        %v985 = vunpack.c.h.b16 %v917
        %v986 = vunpack.c.l.b16 %v918
        %v987 = vunpack.c.h.b16 %v918
        %v988 = vunpack.c.l.b16 %v919
        %v989 = vunpack.c.h.b16 %v919
        %v990 = vunpack.c.l.b16 %v920
        %v991 = vunpack.c.h.b16 %v920
        %v992 = vunpack.c.l.b16 %v921
        %v993 = vunpack.c.h.b16 %v921
        %v994 = vunpack.c.l.b16 %v922
        %v995 = vunpack.c.h.b16 %v922
        %v996 = vunpack.c.l.b16 %v923
        %v997 = vunpack.c.h.b16 %v923
        %v998 = vunpack.c.l.b16 %v924
        %v999 = vunpack.c.h.b16 %v924
        %v1000 = vunpack.c.l.b16 %v925
        %v1001 = vunpack.c.h.b16 %v925
        %v1002 = vunpack.c.l.b16 %v926
        %v1003 = vunpack.c.h.b16 %v926
        %v1004 = vunpack.c.l.b16 %v927
        %v1005 = vunpack.c.h.b16 %v927
        %v1006 = vunpack.c.l.b16 %v928
        %v1007 = vunpack.c.h.b16 %v928
        %v1008 = vunpack.c.l.b16 %v929
        %v1009 = vunpack.c.h.b16 %v929
        %v1010 = vunpack.c.l.b16 %v930
        %v1011 = vunpack.c.h.b16 %v930
        %v1012 = vunpack.c.l.b16 %v931
        %v1013 = vunpack.c.h.b16 %v931
        %v1014 = vunpack.c.l.b16 %v932
        %v1015 = vunpack.c.h.b16 %v932
        %v1016 = vunpack.c.l.b16 %v933
        %v1017 = vunpack.c.h.b16 %v933
        %v1018 = vunpack.c.l.b16 %v934
        %v1019 = vunpack.c.h.b16 %v934
        %v1020 = vunpack.c.l.b16 %v935
        %v1021 = vunpack.c.h.b16 %v935
        %v1022 = vunpack.c.l.b16 %v936
        %v1023 = vunpack.c.h.b16 %v936
        %v1024 = vunpack.c.l.b16 %v937
        %v1025 = vunpack.c.h.b16 %v937
        %v1026 = vunpack.c.l.b16 %v938
        %v1027 = vunpack.c.h.b16 %v938
        %v1028 = vunpack.c.l.b16 %v939
        %v1029 = vunpack.c.h.b16 %v939
        %v1030 = vunpack.c.l.b16 %v940
        %v1031 = vunpack.c.h.b16 %v940
        %v1032 = vunpack.c.l.b16 %v941
        %v1033 = vunpack.c.h.b16 %v941
        %v1034 = vunpack.c.l.b16 %v942
        %v1035 = vunpack.c.h.b16 %v942
        %v1036 = vunpack.c.l.b16 %v943
        %v1037 = vunpack.c.h.b16 %v943
        %v1038 = vunpack.c.l.b16 %v944
        %v1039 = vunpack.c.h.b16 %v944
        %v1040 = vunpack.c.l.b16 %v945
        %v1041 = vunpack.c.h.b16 %v945
        %v1042 = vpack.c.b16 %v978, %v978
        %v1043 = vpack.c.b16 %v979, %v979
        %v1044 = vpack.c.b16 %v980, %v980
        %v1045 = vpack.c.b16 %v981, %v981
        %v1046 = vpack.c.b16 %v982, %v982
        %v1047 = vpack.c.b16 %v983, %v983
        %v1048 = vpack.c.b16 %v984, %v984
        %v1049 = vpack.c.b16 %v985, %v985
        %v1050 = vpack.c.b16 %v986, %v986
        %v1051 = vpack.c.b16 %v987, %v987
        %v1052 = vpack.c.b16 %v988, %v988
        %v1053 = vpack.c.b16 %v989, %v989
        %v1054 = vpack.c.b16 %v990, %v990
        %v1055 = vpack.c.b16 %v991, %v991
        %v1056 = vpack.c.b16 %v992, %v992
        %v1057 = vpack.c.b16 %v993, %v993
        %v1058 = vpack.c.b16 %v994, %v994
        %v1059 = vpack.c.b16 %v995, %v995
        %v1060 = vpack.c.b16 %v996, %v996
        %v1061 = vpack.c.b16 %v997, %v997
        %v1062 = vpack.c.b16 %v998, %v998
        %v1063 = vpack.c.b16 %v999, %v999
        %v1064 = vpack.c.b16 %v1000, %v1000
        %v1065 = vpack.c.b16 %v1001, %v1001
        %v1066 = vpack.c.b16 %v1002, %v1002
        %v1067 = vpack.c.b16 %v1003, %v1003
        %v1068 = vpack.c.b16 %v1004, %v1004
        %v1069 = vpack.c.b16 %v1005, %v1005
        %v1070 = vpack.c.b16 %v1006, %v1006
        %v1071 = vpack.c.b16 %v1007, %v1007
        %v1072 = vpack.c.b16 %v1008, %v1008
        %v1073 = vpack.c.b16 %v1009, %v1009
        %v1074 = vpack.c.b16 %v1010, %v1010
        %v1075 = vpack.c.b16 %v1011, %v1011
        %v1076 = vpack.c.b16 %v1012, %v1012
        %v1077 = vpack.c.b16 %v1013, %v1013
        %v1078 = vpack.c.b16 %v1014, %v1014
        %v1079 = vpack.c.b16 %v1015, %v1015
        %v1080 = vpack.c.b16 %v1016, %v1016
        %v1081 = vpack.c.b16 %v1017, %v1017
        %v1082 = vpack.c.b16 %v1018, %v1018
        %v1083 = vpack.c.b16 %v1019, %v1019
        %v1084 = vpack.c.b16 %v1020, %v1020
        %v1085 = vpack.c.b16 %v1021, %v1021
        %v1086 = vpack.c.b16 %v1022, %v1022
        %v1087 = vpack.c.b16 %v1023, %v1023
        %v1088 = vpack.c.b16 %v1024, %v1024
        %v1089 = vpack.c.b16 %v1025, %v1025
        %v1090 = vpack.c.b16 %v1026, %v1026
        %v1091 = vpack.c.b16 %v1027, %v1027
        %v1092 = vpack.c.b16 %v1028, %v1028
        %v1093 = vpack.c.b16 %v1029, %v1029
        %v1094 = vpack.c.b16 %v1030, %v1030
        %v1095 = vpack.c.b16 %v1031, %v1031
        %v1096 = vpack.c.b16 %v1032, %v1032
        %v1097 = vpack.c.b16 %v1033, %v1033
        %v1098 = vpack.c.b16 %v1034, %v1034
        %v1099 = vpack.c.b16 %v1035, %v1035
        %v1100 = vpack.c.b16 %v1036, %v1036
        %v1101 = vpack.c.b16 %v1037, %v1037
        %v1102 = vpack.c.b16 %v1038, %v1038
        %v1103 = vpack.c.b16 %v1039, %v1039
        %v1104 = vpack.c.b16 %v1040, %v1040
        %v1105 = vpack.c.b16 %v1041, %v1041
        %vm1170 = vcmask 125952
        %1171 = vst.msk [vmem:[%s172] sm:$0xf] %vm1170, %v1042
        %1172 = vst.msk [vmem:[%s172 + $0x4] sm:$0xf] %vm1170, %v1043
        %1173 = vst.msk [vmem:[%s172 + $0x8] sm:$0xf] %vm1170, %v1044
        %1174 = vst.msk [vmem:[%s172 + $0xc] sm:$0xf] %vm1170, %v1045
        %1175 = vst.msk [vmem:[%s172 + $0x10] sm:$0xf] %vm1170, %v1046
        %1176 = vst.msk [vmem:[%s172 + $0x14] sm:$0xf] %vm1170, %v1047
        %1177 = vst.msk [vmem:[%s172 + $0x18] sm:$0xf] %vm1170, %v1048
        %1178 = vst.msk [vmem:[%s172 + $0x1c] sm:$0xf] %vm1170, %v1049
        %1179 = vst.msk [vmem:[%s172 + $0x20] sm:$0xf] %vm1170, %v1050
        %1180 = vst.msk [vmem:[%s172 + $0x24] sm:$0xf] %vm1170, %v1051
        %1181 = vst.msk [vmem:[%s172 + $0x28] sm:$0xf] %vm1170, %v1052
        %1182 = vst.msk [vmem:[%s172 + $0x2c] sm:$0xf] %vm1170, %v1053
        %1183 = vst.msk [vmem:[%s172 + $0x30] sm:$0xf] %vm1170, %v1054
        %1184 = vst.msk [vmem:[%s172 + $0x34] sm:$0xf] %vm1170, %v1055
        %1185 = vst.msk [vmem:[%s172 + $0x38] sm:$0xf] %vm1170, %v1056
        %1186 = vst.msk [vmem:[%s172 + $0x3c] sm:$0xf] %vm1170, %v1057
        %1187 = vst.msk [vmem:[%s172 + $0x40] sm:$0xf] %vm1170, %v1058
        %1188 = vst.msk [vmem:[%s172 + $0x44] sm:$0xf] %vm1170, %v1059
        %1189 = vst.msk [vmem:[%s172 + $0x48] sm:$0xf] %vm1170, %v1060
        %1190 = vst.msk [vmem:[%s172 + $0x4c] sm:$0xf] %vm1170, %v1061
        %1191 = vst.msk [vmem:[%s172 + $0x50] sm:$0xf] %vm1170, %v1062
        %1192 = vst.msk [vmem:[%s172 + $0x54] sm:$0xf] %vm1170, %v1063
        %1193 = vst.msk [vmem:[%s172 + $0x58] sm:$0xf] %vm1170, %v1064
        %1194 = vst.msk [vmem:[%s172 + $0x5c] sm:$0xf] %vm1170, %v1065
        %1195 = vst.msk [vmem:[%s172 + $0x60] sm:$0xf] %vm1170, %v1066
        %1196 = vst.msk [vmem:[%s172 + $0x64] sm:$0xf] %vm1170, %v1067
        %1197 = vst.msk [vmem:[%s172 + $0x68] sm:$0xf] %vm1170, %v1068
        %1198 = vst.msk [vmem:[%s172 + $0x6c] sm:$0xf] %vm1170, %v1069
        %1199 = vst.msk [vmem:[%s172 + $0x70] sm:$0xf] %vm1170, %v1070
        %1200 = vst.msk [vmem:[%s172 + $0x74] sm:$0xf] %vm1170, %v1071
        %1201 = vst.msk [vmem:[%s172 + $0x78] sm:$0xf] %vm1170, %v1072
        %1202 = vst.msk [vmem:[%s172 + $0x7c] sm:$0xf] %vm1170, %v1073
        %1203 = vst.msk [vmem:[%s172 + $0x80] sm:$0xf] %vm1170, %v1074
        %1204 = vst.msk [vmem:[%s172 + $0x84] sm:$0xf] %vm1170, %v1075
        %1205 = vst.msk [vmem:[%s172 + $0x88] sm:$0xf] %vm1170, %v1076
        %1206 = vst.msk [vmem:[%s172 + $0x8c] sm:$0xf] %vm1170, %v1077
        %1207 = vst.msk [vmem:[%s172 + $0x90] sm:$0xf] %vm1170, %v1078
        %1208 = vst.msk [vmem:[%s172 + $0x94] sm:$0xf] %vm1170, %v1079
        %1209 = vst.msk [vmem:[%s172 + $0x98] sm:$0xf] %vm1170, %v1080
        %1210 = vst.msk [vmem:[%s172 + $0x9c] sm:$0xf] %vm1170, %v1081
        %1211 = vst.msk [vmem:[%s172 + $0xa0] sm:$0xf] %vm1170, %v1082
        %1212 = vst.msk [vmem:[%s172 + $0xa4] sm:$0xf] %vm1170, %v1083
        %1213 = vst.msk [vmem:[%s172 + $0xa8] sm:$0xf] %vm1170, %v1084
        %1214 = vst.msk [vmem:[%s172 + $0xac] sm:$0xf] %vm1170, %v1085
        %1215 = vst.msk [vmem:[%s172 + $0xb0] sm:$0xf] %vm1170, %v1086
        %1216 = vst.msk [vmem:[%s172 + $0xb4] sm:$0xf] %vm1170, %v1087
        %1217 = vst.msk [vmem:[%s172 + $0xb8] sm:$0xf] %vm1170, %v1088
        %1218 = vst.msk [vmem:[%s172 + $0xbc] sm:$0xf] %vm1170, %v1089
        %1219 = vst.msk [vmem:[%s172 + $0xc0] sm:$0xf] %vm1170, %v1090
        %1220 = vst.msk [vmem:[%s172 + $0xc4] sm:$0xf] %vm1170, %v1091
        %1221 = vst.msk [vmem:[%s172 + $0xc8] sm:$0xf] %vm1170, %v1092
        %1222 = vst.msk [vmem:[%s172 + $0xcc] sm:$0xf] %vm1170, %v1093
        %1223 = vst.msk [vmem:[%s172 + $0xd0] sm:$0xf] %vm1170, %v1094
        %1224 = vst.msk [vmem:[%s172 + $0xd4] sm:$0xf] %vm1170, %v1095
        %1225 = vst.msk [vmem:[%s172 + $0xd8] sm:$0xf] %vm1170, %v1096
        %1226 = vst.msk [vmem:[%s172 + $0xdc] sm:$0xf] %vm1170, %v1097
        %1227 = vst.msk [vmem:[%s172 + $0xe0] sm:$0xf] %vm1170, %v1098
        %1228 = vst.msk [vmem:[%s172 + $0xe4] sm:$0xf] %vm1170, %v1099
        %1229 = vst.msk [vmem:[%s172 + $0xe8] sm:$0xf] %vm1170, %v1100
        %1230 = vst.msk [vmem:[%s172 + $0xec] sm:$0xf] %vm1170, %v1101
        %1231 = vst.msk [vmem:[%s172 + $0xf0] sm:$0xf] %vm1170, %v1102
        %1232 = vst.msk [vmem:[%s172 + $0xf4] sm:$0xf] %vm1170, %v1103
        %1233 = vst.msk [vmem:[%s172 + $0xf8] sm:$0xf] %vm1170, %v1104
        %1234 = vst.msk [vmem:[%s172 + $0xfc] sm:$0xf] %vm1170, %v1105
        %s1235 = sand.u32 %s90, 1
        %s1236 = sand.u32 %s90, 1
        %s1237 = smul.addr %s1236, 256
        %s1238 = scalar_lea.vmem [#allocation2], %s1237
        // Predicated region
        $region33: #{net_forward.6} parent=31 // pred_check
          %p1239 = pneg %p100
        $region34: #{net_forward.6} parent=31 // pred_check_branch
          %1241 = sbr.rel (%p1239) target = $region36
        $region35: #{net_forward.6} parent=31 // pred_region
          %s1242 = smul.u32 64, %s14
          %s1243 = ssub.s32 133, %s1242
          %p1244 = scmp.lt.s32.totalorder %s1243, 64
          %s1245 = scalar_select %p1244, %s1243, 64
          %s1246 = smul.u32 64, %s1245
          %p1247 = scmp.ne.s32.totalorder 0, %s1246
          %s1248 = smul.addr %s1242, 4
          %s1249 = scalar_lea.vmem %s3, %s1248
          // Predicated region
          $region37: #{net_forward.6} parent=35 // pred_check
            %p1250 = pneg %p1247
          $region38: #{net_forward.6} parent=35 // pred_check_branch
            %1252 = sbr.rel (%p1250) target = $region40
          $region39: #{net_forward.6} parent=35 // pred_region
            // Predicated region
            $region41: #{net_forward.6} parent=39 // pred_check
              _
            $region42: #{net_forward.6} parent=39 // pred_check_branch
              %1254 = sbr.rel target = $region44
            $region43: #{net_forward.6} parent=39 // pred_region
              // Predicated region
              $region63: #{net_forward.6} parent=43 // pred_check
                _
              $region64: #{net_forward.6} parent=43 // pred_check_branch
                %1429 = sbr.rel (0) target = $region66
              $region65: #{net_forward.6} parent=43 // pred_region
                %s1431 = sshrl.u32 %s1245, 6
                // While loop
                $region67: #{net_forward.6} parent=65 // loop_pre_header
                  _
                $region68: #{net_forward.6} parent=65 // loop_header
                  %s1433 = sphi 0, %s1435
                  %p1434 = scmp.ge.s32.totalorder %s1433, %s1431
                  %s1438 = sphi 0, %s1571
                  %s1439 = sphi %s1238, %s1574
                  %s1440 = sphi %s1249, %s1575
                $region69: #{net_forward.6} parent=65 // loop_header_branch
                  %1437 = sbr.rel (%p1434) target = $region73
                $region70: #{net_forward.6} parent=65 // loop_body
                  %v1441 = vld [vmem:[%s1439] sm:$0xf]
                  %1442 = vst [vmem:[%s1440] sm:$0xf] %v1441
                  %v1443 = vld [vmem:[%s1439 + $0x4] sm:$0xf]
                  %1444 = vst [vmem:[%s1440 + $0x4] sm:$0xf] %v1443
                  %v1445 = vld [vmem:[%s1439 + $0x8] sm:$0xf]
                  %1446 = vst [vmem:[%s1440 + $0x8] sm:$0xf] %v1445
                  %v1447 = vld [vmem:[%s1439 + $0xc] sm:$0xf]
                  %1448 = vst [vmem:[%s1440 + $0xc] sm:$0xf] %v1447
                  %v1449 = vld [vmem:[%s1439 + $0x10] sm:$0xf]
                  %1450 = vst [vmem:[%s1440 + $0x10] sm:$0xf] %v1449
                  %v1451 = vld [vmem:[%s1439 + $0x14] sm:$0xf]
                  %1452 = vst [vmem:[%s1440 + $0x14] sm:$0xf] %v1451
                  %v1453 = vld [vmem:[%s1439 + $0x18] sm:$0xf]
                  %1454 = vst [vmem:[%s1440 + $0x18] sm:$0xf] %v1453
                  %v1455 = vld [vmem:[%s1439 + $0x1c] sm:$0xf]
                  %1456 = vst [vmem:[%s1440 + $0x1c] sm:$0xf] %v1455
                  %v1457 = vld [vmem:[%s1439 + $0x20] sm:$0xf]
                  %1458 = vst [vmem:[%s1440 + $0x20] sm:$0xf] %v1457
                  %v1459 = vld [vmem:[%s1439 + $0x24] sm:$0xf]
                  %1460 = vst [vmem:[%s1440 + $0x24] sm:$0xf] %v1459
                  %v1461 = vld [vmem:[%s1439 + $0x28] sm:$0xf]
                  %1462 = vst [vmem:[%s1440 + $0x28] sm:$0xf] %v1461
                  %v1463 = vld [vmem:[%s1439 + $0x2c] sm:$0xf]
                  %1464 = vst [vmem:[%s1440 + $0x2c] sm:$0xf] %v1463
                  %v1465 = vld [vmem:[%s1439 + $0x30] sm:$0xf]
                  %1466 = vst [vmem:[%s1440 + $0x30] sm:$0xf] %v1465
                  %v1467 = vld [vmem:[%s1439 + $0x34] sm:$0xf]
                  %1468 = vst [vmem:[%s1440 + $0x34] sm:$0xf] %v1467
                  %v1469 = vld [vmem:[%s1439 + $0x38] sm:$0xf]
                  %1470 = vst [vmem:[%s1440 + $0x38] sm:$0xf] %v1469
                  %v1471 = vld [vmem:[%s1439 + $0x3c] sm:$0xf]
                  %1472 = vst [vmem:[%s1440 + $0x3c] sm:$0xf] %v1471
                  %v1473 = vld [vmem:[%s1439 + $0x40] sm:$0xf]
                  %1474 = vst [vmem:[%s1440 + $0x40] sm:$0xf] %v1473
                  %v1475 = vld [vmem:[%s1439 + $0x44] sm:$0xf]
                  %1476 = vst [vmem:[%s1440 + $0x44] sm:$0xf] %v1475
                  %v1477 = vld [vmem:[%s1439 + $0x48] sm:$0xf]
                  %1478 = vst [vmem:[%s1440 + $0x48] sm:$0xf] %v1477
                  %v1479 = vld [vmem:[%s1439 + $0x4c] sm:$0xf]
                  %1480 = vst [vmem:[%s1440 + $0x4c] sm:$0xf] %v1479
                  %v1481 = vld [vmem:[%s1439 + $0x50] sm:$0xf]
                  %1482 = vst [vmem:[%s1440 + $0x50] sm:$0xf] %v1481
                  %v1483 = vld [vmem:[%s1439 + $0x54] sm:$0xf]
                  %1484 = vst [vmem:[%s1440 + $0x54] sm:$0xf] %v1483
                  %v1485 = vld [vmem:[%s1439 + $0x58] sm:$0xf]
                  %1486 = vst [vmem:[%s1440 + $0x58] sm:$0xf] %v1485
                  %v1487 = vld [vmem:[%s1439 + $0x5c] sm:$0xf]
                  %1488 = vst [vmem:[%s1440 + $0x5c] sm:$0xf] %v1487
                  %v1489 = vld [vmem:[%s1439 + $0x60] sm:$0xf]
                  %1490 = vst [vmem:[%s1440 + $0x60] sm:$0xf] %v1489
                  %v1491 = vld [vmem:[%s1439 + $0x64] sm:$0xf]
                  %1492 = vst [vmem:[%s1440 + $0x64] sm:$0xf] %v1491
                  %v1493 = vld [vmem:[%s1439 + $0x68] sm:$0xf]
                  %1494 = vst [vmem:[%s1440 + $0x68] sm:$0xf] %v1493
                  %v1495 = vld [vmem:[%s1439 + $0x6c] sm:$0xf]
                  %1496 = vst [vmem:[%s1440 + $0x6c] sm:$0xf] %v1495
                  %v1497 = vld [vmem:[%s1439 + $0x70] sm:$0xf]
                  %1498 = vst [vmem:[%s1440 + $0x70] sm:$0xf] %v1497
                  %v1499 = vld [vmem:[%s1439 + $0x74] sm:$0xf]
                  %1500 = vst [vmem:[%s1440 + $0x74] sm:$0xf] %v1499
                  %v1501 = vld [vmem:[%s1439 + $0x78] sm:$0xf]
                  %1502 = vst [vmem:[%s1440 + $0x78] sm:$0xf] %v1501
                  %v1503 = vld [vmem:[%s1439 + $0x7c] sm:$0xf]
                  %1504 = vst [vmem:[%s1440 + $0x7c] sm:$0xf] %v1503
                  %v1505 = vld [vmem:[%s1439 + $0x80] sm:$0xf]
                  %1506 = vst [vmem:[%s1440 + $0x80] sm:$0xf] %v1505
                  %v1507 = vld [vmem:[%s1439 + $0x84] sm:$0xf]
                  %1508 = vst [vmem:[%s1440 + $0x84] sm:$0xf] %v1507
                  %v1509 = vld [vmem:[%s1439 + $0x88] sm:$0xf]
                  %1510 = vst [vmem:[%s1440 + $0x88] sm:$0xf] %v1509
                  %v1511 = vld [vmem:[%s1439 + $0x8c] sm:$0xf]
                  %1512 = vst [vmem:[%s1440 + $0x8c] sm:$0xf] %v1511
                  %v1513 = vld [vmem:[%s1439 + $0x90] sm:$0xf]
                  %1514 = vst [vmem:[%s1440 + $0x90] sm:$0xf] %v1513
                  %v1515 = vld [vmem:[%s1439 + $0x94] sm:$0xf]
                  %1516 = vst [vmem:[%s1440 + $0x94] sm:$0xf] %v1515
                  %v1517 = vld [vmem:[%s1439 + $0x98] sm:$0xf]
                  %1518 = vst [vmem:[%s1440 + $0x98] sm:$0xf] %v1517
                  %v1519 = vld [vmem:[%s1439 + $0x9c] sm:$0xf]
                  %1520 = vst [vmem:[%s1440 + $0x9c] sm:$0xf] %v1519
                  %v1521 = vld [vmem:[%s1439 + $0xa0] sm:$0xf]
                  %1522 = vst [vmem:[%s1440 + $0xa0] sm:$0xf] %v1521
                  %v1523 = vld [vmem:[%s1439 + $0xa4] sm:$0xf]
                  %1524 = vst [vmem:[%s1440 + $0xa4] sm:$0xf] %v1523
                  %v1525 = vld [vmem:[%s1439 + $0xa8] sm:$0xf]
                  %1526 = vst [vmem:[%s1440 + $0xa8] sm:$0xf] %v1525
                  %v1527 = vld [vmem:[%s1439 + $0xac] sm:$0xf]
                  %1528 = vst [vmem:[%s1440 + $0xac] sm:$0xf] %v1527
                  %v1529 = vld [vmem:[%s1439 + $0xb0] sm:$0xf]
                  %1530 = vst [vmem:[%s1440 + $0xb0] sm:$0xf] %v1529
                  %v1531 = vld [vmem:[%s1439 + $0xb4] sm:$0xf]
                  %1532 = vst [vmem:[%s1440 + $0xb4] sm:$0xf] %v1531
                  %v1533 = vld [vmem:[%s1439 + $0xb8] sm:$0xf]
                  %1534 = vst [vmem:[%s1440 + $0xb8] sm:$0xf] %v1533
                  %v1535 = vld [vmem:[%s1439 + $0xbc] sm:$0xf]
                  %1536 = vst [vmem:[%s1440 + $0xbc] sm:$0xf] %v1535
                  %v1537 = vld [vmem:[%s1439 + $0xc0] sm:$0xf]
                  %1538 = vst [vmem:[%s1440 + $0xc0] sm:$0xf] %v1537
                  %v1539 = vld [vmem:[%s1439 + $0xc4] sm:$0xf]
                  %1540 = vst [vmem:[%s1440 + $0xc4] sm:$0xf] %v1539
                  %v1541 = vld [vmem:[%s1439 + $0xc8] sm:$0xf]
                  %1542 = vst [vmem:[%s1440 + $0xc8] sm:$0xf] %v1541
                  %v1543 = vld [vmem:[%s1439 + $0xcc] sm:$0xf]
                  %1544 = vst [vmem:[%s1440 + $0xcc] sm:$0xf] %v1543
                  %v1545 = vld [vmem:[%s1439 + $0xd0] sm:$0xf]
                  %1546 = vst [vmem:[%s1440 + $0xd0] sm:$0xf] %v1545
                  %v1547 = vld [vmem:[%s1439 + $0xd4] sm:$0xf]
                  %1548 = vst [vmem:[%s1440 + $0xd4] sm:$0xf] %v1547
                  %v1549 = vld [vmem:[%s1439 + $0xd8] sm:$0xf]
                  %1550 = vst [vmem:[%s1440 + $0xd8] sm:$0xf] %v1549
                  %v1551 = vld [vmem:[%s1439 + $0xdc] sm:$0xf]
                  %1552 = vst [vmem:[%s1440 + $0xdc] sm:$0xf] %v1551
                  %v1553 = vld [vmem:[%s1439 + $0xe0] sm:$0xf]
                  %1554 = vst [vmem:[%s1440 + $0xe0] sm:$0xf] %v1553
                  %v1555 = vld [vmem:[%s1439 + $0xe4] sm:$0xf]
                  %1556 = vst [vmem:[%s1440 + $0xe4] sm:$0xf] %v1555
                  %v1557 = vld [vmem:[%s1439 + $0xe8] sm:$0xf]
                  %1558 = vst [vmem:[%s1440 + $0xe8] sm:$0xf] %v1557
                  %v1559 = vld [vmem:[%s1439 + $0xec] sm:$0xf]
                  %1560 = vst [vmem:[%s1440 + $0xec] sm:$0xf] %v1559
                  %v1561 = vld [vmem:[%s1439 + $0xf0] sm:$0xf]
                  %1562 = vst [vmem:[%s1440 + $0xf0] sm:$0xf] %v1561
                  %v1563 = vld [vmem:[%s1439 + $0xf4] sm:$0xf]
                  %1564 = vst [vmem:[%s1440 + $0xf4] sm:$0xf] %v1563
                  %v1565 = vld [vmem:[%s1439 + $0xf8] sm:$0xf]
                  %1566 = vst [vmem:[%s1440 + $0xf8] sm:$0xf] %v1565
                  %v1567 = vld [vmem:[%s1439 + $0xfc] sm:$0xf]
                  %1568 = vst [vmem:[%s1440 + $0xfc] sm:$0xf] %v1567
                  %s1569 = sadd.s32 1, %s1438
                  %p1570 = scmp.ge.s32.totalorder %s1569, %s1431
                  %s1571 = scalar_select %p1570, 0, %s1569
                  %s1572 = smul.u32 %s1571, 256
                  %s1573 = smul.u32 %s1571, 256
                  %s1574 = scalar_lea.vmem %s1238, %s1572 [#allocation2]
                  %s1575 = scalar_lea.vmem %s1249, %s1573
                $region71: #{net_forward.6} parent=65 // loop_footer
                  %s1435 = sadd.s32 %s1433, 1
                $region72: #{net_forward.6} parent=65 // loop_footer_branch
                  %1432 = sbr.rel target = $region68
                $region73: #{net_forward.6} parent=65 // loop_exit
                  _
                %s1576 = sshrl.u32 %s1245, 6
                %s1577 = sand.u32 %s1245, 63
                %s1578 = smul.u32 %s1576, 64
                %s1579 = smul.u32 4, %s1578
                %s1580 = scalar_lea.vmem %s1238, %s1579 [#allocation2]
                %s1581 = smul.u32 4, %s1578
                %s1582 = scalar_lea.vmem %s1249, %s1581
                // While loop
                $region74: #{net_forward.6} parent=65 // loop_pre_header
                  _
                $region75: #{net_forward.6} parent=65 // loop_header
                  %s1584 = sphi 0, %s1586
                  %p1585 = scmp.ge.s32.totalorder %s1584, %s1577
                  %s1589 = sphi 0, %s1596
                  %s1590 = sphi %s1580, %s1599
                  %s1591 = sphi %s1582, %s1600
                $region76: #{net_forward.6} parent=65 // loop_header_branch
                  %1588 = sbr.rel (%p1585) target = $region80
                $region77: #{net_forward.6} parent=65 // loop_body
                  %v1592 = vld [vmem:[%s1590] sm:$0xf]
                  %1593 = vst [vmem:[%s1591] sm:$0xf] %v1592
                  %s1594 = sadd.s32 1, %s1589
                  %p1595 = scmp.ge.s32.totalorder %s1594, %s1577
                  %s1596 = scalar_select %p1595, 0, %s1594
                  %s1597 = smul.u32 %s1596, 4
                  %s1598 = smul.u32 %s1596, 4
                  %s1599 = scalar_lea.vmem %s1580, %s1597 [#allocation2]
                  %s1600 = scalar_lea.vmem %s1582, %s1598
                $region78: #{net_forward.6} parent=65 // loop_footer
                  %s1586 = sadd.s32 %s1584, 1
                $region79: #{net_forward.6} parent=65 // loop_footer_branch
                  %1583 = sbr.rel target = $region75
                $region80: #{net_forward.6} parent=65 // loop_exit
                  _
              $region66: #{net_forward.6} parent=43 // pred_fallthru
                _
            $region44: #{net_forward.6} parent=39 // pred_fallthru
              _
            // Predicated region
            $region45: #{net_forward.6} parent=39 // pred_check
              _
            $region46: #{net_forward.6} parent=39 // pred_check_branch
              %1256 = sbr.rel (0) target = $region48
            $region47: #{net_forward.6} parent=39 // pred_region
              %s1258 = sshrl.u32 %s1245, 6
              // While loop
              $region49: #{net_forward.6} parent=47 // loop_pre_header
                _
              $region50: #{net_forward.6} parent=47 // loop_header
                %s1260 = sphi 0, %s1262
                %p1261 = scmp.ge.s32.totalorder %s1260, %s1258
                %s1265 = sphi 0, %s1398
                %s1266 = sphi %s1238, %s1401
                %s1267 = sphi %s1249, %s1402
              $region51: #{net_forward.6} parent=47 // loop_header_branch
                %1264 = sbr.rel (%p1261) target = $region55
              $region52: #{net_forward.6} parent=47 // loop_body
                %v1268 = vld [vmem:[%s1266] sm:$0xf]
                %1269 = vst [vmem:[%s1267] sm:$0xf] %v1268
                %v1270 = vld [vmem:[%s1266 + $0x4] sm:$0xf]
                %1271 = vst [vmem:[%s1267 + $0x4] sm:$0xf] %v1270
                %v1272 = vld [vmem:[%s1266 + $0x8] sm:$0xf]
                %1273 = vst [vmem:[%s1267 + $0x8] sm:$0xf] %v1272
                %v1274 = vld [vmem:[%s1266 + $0xc] sm:$0xf]
                %1275 = vst [vmem:[%s1267 + $0xc] sm:$0xf] %v1274
                %v1276 = vld [vmem:[%s1266 + $0x10] sm:$0xf]
                %1277 = vst [vmem:[%s1267 + $0x10] sm:$0xf] %v1276
                %v1278 = vld [vmem:[%s1266 + $0x14] sm:$0xf]
                %1279 = vst [vmem:[%s1267 + $0x14] sm:$0xf] %v1278
                %v1280 = vld [vmem:[%s1266 + $0x18] sm:$0xf]
                %1281 = vst [vmem:[%s1267 + $0x18] sm:$0xf] %v1280
                %v1282 = vld [vmem:[%s1266 + $0x1c] sm:$0xf]
                %1283 = vst [vmem:[%s1267 + $0x1c] sm:$0xf] %v1282
                %v1284 = vld [vmem:[%s1266 + $0x20] sm:$0xf]
                %1285 = vst [vmem:[%s1267 + $0x20] sm:$0xf] %v1284
                %v1286 = vld [vmem:[%s1266 + $0x24] sm:$0xf]
                %1287 = vst [vmem:[%s1267 + $0x24] sm:$0xf] %v1286
                %v1288 = vld [vmem:[%s1266 + $0x28] sm:$0xf]
                %1289 = vst [vmem:[%s1267 + $0x28] sm:$0xf] %v1288
                %v1290 = vld [vmem:[%s1266 + $0x2c] sm:$0xf]
                %1291 = vst [vmem:[%s1267 + $0x2c] sm:$0xf] %v1290
                %v1292 = vld [vmem:[%s1266 + $0x30] sm:$0xf]
                %1293 = vst [vmem:[%s1267 + $0x30] sm:$0xf] %v1292
                %v1294 = vld [vmem:[%s1266 + $0x34] sm:$0xf]
                %1295 = vst [vmem:[%s1267 + $0x34] sm:$0xf] %v1294
                %v1296 = vld [vmem:[%s1266 + $0x38] sm:$0xf]
                %1297 = vst [vmem:[%s1267 + $0x38] sm:$0xf] %v1296
                %v1298 = vld [vmem:[%s1266 + $0x3c] sm:$0xf]
                %1299 = vst [vmem:[%s1267 + $0x3c] sm:$0xf] %v1298
                %v1300 = vld [vmem:[%s1266 + $0x40] sm:$0xf]
                %1301 = vst [vmem:[%s1267 + $0x40] sm:$0xf] %v1300
                %v1302 = vld [vmem:[%s1266 + $0x44] sm:$0xf]
                %1303 = vst [vmem:[%s1267 + $0x44] sm:$0xf] %v1302
                %v1304 = vld [vmem:[%s1266 + $0x48] sm:$0xf]
                %1305 = vst [vmem:[%s1267 + $0x48] sm:$0xf] %v1304
                %v1306 = vld [vmem:[%s1266 + $0x4c] sm:$0xf]
                %1307 = vst [vmem:[%s1267 + $0x4c] sm:$0xf] %v1306
                %v1308 = vld [vmem:[%s1266 + $0x50] sm:$0xf]
                %1309 = vst [vmem:[%s1267 + $0x50] sm:$0xf] %v1308
                %v1310 = vld [vmem:[%s1266 + $0x54] sm:$0xf]
                %1311 = vst [vmem:[%s1267 + $0x54] sm:$0xf] %v1310
                %v1312 = vld [vmem:[%s1266 + $0x58] sm:$0xf]
                %1313 = vst [vmem:[%s1267 + $0x58] sm:$0xf] %v1312
                %v1314 = vld [vmem:[%s1266 + $0x5c] sm:$0xf]
                %1315 = vst [vmem:[%s1267 + $0x5c] sm:$0xf] %v1314
                %v1316 = vld [vmem:[%s1266 + $0x60] sm:$0xf]
                %1317 = vst [vmem:[%s1267 + $0x60] sm:$0xf] %v1316
                %v1318 = vld [vmem:[%s1266 + $0x64] sm:$0xf]
                %1319 = vst [vmem:[%s1267 + $0x64] sm:$0xf] %v1318
                %v1320 = vld [vmem:[%s1266 + $0x68] sm:$0xf]
                %1321 = vst [vmem:[%s1267 + $0x68] sm:$0xf] %v1320
                %v1322 = vld [vmem:[%s1266 + $0x6c] sm:$0xf]
                %1323 = vst [vmem:[%s1267 + $0x6c] sm:$0xf] %v1322
                %v1324 = vld [vmem:[%s1266 + $0x70] sm:$0xf]
                %1325 = vst [vmem:[%s1267 + $0x70] sm:$0xf] %v1324
                %v1326 = vld [vmem:[%s1266 + $0x74] sm:$0xf]
                %1327 = vst [vmem:[%s1267 + $0x74] sm:$0xf] %v1326
                %v1328 = vld [vmem:[%s1266 + $0x78] sm:$0xf]
                %1329 = vst [vmem:[%s1267 + $0x78] sm:$0xf] %v1328
                %v1330 = vld [vmem:[%s1266 + $0x7c] sm:$0xf]
                %1331 = vst [vmem:[%s1267 + $0x7c] sm:$0xf] %v1330
                %v1332 = vld [vmem:[%s1266 + $0x80] sm:$0xf]
                %1333 = vst [vmem:[%s1267 + $0x80] sm:$0xf] %v1332
                %v1334 = vld [vmem:[%s1266 + $0x84] sm:$0xf]
                %1335 = vst [vmem:[%s1267 + $0x84] sm:$0xf] %v1334
                %v1336 = vld [vmem:[%s1266 + $0x88] sm:$0xf]
                %1337 = vst [vmem:[%s1267 + $0x88] sm:$0xf] %v1336
                %v1338 = vld [vmem:[%s1266 + $0x8c] sm:$0xf]
                %1339 = vst [vmem:[%s1267 + $0x8c] sm:$0xf] %v1338
                %v1340 = vld [vmem:[%s1266 + $0x90] sm:$0xf]
                %1341 = vst [vmem:[%s1267 + $0x90] sm:$0xf] %v1340
                %v1342 = vld [vmem:[%s1266 + $0x94] sm:$0xf]
                %1343 = vst [vmem:[%s1267 + $0x94] sm:$0xf] %v1342
                %v1344 = vld [vmem:[%s1266 + $0x98] sm:$0xf]
                %1345 = vst [vmem:[%s1267 + $0x98] sm:$0xf] %v1344
                %v1346 = vld [vmem:[%s1266 + $0x9c] sm:$0xf]
                %1347 = vst [vmem:[%s1267 + $0x9c] sm:$0xf] %v1346
                %v1348 = vld [vmem:[%s1266 + $0xa0] sm:$0xf]
                %1349 = vst [vmem:[%s1267 + $0xa0] sm:$0xf] %v1348
                %v1350 = vld [vmem:[%s1266 + $0xa4] sm:$0xf]
                %1351 = vst [vmem:[%s1267 + $0xa4] sm:$0xf] %v1350
                %v1352 = vld [vmem:[%s1266 + $0xa8] sm:$0xf]
                %1353 = vst [vmem:[%s1267 + $0xa8] sm:$0xf] %v1352
                %v1354 = vld [vmem:[%s1266 + $0xac] sm:$0xf]
                %1355 = vst [vmem:[%s1267 + $0xac] sm:$0xf] %v1354
                %v1356 = vld [vmem:[%s1266 + $0xb0] sm:$0xf]
                %1357 = vst [vmem:[%s1267 + $0xb0] sm:$0xf] %v1356
                %v1358 = vld [vmem:[%s1266 + $0xb4] sm:$0xf]
                %1359 = vst [vmem:[%s1267 + $0xb4] sm:$0xf] %v1358
                %v1360 = vld [vmem:[%s1266 + $0xb8] sm:$0xf]
                %1361 = vst [vmem:[%s1267 + $0xb8] sm:$0xf] %v1360
                %v1362 = vld [vmem:[%s1266 + $0xbc] sm:$0xf]
                %1363 = vst [vmem:[%s1267 + $0xbc] sm:$0xf] %v1362
                %v1364 = vld [vmem:[%s1266 + $0xc0] sm:$0xf]
                %1365 = vst [vmem:[%s1267 + $0xc0] sm:$0xf] %v1364
                %v1366 = vld [vmem:[%s1266 + $0xc4] sm:$0xf]
                %1367 = vst [vmem:[%s1267 + $0xc4] sm:$0xf] %v1366
                %v1368 = vld [vmem:[%s1266 + $0xc8] sm:$0xf]
                %1369 = vst [vmem:[%s1267 + $0xc8] sm:$0xf] %v1368
                %v1370 = vld [vmem:[%s1266 + $0xcc] sm:$0xf]
                %1371 = vst [vmem:[%s1267 + $0xcc] sm:$0xf] %v1370
                %v1372 = vld [vmem:[%s1266 + $0xd0] sm:$0xf]
                %1373 = vst [vmem:[%s1267 + $0xd0] sm:$0xf] %v1372
                %v1374 = vld [vmem:[%s1266 + $0xd4] sm:$0xf]
                %1375 = vst [vmem:[%s1267 + $0xd4] sm:$0xf] %v1374
                %v1376 = vld [vmem:[%s1266 + $0xd8] sm:$0xf]
                %1377 = vst [vmem:[%s1267 + $0xd8] sm:$0xf] %v1376
                %v1378 = vld [vmem:[%s1266 + $0xdc] sm:$0xf]
                %1379 = vst [vmem:[%s1267 + $0xdc] sm:$0xf] %v1378
                %v1380 = vld [vmem:[%s1266 + $0xe0] sm:$0xf]
                %1381 = vst [vmem:[%s1267 + $0xe0] sm:$0xf] %v1380
                %v1382 = vld [vmem:[%s1266 + $0xe4] sm:$0xf]
                %1383 = vst [vmem:[%s1267 + $0xe4] sm:$0xf] %v1382
                %v1384 = vld [vmem:[%s1266 + $0xe8] sm:$0xf]
                %1385 = vst [vmem:[%s1267 + $0xe8] sm:$0xf] %v1384
                %v1386 = vld [vmem:[%s1266 + $0xec] sm:$0xf]
                %1387 = vst [vmem:[%s1267 + $0xec] sm:$0xf] %v1386
                %v1388 = vld [vmem:[%s1266 + $0xf0] sm:$0xf]
                %1389 = vst [vmem:[%s1267 + $0xf0] sm:$0xf] %v1388
                %v1390 = vld [vmem:[%s1266 + $0xf4] sm:$0xf]
                %1391 = vst [vmem:[%s1267 + $0xf4] sm:$0xf] %v1390
                %v1392 = vld [vmem:[%s1266 + $0xf8] sm:$0xf]
                %1393 = vst [vmem:[%s1267 + $0xf8] sm:$0xf] %v1392
                %v1394 = vld [vmem:[%s1266 + $0xfc] sm:$0xf]
                %1395 = vst [vmem:[%s1267 + $0xfc] sm:$0xf] %v1394
                %s1396 = sadd.s32 1, %s1265
                %p1397 = scmp.ge.s32.totalorder %s1396, %s1258
                %s1398 = scalar_select %p1397, 0, %s1396
                %s1399 = smul.u32 %s1398, 256
                %s1400 = smul.u32 %s1398, 256
                %s1401 = scalar_lea.vmem %s1238, %s1399 [#allocation2]
                %s1402 = scalar_lea.vmem %s1249, %s1400
              $region53: #{net_forward.6} parent=47 // loop_footer
                %s1262 = sadd.s32 %s1260, 1
              $region54: #{net_forward.6} parent=47 // loop_footer_branch
                %1259 = sbr.rel target = $region50
              $region55: #{net_forward.6} parent=47 // loop_exit
                _
              %s1403 = sshrl.u32 %s1245, 6
              %s1404 = sand.u32 %s1245, 63
              %s1405 = smul.u32 %s1403, 64
              %s1406 = smul.u32 4, %s1405
              %s1407 = scalar_lea.vmem %s1238, %s1406 [#allocation2]
              %s1408 = smul.u32 4, %s1405
              %s1409 = scalar_lea.vmem %s1249, %s1408
              // While loop
              $region56: #{net_forward.6} parent=47 // loop_pre_header
                _
              $region57: #{net_forward.6} parent=47 // loop_header
                %s1411 = sphi 0, %s1413
                %p1412 = scmp.ge.s32.totalorder %s1411, %s1404
                %s1416 = sphi 0, %s1423
                %s1417 = sphi %s1407, %s1426
                %s1418 = sphi %s1409, %s1427
              $region58: #{net_forward.6} parent=47 // loop_header_branch
                %1415 = sbr.rel (%p1412) target = $region62
              $region59: #{net_forward.6} parent=47 // loop_body
                %v1419 = vld [vmem:[%s1417] sm:$0xf]
                %1420 = vst [vmem:[%s1418] sm:$0xf] %v1419
                %s1421 = sadd.s32 1, %s1416
                %p1422 = scmp.ge.s32.totalorder %s1421, %s1404
                %s1423 = scalar_select %p1422, 0, %s1421
                %s1424 = smul.u32 %s1423, 4
                %s1425 = smul.u32 %s1423, 4
                %s1426 = scalar_lea.vmem %s1407, %s1424 [#allocation2]
                %s1427 = scalar_lea.vmem %s1409, %s1425
              $region60: #{net_forward.6} parent=47 // loop_footer
                %s1413 = sadd.s32 %s1411, 1
              $region61: #{net_forward.6} parent=47 // loop_footer_branch
                %1410 = sbr.rel target = $region57
              $region62: #{net_forward.6} parent=47 // loop_exit
                _
            $region48: #{net_forward.6} parent=39 // pred_fallthru
              _
          $region40: #{net_forward.6} parent=35 // pred_fallthru
            _
          %1601 = vnop
        $region36: #{net_forward.6} parent=31 // pred_fallthru
          _
      $region32: #{net_forward.6} parent=5 // pred_fallthru
        _
      %p1602 = scmp.le.s32.totalorder 2, %s9
      // Predicated region
      $region81: #{net_forward.6} parent=5 // pred_check
        %p1603 = pneg %p1602
      $region82: #{net_forward.6} parent=5 // pred_check_branch
        %1605 = sbr.rel (%p1603) target = $region84
      $region83: #{net_forward.6} parent=5 // pred_region
        %s1606 = ssub.s32 %s9, 2
        // Predicated region
        $region85: #{net_forward.6} parent=83 // pred_check
          %p1607 = pneg %p106
        $region86: #{net_forward.6} parent=83 // pred_check_branch
          %1609 = sbr.rel (%p1607) target = $region88
        $region87: #{net_forward.6} parent=83 // pred_region
          %s1610 = sand.u32 %s91, 1
          %s1611 = sand.u32 %s91, 1
          %s1612 = smul.addr %s1611, 256
          %s1613 = scalar_lea.vmem [#allocation2], %s1612
        $region88: #{net_forward.6} parent=83 // pred_fallthru
          _
      $region84: #{net_forward.6} parent=5 // pred_fallthru
        _
    $region6: #{net_forward.6} parent=1 // loop_footer
      %s13 = sadd.s32 1, %s9
    $region7: #{net_forward.6} parent=1 // loop_footer_branch
      %8 = sbr.rel target = $region3
    $region8: #{net_forward.6} parent=1 // loop_exit
      _

// kernel: net_forward.7
$region0: #{net_forward.7}
  #allocation0 [shape = 'u32[]', space=smem, size = 0x4, offset = 0x4, fixed_abs, tag = 'smem constant byte address 0x4 - core index']
  #allocation1 [shape = 'u32[144,128]{1,0:T(1,128)}', space=vmem, size = 0x12000, scoped, tag = 'internal scratch']
  %s0 = inlined_call_operand.vmem [shape: bf16[242,144], index: 0, kind: input, shape index: {}]
  %s1 = inlined_call_operand.vmem [shape: bf16[144,32], index: 1, kind: input, shape index: {}]
  %s2 = inlined_call_operand.vmem [shape: f32[1,32], index: 2, kind: input, shape index: {}]
  %s3 = inlined_call_operand.vmem [shape: bf16[242,32], index: 3, kind: output, shape index: {}]
  %s4 = sld [smem:[#allocation0]]
  $region22: #{net_forward.7} parent=0
    _
  %s6 = ssub.s32 1, %s4
  %s7 = scalar_select 0, %s6, %s4
  // Predicated region
  $region2: #{net_forward.7} parent=0 // pred_check
    _
  $region3: #{net_forward.7} parent=0 // pred_check_branch
    %9 = sbr.rel (0) target = $region5
  $region4: #{net_forward.7} parent=0 // pred_region
    _
  $region5: #{net_forward.7} parent=0 // pred_fallthru
    _
  // Predicated region
  $region6: #{net_forward.7} parent=0 // pred_check
    _
  $region7: #{net_forward.7} parent=0 // pred_check_branch
    %11 = sbr.rel (0) target = $region9
  $region8: #{net_forward.7} parent=0 // pred_region
    _
  $region9: #{net_forward.7} parent=0 // pred_fallthru
    _
  // Predicated region
  $region10: #{net_forward.7} parent=0 // pred_check
    _
  $region11: #{net_forward.7} parent=0 // pred_check_branch
    %13 = sbr.rel (0) target = $region13
  $region12: #{net_forward.7} parent=0 // pred_region
    _
  $region13: #{net_forward.7} parent=0 // pred_fallthru
    _
  %v15 = vld [vmem:[%s0] sm:$0xff]
  %v16 = vld [vmem:[%s0 + $0x8] sm:$0xff]
  %v17 = vld [vmem:[%s0 + $0x10] sm:$0xff]
  %v18 = vld [vmem:[%s0 + $0x18] sm:$0xff]
  %v19 = vld [vmem:[%s0 + $0x20] sm:$0xff]
  %v20 = vld [vmem:[%s0 + $0x28] sm:$0xff]
  %v21 = vld [vmem:[%s0 + $0x30] sm:$0xff]
  %v22 = vld [vmem:[%s0 + $0x38] sm:$0xff]
  %v23 = vld [vmem:[%s0 + $0x40] sm:$0xff]
  %v24 = vld [vmem:[%s0 + $0x48] sm:$0xff]
  %v25 = vld [vmem:[%s0 + $0x50] sm:$0xff]
  %v26 = vld [vmem:[%s0 + $0x58] sm:$0xff]
  %v27 = vld [vmem:[%s0 + $0x60] sm:$0xff]
  %v28 = vld [vmem:[%s0 + $0x68] sm:$0xff]
  %v29 = vld [vmem:[%s0 + $0x70] sm:$0xff]
  %v30 = vld [vmem:[%s0 + $0x78] sm:$0xff]
  %v31 = vld [vmem:[%s0 + $0x80] sm:$0xff]
  %v32 = vld [vmem:[%s0 + $0x88] sm:$0xff]
  %v33 = vld [vmem:[%s0 + $0x90] sm:$0xff]
  %v34 = vld [vmem:[%s0 + $0x98] sm:$0xff]
  %v35 = vld [vmem:[%s0 + $0xa0] sm:$0xff]
  %v36 = vld [vmem:[%s0 + $0xa8] sm:$0xff]
  %v37 = vld [vmem:[%s0 + $0xb0] sm:$0xff]
  %v38 = vld [vmem:[%s0 + $0xb8] sm:$0xff]
  %v39 = vld [vmem:[%s0 + $0xc0] sm:$0xff]
  %v40 = vld [vmem:[%s0 + $0xc8] sm:$0xff]
  %v41 = vld [vmem:[%s0 + $0xd0] sm:$0xff]
  %v42 = vld [vmem:[%s0 + $0xd8] sm:$0xff]
  %v43 = vld [vmem:[%s0 + $0xe0] sm:$0xff]
  %v44 = vld [vmem:[%s0 + $0xe8] sm:$0xff]
  %v45 = vld [vmem:[%s0 + $0xf0] sm:$0x11]
  %v46 = vld [vmem:[%s1] sm:$0xf]
  %v47 = vld [vmem:[%s1 + $0x4] sm:$0xf]
  %v48 = vld [vmem:[%s1 + $0x8] sm:$0xf]
  %v49 = vld [vmem:[%s1 + $0xc] sm:$0xf]
  %v50 = vld [vmem:[%s1 + $0x10] sm:$0xf]
  %v51 = vld [vmem:[%s1 + $0x14] sm:$0xf]
  %v52 = vld [vmem:[%s1 + $0x18] sm:$0xf]
  %v53 = vld [vmem:[%s1 + $0x1c] sm:$0xf]
  %v54 = vld [vmem:[%s1 + $0x20] sm:$0xf]
  %v55 = vld [vmem:[%s1 + $0x24] sm:$0xf]
  %v56 = vld [vmem:[%s1 + $0x28] sm:$0xf]
  %v57 = vld [vmem:[%s1 + $0x2c] sm:$0xf]
  %v58 = vld [vmem:[%s1 + $0x30] sm:$0xf]
  %v59 = vld [vmem:[%s1 + $0x34] sm:$0xf]
  %v60 = vld [vmem:[%s1 + $0x38] sm:$0xf]
  %v61 = vld [vmem:[%s1 + $0x3c] sm:$0xf]
  %v62 = vld [vmem:[%s1 + $0x40] sm:$0xf]
  %v63 = vld [vmem:[%s1 + $0x44] sm:$0xf]
  %v64 = vld [vmem:[%s2] sm:$0x1]
  %v66 = vlaneseq
  %v67 = vshrl.u32 %v66, 7
  %v68 = vsub.s32 0, %v67
  %v69 = vrot.slane %v64, %v68
  %v102 = vunpack.c.l.b16 %v15
  %v103 = vunpack.c.h.b16 %v15
  %v104 = vunpack.c.l.b16 %v16
  %v105 = vunpack.c.h.b16 %v16
  %v106 = vunpack.c.l.b16 %v17
  %v107 = vunpack.c.h.b16 %v17
  %v108 = vunpack.c.l.b16 %v18
  %v109 = vunpack.c.h.b16 %v18
  %v110 = vunpack.c.l.b16 %v19
  %v111 = vunpack.c.h.b16 %v19
  %v112 = vunpack.c.l.b16 %v20
  %v113 = vunpack.c.h.b16 %v20
  %v114 = vunpack.c.l.b16 %v21
  %v115 = vunpack.c.h.b16 %v21
  %v116 = vunpack.c.l.b16 %v22
  %v117 = vunpack.c.h.b16 %v22
  %v118 = vunpack.c.l.b16 %v23
  %v119 = vunpack.c.h.b16 %v23
  %v120 = vunpack.c.l.b16 %v24
  %v121 = vunpack.c.h.b16 %v24
  %v122 = vunpack.c.l.b16 %v25
  %v123 = vunpack.c.h.b16 %v25
  %v124 = vunpack.c.l.b16 %v26
  %v125 = vunpack.c.h.b16 %v26
  %v126 = vunpack.c.l.b16 %v27
  %v127 = vunpack.c.h.b16 %v27
  %v128 = vunpack.c.l.b16 %v28
  %v129 = vunpack.c.h.b16 %v28
  %v130 = vunpack.c.l.b16 %v29
  %v131 = vunpack.c.h.b16 %v29
  %v132 = vunpack.c.l.b16 %v30
  %v133 = vunpack.c.h.b16 %v30
  %v134 = vunpack.c.l.b16 %v31
  %v135 = vunpack.c.h.b16 %v31
  %v136 = vunpack.c.l.b16 %v32
  %v137 = vunpack.c.h.b16 %v32
  %v138 = vunpack.c.l.b16 %v33
  %v139 = vunpack.c.h.b16 %v33
  %v140 = vunpack.c.l.b16 %v34
  %v141 = vunpack.c.h.b16 %v34
  %v142 = vunpack.c.l.b16 %v35
  %v143 = vunpack.c.h.b16 %v35
  %v144 = vunpack.c.l.b16 %v36
  %v145 = vunpack.c.h.b16 %v36
  %v146 = vunpack.c.l.b16 %v37
  %v147 = vunpack.c.h.b16 %v37
  %v148 = vunpack.c.l.b16 %v38
  %v149 = vunpack.c.h.b16 %v38
  %v150 = vunpack.c.l.b16 %v39
  %v151 = vunpack.c.h.b16 %v39
  %v152 = vunpack.c.l.b16 %v40
  %v153 = vunpack.c.h.b16 %v40
  %v154 = vunpack.c.l.b16 %v41
  %v155 = vunpack.c.h.b16 %v41
  %v156 = vunpack.c.l.b16 %v42
  %v157 = vunpack.c.h.b16 %v42
  %v158 = vunpack.c.l.b16 %v43
  %v159 = vunpack.c.h.b16 %v43
  %v160 = vunpack.c.l.b16 %v44
  %v161 = vunpack.c.h.b16 %v44
  %v162 = vunpack.c.l.b16 %v45
  %v163 = vunpack.c.h.b16 %v45
  %v164 = vpack.c.b16 %v104, %v102
  %v165 = vpack.c.b16 %v105, %v103
  %v166 = vpack.c.b16 %v108, %v106
  %v167 = vpack.c.b16 %v109, %v107
  %v168 = vpack.c.b16 %v112, %v110
  %v169 = vpack.c.b16 %v113, %v111
  %v170 = vpack.c.b16 %v116, %v114
  %v171 = vpack.c.b16 %v117, %v115
  %v172 = vpack.c.b16 %v120, %v118
  %v173 = vpack.c.b16 %v121, %v119
  %v174 = vpack.c.b16 %v124, %v122
  %v175 = vpack.c.b16 %v125, %v123
  %v176 = vpack.c.b16 %v128, %v126
  %v177 = vpack.c.b16 %v129, %v127
  %v178 = vpack.c.b16 %v132, %v130
  %v179 = vpack.c.b16 %v133, %v131
  %v180 = vpack.c.b16 %v136, %v134
  %v181 = vpack.c.b16 %v137, %v135
  %v182 = vpack.c.b16 %v140, %v138
  %v183 = vpack.c.b16 %v141, %v139
  %v184 = vpack.c.b16 %v144, %v142
  %v185 = vpack.c.b16 %v145, %v143
  %v186 = vpack.c.b16 %v148, %v146
  %v187 = vpack.c.b16 %v149, %v147
  %v188 = vpack.c.b16 %v152, %v150
  %v189 = vpack.c.b16 %v153, %v151
  %v190 = vpack.c.b16 %v156, %v154
  %v191 = vpack.c.b16 %v157, %v155
  %v192 = vpack.c.b16 %v160, %v158
  %v193 = vpack.c.b16 %v161, %v159
  %v194 = vpack.c.b16 %v162, %v162
  %v195 = vpack.c.b16 %v163, %v163
  %v230 = vunpack.c.l.b16 %v46
  %v231 = vunpack.c.l.b16 %v47
  %v232 = vunpack.c.l.b16 %v48
  %v233 = vunpack.c.l.b16 %v49
  %v234 = vunpack.c.l.b16 %v50
  %v235 = vunpack.c.l.b16 %v51
  %v236 = vunpack.c.l.b16 %v52
  %v237 = vunpack.c.l.b16 %v53
  %v238 = vunpack.c.l.b16 %v54
  %v239 = vunpack.c.l.b16 %v55
  %v240 = vunpack.c.l.b16 %v56
  %v241 = vunpack.c.l.b16 %v57
  %v242 = vunpack.c.l.b16 %v58
  %v243 = vunpack.c.l.b16 %v59
  %v244 = vunpack.c.l.b16 %v60
  %v245 = vunpack.c.l.b16 %v61
  %v246 = vunpack.c.l.b16 %v62
  %v247 = vunpack.c.l.b16 %v63
  %v248 = vpack.c.b16 %v231, %v230
  %v249 = vpack.c.b16 %v233, %v232
  %v250 = vpack.c.b16 %v235, %v234
  %v251 = vpack.c.b16 %v237, %v236
  %v252 = vpack.c.b16 %v239, %v238
  %v253 = vpack.c.b16 %v241, %v240
  %v254 = vpack.c.b16 %v243, %v242
  %v255 = vpack.c.b16 %v245, %v244
  %v256 = vpack.c.b16 %v247, %v246
  %vm266 = vcmask 130048
  %v268 = vsel %vm266, %v165, 0
  %v271 = vsel %vm266, %v167, 0
  %v274 = vsel %vm266, %v169, 0
  %v277 = vsel %vm266, %v171, 0
  %v280 = vsel %vm266, %v173, 0
  %v283 = vsel %vm266, %v175, 0
  %v286 = vsel %vm266, %v177, 0
  %v289 = vsel %vm266, %v179, 0
  %v292 = vsel %vm266, %v181, 0
  %v295 = vsel %vm266, %v183, 0
  %v298 = vsel %vm266, %v185, 0
  %v301 = vsel %vm266, %v187, 0
  %v304 = vsel %vm266, %v189, 0
  %v307 = vsel %vm266, %v191, 0
  %v310 = vsel %vm266, %v193, 0
  %v313 = vsel %vm266, %v195, 0
  %315 = vmatprep.subr.bf16.mxu0 0
  %316 = vmatpush1.bf16.msra.mxu0 %v248
  %317 = vmatprep.subr.bf16.mxu0 0
  %318 = vmatpush1.bf16.msra.mxu0 %v249
  %319 = vmatprep.subr.bf16.mxu0 0
  %320 = vmatpush1.bf16.msra.mxu0 %v250
  %321 = vmatprep.subr.bf16.mxu0 0
  %322 = vmatpush1.bf16.msra.mxu0 %v251
  %323 = vmatprep.subr.bf16.mxu0 0
  %324 = vmatpush1.bf16.msra.mxu0 %v252
  %325 = vmatprep.subr.bf16.mxu0 0
  %326 = vmatpush1.bf16.msra.mxu0 %v253
  %327 = vmatprep.subr.bf16.mxu0 0
  %328 = vmatpush1.bf16.msra.mxu0 %v254
  %329 = vmatprep.subr.bf16.mxu0 0
  %330 = vmatpush1.bf16.msra.mxu0 %v255
  %331 = vmatprep.subr.bf16.mxu0 0
  %332 = vmatpush1.bf16.msra.mxu0 %v256
  %333 = vmatprep.subr.bf16.mxu0 0
  %334 = vmatpush1.bf16.msra.mxu0 0
  %335 = vmatprep.subr.bf16.mxu0 0
  %336 = vmatpush1.bf16.msra.mxu0 0
  %337 = vmatprep.subr.bf16.mxu0 0
  %338 = vmatpush1.bf16.msra.mxu0 0
  %339 = vmatprep.subr.bf16.mxu0 0
  %340 = vmatpush1.bf16.msra.mxu0 0
  %341 = vmatprep.subr.bf16.mxu0 0
  %342 = vmatpush1.bf16.msra.mxu0 0
  %343 = vmatprep.subr.bf16.mxu0 0
  %344 = vmatpush1.bf16.msra.mxu0 0
  %345 = vmatprep.subr.bf16.mxu0 0
  %346 = vmatpush1.bf16.msra.mxu0 0
  %347 = vmatprep.mubr.bf16.mxu0 %v268
  %348 = vmatmul.mubr.bf16.gmra.mrb[0].mxu0 %v164
  %v349 = vpop.f32.mrb[0].mxu0
  %v350 = vadd.f32 %v69, %v349
  %v351 = vpop.f32.mrb[0].mxu0
  %v352 = vpop.f32.mrb[0].mxu0
  %v353 = vadd.f32 %v69, %v352
  %v354 = vpop.f32.mrb[0].mxu0
  %355 = vmatprep.mubr.bf16.mxu0 %v271
  %356 = vmatmul.mubr.bf16.gmra.mrb[0].mxu0 %v166
  %v357 = vpop.f32.mrb[0].mxu0
  %v358 = vadd.f32 %v69, %v357
  %v359 = vpop.f32.mrb[0].mxu0
  %v360 = vpop.f32.mrb[0].mxu0
  %v361 = vadd.f32 %v69, %v360
  %v362 = vpop.f32.mrb[0].mxu0
  %363 = vmatprep.mubr.bf16.mxu0 %v274
  %364 = vmatmul.mubr.bf16.gmra.mrb[0].mxu0 %v168
  %v365 = vpop.f32.mrb[0].mxu0
  %v366 = vadd.f32 %v69, %v365
  %v367 = vpop.f32.mrb[0].mxu0
  %v368 = vpop.f32.mrb[0].mxu0
  %v369 = vadd.f32 %v69, %v368
  %v370 = vpop.f32.mrb[0].mxu0
  %371 = vmatprep.mubr.bf16.mxu0 %v277
  %372 = vmatmul.mubr.bf16.gmra.mrb[0].mxu0 %v170
  %v373 = vpop.f32.mrb[0].mxu0
  %v374 = vadd.f32 %v69, %v373
  %v375 = vpop.f32.mrb[0].mxu0
  %v376 = vpop.f32.mrb[0].mxu0
  %v377 = vadd.f32 %v69, %v376
  %v378 = vpop.f32.mrb[0].mxu0
  %379 = vmatprep.mubr.bf16.mxu0 %v280
  %380 = vmatmul.mubr.bf16.gmra.mrb[0].mxu0 %v172
  %v381 = vpop.f32.mrb[0].mxu0
  %v382 = vadd.f32 %v69, %v381
  %v383 = vpop.f32.mrb[0].mxu0
  %v384 = vpop.f32.mrb[0].mxu0
  %v385 = vadd.f32 %v69, %v384
  %v386 = vpop.f32.mrb[0].mxu0
  %387 = vmatprep.mubr.bf16.mxu0 %v283
  %388 = vmatmul.mubr.bf16.gmra.mrb[0].mxu0 %v174
  %v389 = vpop.f32.mrb[0].mxu0
  %v390 = vadd.f32 %v69, %v389
  %v391 = vpop.f32.mrb[0].mxu0
  %v392 = vpop.f32.mrb[0].mxu0
  %v393 = vadd.f32 %v69, %v392
  %v394 = vpop.f32.mrb[0].mxu0
  %395 = vmatprep.mubr.bf16.mxu0 %v286
  %396 = vmatmul.mubr.bf16.gmra.mrb[0].mxu0 %v176
  %v397 = vpop.f32.mrb[0].mxu0
  %v398 = vadd.f32 %v69, %v397
  %v399 = vpop.f32.mrb[0].mxu0
  %v400 = vpop.f32.mrb[0].mxu0
  %v401 = vadd.f32 %v69, %v400
  %v402 = vpop.f32.mrb[0].mxu0
  %403 = vmatprep.mubr.bf16.mxu0 %v289
  %404 = vmatmul.mubr.bf16.gmra.mrb[0].mxu0 %v178
  %v405 = vpop.f32.mrb[0].mxu0
  %v406 = vadd.f32 %v69, %v405
  %v407 = vpop.f32.mrb[0].mxu0
  %v408 = vpop.f32.mrb[0].mxu0
  %v409 = vadd.f32 %v69, %v408
  %v410 = vpop.f32.mrb[0].mxu0
  %411 = vmatprep.mubr.bf16.mxu0 %v292
  %412 = vmatmul.mubr.bf16.gmra.mrb[0].mxu0 %v180
  %v413 = vpop.f32.mrb[0].mxu0
  %v414 = vadd.f32 %v69, %v413
  %v415 = vpop.f32.mrb[0].mxu0
  %v416 = vpop.f32.mrb[0].mxu0
  %v417 = vadd.f32 %v69, %v416
  %v418 = vpop.f32.mrb[0].mxu0
  %419 = vmatprep.mubr.bf16.mxu0 %v295
  %420 = vmatmul.mubr.bf16.gmra.mrb[0].mxu0 %v182
  %v421 = vpop.f32.mrb[0].mxu0
  %v422 = vadd.f32 %v69, %v421
  %v423 = vpop.f32.mrb[0].mxu0
  %v424 = vpop.f32.mrb[0].mxu0
  %v425 = vadd.f32 %v69, %v424
  %v426 = vpop.f32.mrb[0].mxu0
  %427 = vmatprep.mubr.bf16.mxu0 %v298
  %428 = vmatmul.mubr.bf16.gmra.mrb[0].mxu0 %v184
  %v429 = vpop.f32.mrb[0].mxu0
  %v430 = vadd.f32 %v69, %v429
  %v431 = vpop.f32.mrb[0].mxu0
  %v432 = vpop.f32.mrb[0].mxu0
  %v433 = vadd.f32 %v69, %v432
  %v434 = vpop.f32.mrb[0].mxu0
  %435 = vmatprep.mubr.bf16.mxu0 %v301
  %436 = vmatmul.mubr.bf16.gmra.mrb[0].mxu0 %v186
  %v437 = vpop.f32.mrb[0].mxu0
  %v438 = vadd.f32 %v69, %v437
  %v439 = vpop.f32.mrb[0].mxu0
  %v440 = vpop.f32.mrb[0].mxu0
  %v441 = vadd.f32 %v69, %v440
  %v442 = vpop.f32.mrb[0].mxu0
  %443 = vmatprep.mubr.bf16.mxu0 %v304
  %444 = vmatmul.mubr.bf16.gmra.mrb[0].mxu0 %v188
  %v445 = vpop.f32.mrb[0].mxu0
  %v446 = vadd.f32 %v69, %v445
  %v447 = vpop.f32.mrb[0].mxu0
  %v448 = vpop.f32.mrb[0].mxu0
  %v449 = vadd.f32 %v69, %v448
  %v450 = vpop.f32.mrb[0].mxu0
  %451 = vmatprep.mubr.bf16.mxu0 %v307
  %452 = vmatmul.mubr.bf16.gmra.mrb[0].mxu0 %v190
  %v453 = vpop.f32.mrb[0].mxu0
  %v454 = vadd.f32 %v69, %v453
  %v455 = vpop.f32.mrb[0].mxu0
  %v456 = vpop.f32.mrb[0].mxu0
  %v457 = vadd.f32 %v69, %v456
  %v458 = vpop.f32.mrb[0].mxu0
  %459 = vmatprep.mubr.bf16.mxu0 %v310
  %460 = vmatmul.mubr.bf16.gmra.mrb[0].mxu0 %v192
  %v461 = vpop.f32.mrb[0].mxu0
  %v462 = vadd.f32 %v69, %v461
  %v463 = vpop.f32.mrb[0].mxu0
  %v464 = vpop.f32.mrb[0].mxu0
  %v465 = vadd.f32 %v69, %v464
  %v466 = vpop.f32.mrb[0].mxu0
  %467 = vmatprep.mubr.bf16.mxu0 %v313
  %468 = vmatmul.mubr.bf16.gmra.mrb[0].mxu0 %v194
  %v469 = vpop.f32.mrb[0].mxu0
  %v470 = vadd.f32 %v69, %v469
  %v471 = vpop.f32.mrb[0].mxu0
  %v472 = vpop.f32.mrb[0].mxu0
  %v473 = vpop.f32.mrb[0].mxu0
  %474 = vdwg.mxu0
  %v475 = vmax.f32 %v350, 0.0
  %v476 = vmax.f32 %v353, 0.0
  %v477 = vmax.f32 %v358, 0.0
  %v478 = vmax.f32 %v361, 0.0
  %v479 = vmax.f32 %v366, 0.0
  %v480 = vmax.f32 %v369, 0.0
  %v481 = vmax.f32 %v374, 0.0
  %v482 = vmax.f32 %v377, 0.0
  %v483 = vmax.f32 %v382, 0.0
  %v484 = vmax.f32 %v385, 0.0
  %v485 = vmax.f32 %v390, 0.0
  %v486 = vmax.f32 %v393, 0.0
  %v487 = vmax.f32 %v398, 0.0
  %v488 = vmax.f32 %v401, 0.0
  %v489 = vmax.f32 %v406, 0.0
  %v490 = vmax.f32 %v409, 0.0
  %v491 = vmax.f32 %v414, 0.0
  %v492 = vmax.f32 %v417, 0.0
  %v493 = vmax.f32 %v422, 0.0
  %v494 = vmax.f32 %v425, 0.0
  %v495 = vmax.f32 %v430, 0.0
  %v496 = vmax.f32 %v433, 0.0
  %v497 = vmax.f32 %v438, 0.0
  %v498 = vmax.f32 %v441, 0.0
  %v499 = vmax.f32 %v446, 0.0
  %v500 = vmax.f32 %v449, 0.0
  %v501 = vmax.f32 %v454, 0.0
  %v502 = vmax.f32 %v457, 0.0
  %v503 = vmax.f32 %v462, 0.0
  %v504 = vmax.f32 %v465, 0.0
  %v505 = vmax.f32 %v470, 0.0
  %v506 = vpack.c.bf16 %v476, %v475
  %v507 = vpack.c.bf16 %v478, %v477
  %v508 = vpack.c.bf16 %v480, %v479
  %v509 = vpack.c.bf16 %v482, %v481
  %v510 = vpack.c.bf16 %v484, %v483
  %v511 = vpack.c.bf16 %v486, %v485
  %v512 = vpack.c.bf16 %v488, %v487
  %v513 = vpack.c.bf16 %v490, %v489
  %v514 = vpack.c.bf16 %v492, %v491
  %v515 = vpack.c.bf16 %v494, %v493
  %v516 = vpack.c.bf16 %v496, %v495
  %v517 = vpack.c.bf16 %v498, %v497
  %v518 = vpack.c.bf16 %v500, %v499
  %v519 = vpack.c.bf16 %v502, %v501
  %v520 = vpack.c.bf16 %v504, %v503
  %v521 = vpack.c.bf16 %v505, %v505
  %v538 = vunpack.c.l.b16 %v506
  %v539 = vunpack.c.h.b16 %v506
  %v540 = vunpack.c.l.b16 %v507
  %v541 = vunpack.c.h.b16 %v507
  %v542 = vunpack.c.l.b16 %v508
  %v543 = vunpack.c.h.b16 %v508
  %v544 = vunpack.c.l.b16 %v509
  %v545 = vunpack.c.h.b16 %v509
  %v546 = vunpack.c.l.b16 %v510
  %v547 = vunpack.c.h.b16 %v510
  %v548 = vunpack.c.l.b16 %v511
  %v549 = vunpack.c.h.b16 %v511
  %v550 = vunpack.c.l.b16 %v512
  %v551 = vunpack.c.h.b16 %v512
  %v552 = vunpack.c.l.b16 %v513
  %v553 = vunpack.c.h.b16 %v513
  %v554 = vunpack.c.l.b16 %v514
  %v555 = vunpack.c.h.b16 %v514
  %v556 = vunpack.c.l.b16 %v515
  %v557 = vunpack.c.h.b16 %v515
  %v558 = vunpack.c.l.b16 %v516
  %v559 = vunpack.c.h.b16 %v516
  %v560 = vunpack.c.l.b16 %v517
  %v561 = vunpack.c.h.b16 %v517
  %v562 = vunpack.c.l.b16 %v518
  %v563 = vunpack.c.h.b16 %v518
  %v564 = vunpack.c.l.b16 %v519
  %v565 = vunpack.c.h.b16 %v519
  %v566 = vunpack.c.l.b16 %v520
  %v567 = vunpack.c.h.b16 %v520
  %v568 = vunpack.c.l.b16 %v521
  %v569 = vpack.c.b16 %v538, %v538
  %v570 = vpack.c.b16 %v539, %v539
  %v571 = vpack.c.b16 %v540, %v540
  %v572 = vpack.c.b16 %v541, %v541
  %v573 = vpack.c.b16 %v542, %v542
  %v574 = vpack.c.b16 %v543, %v543
  %v575 = vpack.c.b16 %v544, %v544
  %v576 = vpack.c.b16 %v545, %v545
  %v577 = vpack.c.b16 %v546, %v546
  %v578 = vpack.c.b16 %v547, %v547
  %v579 = vpack.c.b16 %v548, %v548
  %v580 = vpack.c.b16 %v549, %v549
  %v581 = vpack.c.b16 %v550, %v550
  %v582 = vpack.c.b16 %v551, %v551
  %v583 = vpack.c.b16 %v552, %v552
  %v584 = vpack.c.b16 %v553, %v553
  %v585 = vpack.c.b16 %v554, %v554
  %v586 = vpack.c.b16 %v555, %v555
  %v587 = vpack.c.b16 %v556, %v556
  %v588 = vpack.c.b16 %v557, %v557
  %v589 = vpack.c.b16 %v558, %v558
  %v590 = vpack.c.b16 %v559, %v559
  %v591 = vpack.c.b16 %v560, %v560
  %v592 = vpack.c.b16 %v561, %v561
  %v593 = vpack.c.b16 %v562, %v562
  %v594 = vpack.c.b16 %v563, %v563
  %v595 = vpack.c.b16 %v564, %v564
  %v596 = vpack.c.b16 %v565, %v565
  %v597 = vpack.c.b16 %v566, %v566
  %v598 = vpack.c.b16 %v567, %v567
  %v599 = vpack.c.b16 %v568, %v568
  %vm631 = vcmask 257024
  %632 = vst.msk [vmem:[%s3] sm:$0xf] %vm631, %v569
  %633 = vst.msk [vmem:[%s3 + $0x4] sm:$0xf] %vm631, %v570
  %634 = vst.msk [vmem:[%s3 + $0x8] sm:$0xf] %vm631, %v571
  %635 = vst.msk [vmem:[%s3 + $0xc] sm:$0xf] %vm631, %v572
  %636 = vst.msk [vmem:[%s3 + $0x10] sm:$0xf] %vm631, %v573
  %637 = vst.msk [vmem:[%s3 + $0x14] sm:$0xf] %vm631, %v574
  %638 = vst.msk [vmem:[%s3 + $0x18] sm:$0xf] %vm631, %v575
  %639 = vst.msk [vmem:[%s3 + $0x1c] sm:$0xf] %vm631, %v576
  %640 = vst.msk [vmem:[%s3 + $0x20] sm:$0xf] %vm631, %v577
  %641 = vst.msk [vmem:[%s3 + $0x24] sm:$0xf] %vm631, %v578
  %642 = vst.msk [vmem:[%s3 + $0x28] sm:$0xf] %vm631, %v579
  %643 = vst.msk [vmem:[%s3 + $0x2c] sm:$0xf] %vm631, %v580
  %644 = vst.msk [vmem:[%s3 + $0x30] sm:$0xf] %vm631, %v581
  %645 = vst.msk [vmem:[%s3 + $0x34] sm:$0xf] %vm631, %v582
  %646 = vst.msk [vmem:[%s3 + $0x38] sm:$0xf] %vm631, %v583
  %647 = vst.msk [vmem:[%s3 + $0x3c] sm:$0xf] %vm631, %v584
  %648 = vst.msk [vmem:[%s3 + $0x40] sm:$0xf] %vm631, %v585
  %649 = vst.msk [vmem:[%s3 + $0x44] sm:$0xf] %vm631, %v586
  %650 = vst.msk [vmem:[%s3 + $0x48] sm:$0xf] %vm631, %v587
  %651 = vst.msk [vmem:[%s3 + $0x4c] sm:$0xf] %vm631, %v588
  %652 = vst.msk [vmem:[%s3 + $0x50] sm:$0xf] %vm631, %v589
  %653 = vst.msk [vmem:[%s3 + $0x54] sm:$0xf] %vm631, %v590
  %654 = vst.msk [vmem:[%s3 + $0x58] sm:$0xf] %vm631, %v591
  %655 = vst.msk [vmem:[%s3 + $0x5c] sm:$0xf] %vm631, %v592
  %656 = vst.msk [vmem:[%s3 + $0x60] sm:$0xf] %vm631, %v593
  %657 = vst.msk [vmem:[%s3 + $0x64] sm:$0xf] %vm631, %v594
  %658 = vst.msk [vmem:[%s3 + $0x68] sm:$0xf] %vm631, %v595
  %659 = vst.msk [vmem:[%s3 + $0x6c] sm:$0xf] %vm631, %v596
  %660 = vst.msk [vmem:[%s3 + $0x70] sm:$0xf] %vm631, %v597
  %661 = vst.msk [vmem:[%s3 + $0x74] sm:$0xf] %vm631, %v598
  %vm662 = vcmask 253952
  %663 = vst.msk [vmem:[%s3 + $0x78] sm:$0x1] %vm662, %v599
  // Predicated region
  $region14: #{net_forward.7} parent=0 // pred_check
    _
  $region15: #{net_forward.7} parent=0 // pred_check_branch
    %665 = sbr.rel (0) target = $region17
  $region16: #{net_forward.7} parent=0 // pred_region
    _
  $region17: #{net_forward.7} parent=0 // pred_fallthru
    _
  // Predicated region
  $region18: #{net_forward.7} parent=0 // pred_check
    _
  $region19: #{net_forward.7} parent=0 // pred_check_branch
    %667 = sbr.rel (0) target = $region21
  $region20: #{net_forward.7} parent=0 // pred_region
    _
  $region21: #{net_forward.7} parent=0 // pred_fallthru
    _

// kernel: net_forward.8
$region0: #{net_forward.8}
  #allocation0 [shape = 'u32[]', space=smem, size = 0x4, offset = 0x4, fixed_abs, tag = 'smem constant byte address 0x4 - core index']
  #allocation1 [shape = 'u32[144,128]{1,0:T(1,128)}', space=vmem, size = 0x12000, scoped, tag = 'internal scratch']
  %s0 = inlined_call_operand.vmem [shape: bf16[50,288], index: 0, kind: input, shape index: {}]
  %s1 = inlined_call_operand.vmem [shape: bf16[288,64], index: 1, kind: input, shape index: {}]
  %s2 = inlined_call_operand.vmem [shape: f32[1,64], index: 2, kind: input, shape index: {}]
  %s3 = inlined_call_operand.vmem [shape: bf16[50,64], index: 3, kind: output, shape index: {}]
  %s4 = sld [smem:[#allocation0]]
  $region22: #{net_forward.8} parent=0
    _
  %s6 = ssub.s32 1, %s4
  %s7 = scalar_select 0, %s6, %s4
  // Predicated region
  $region2: #{net_forward.8} parent=0 // pred_check
    _
  $region3: #{net_forward.8} parent=0 // pred_check_branch
    %9 = sbr.rel (0) target = $region5
  $region4: #{net_forward.8} parent=0 // pred_region
    _
  $region5: #{net_forward.8} parent=0 // pred_fallthru
    _
  // Predicated region
  $region6: #{net_forward.8} parent=0 // pred_check
    _
  $region7: #{net_forward.8} parent=0 // pred_check_branch
    %11 = sbr.rel (0) target = $region9
  $region8: #{net_forward.8} parent=0 // pred_region
    _
  $region9: #{net_forward.8} parent=0 // pred_fallthru
    _
  // Predicated region
  $region10: #{net_forward.8} parent=0 // pred_check
    _
  $region11: #{net_forward.8} parent=0 // pred_check_branch
    %13 = sbr.rel (0) target = $region13
  $region12: #{net_forward.8} parent=0 // pred_region
    _
  $region13: #{net_forward.8} parent=0 // pred_fallthru
    _
  %v15 = vld [vmem:[%s0] sm:$0xff]
  %v16 = vld [vmem:[%s0 + $0x8] sm:$0xf]
  %v17 = vld [vmem:[%s0 + $0xc] sm:$0xff]
  %v18 = vld [vmem:[%s0 + $0x14] sm:$0xf]
  %v19 = vld [vmem:[%s0 + $0x18] sm:$0xff]
  %v20 = vld [vmem:[%s0 + $0x20] sm:$0xf]
  %v21 = vld [vmem:[%s0 + $0x24] sm:$0xff]
  %v22 = vld [vmem:[%s0 + $0x2c] sm:$0xf]
  %v23 = vld [vmem:[%s0 + $0x30] sm:$0xff]
  %v24 = vld [vmem:[%s0 + $0x38] sm:$0xf]
  %v25 = vld [vmem:[%s0 + $0x3c] sm:$0xff]
  %v26 = vld [vmem:[%s0 + $0x44] sm:$0xf]
  %v27 = vld [vmem:[%s0 + $0x48] sm:$0x11]
  %v28 = vld [vmem:[%s0 + $0x50] sm:$0x1]
  %v29 = vld [vmem:[%s1] sm:$0xf]
  %v30 = vld [vmem:[%s1 + $0x4] sm:$0xf]
  %v31 = vld [vmem:[%s1 + $0x8] sm:$0xf]
  %v32 = vld [vmem:[%s1 + $0xc] sm:$0xf]
  %v33 = vld [vmem:[%s1 + $0x10] sm:$0xf]
  %v34 = vld [vmem:[%s1 + $0x14] sm:$0xf]
  %v35 = vld [vmem:[%s1 + $0x18] sm:$0xf]
  %v36 = vld [vmem:[%s1 + $0x1c] sm:$0xf]
  %v37 = vld [vmem:[%s1 + $0x20] sm:$0xf]
  %v38 = vld [vmem:[%s1 + $0x24] sm:$0xf]
  %v39 = vld [vmem:[%s1 + $0x28] sm:$0xf]
  %v40 = vld [vmem:[%s1 + $0x2c] sm:$0xf]
  %v41 = vld [vmem:[%s1 + $0x30] sm:$0xf]
  %v42 = vld [vmem:[%s1 + $0x34] sm:$0xf]
  %v43 = vld [vmem:[%s1 + $0x38] sm:$0xf]
  %v44 = vld [vmem:[%s1 + $0x3c] sm:$0xf]
  %v45 = vld [vmem:[%s1 + $0x40] sm:$0xf]
  %v46 = vld [vmem:[%s1 + $0x44] sm:$0xf]
  %v47 = vld [vmem:[%s1 + $0x48] sm:$0xf]
  %v48 = vld [vmem:[%s1 + $0x4c] sm:$0xf]
  %v49 = vld [vmem:[%s1 + $0x50] sm:$0xf]
  %v50 = vld [vmem:[%s1 + $0x54] sm:$0xf]
  %v51 = vld [vmem:[%s1 + $0x58] sm:$0xf]
  %v52 = vld [vmem:[%s1 + $0x5c] sm:$0xf]
  %v53 = vld [vmem:[%s1 + $0x60] sm:$0xf]
  %v54 = vld [vmem:[%s1 + $0x64] sm:$0xf]
  %v55 = vld [vmem:[%s1 + $0x68] sm:$0xf]
  %v56 = vld [vmem:[%s1 + $0x6c] sm:$0xf]
  %v57 = vld [vmem:[%s1 + $0x70] sm:$0xf]
  %v58 = vld [vmem:[%s1 + $0x74] sm:$0xf]
  %v59 = vld [vmem:[%s1 + $0x78] sm:$0xf]
  %v60 = vld [vmem:[%s1 + $0x7c] sm:$0xf]
  %v61 = vld [vmem:[%s1 + $0x80] sm:$0xf]
  %v62 = vld [vmem:[%s1 + $0x84] sm:$0xf]
  %v63 = vld [vmem:[%s1 + $0x88] sm:$0xf]
  %v64 = vld [vmem:[%s1 + $0x8c] sm:$0xf]
  %v65 = vld [vmem:[%s2] sm:$0x1]
  %v67 = vlaneseq
  %v68 = vshrl.u32 %v67, 7
  %v69 = vsub.s32 0, %v68
  %v70 = vrot.slane %v65, %v69
  %v86 = vunpack.c.l.b16 %v15
  %v87 = vunpack.c.h.b16 %v15
  %v88 = vunpack.c.l.b16 %v16
  %v89 = vunpack.c.l.b16 %v17
  %v90 = vunpack.c.h.b16 %v17
  %v91 = vunpack.c.l.b16 %v18
  %v92 = vunpack.c.l.b16 %v19
  %v93 = vunpack.c.h.b16 %v19
  %v94 = vunpack.c.l.b16 %v20
  %v95 = vunpack.c.l.b16 %v21
  %v96 = vunpack.c.h.b16 %v21
  %v97 = vunpack.c.l.b16 %v22
  %v98 = vunpack.c.l.b16 %v23
  %v99 = vunpack.c.h.b16 %v23
  %v100 = vunpack.c.l.b16 %v24
  %v101 = vunpack.c.l.b16 %v25
  %v102 = vunpack.c.h.b16 %v25
  %v103 = vunpack.c.l.b16 %v26
  %v104 = vunpack.c.l.b16 %v27
  %v105 = vunpack.c.h.b16 %v27
  %v106 = vunpack.c.l.b16 %v28
  %v107 = vpack.c.b16 %v89, %v86
  %v108 = vpack.c.b16 %v90, %v87
  %v109 = vpack.c.b16 %v91, %v88
  %v110 = vpack.c.b16 %v95, %v92
  %v111 = vpack.c.b16 %v96, %v93
  %v112 = vpack.c.b16 %v97, %v94
  %v113 = vpack.c.b16 %v101, %v98
  %v114 = vpack.c.b16 %v102, %v99
  %v115 = vpack.c.b16 %v103, %v100
  %v116 = vpack.c.b16 %v104, %v104
  %v117 = vpack.c.b16 %v105, %v105
  %v118 = vpack.c.b16 %v106, %v106
  %v163 = vunpack.c.l.b16 %v29
  %v164 = vunpack.c.l.b16 %v30
  %v165 = vunpack.c.l.b16 %v31
  %v166 = vunpack.c.l.b16 %v32
  %v167 = vunpack.c.l.b16 %v33
  %v168 = vunpack.c.l.b16 %v34
  %v169 = vunpack.c.l.b16 %v35
  %v170 = vunpack.c.l.b16 %v36
  %v171 = vunpack.c.l.b16 %v37
  %v172 = vunpack.c.l.b16 %v38
  %v173 = vunpack.c.l.b16 %v39
  %v174 = vunpack.c.l.b16 %v40
  %v175 = vunpack.c.l.b16 %v41
  %v176 = vunpack.c.l.b16 %v42
  %v177 = vunpack.c.l.b16 %v43
  %v178 = vunpack.c.l.b16 %v44
  %v179 = vunpack.c.l.b16 %v45
  %v180 = vunpack.c.l.b16 %v46
  %v181 = vunpack.c.l.b16 %v47
  %v182 = vunpack.c.l.b16 %v48
  %v183 = vunpack.c.l.b16 %v49
  %v184 = vunpack.c.l.b16 %v50
  %v185 = vunpack.c.l.b16 %v51
  %v186 = vunpack.c.l.b16 %v52
  %v187 = vunpack.c.l.b16 %v53
  %v188 = vunpack.c.l.b16 %v54
  %v189 = vunpack.c.l.b16 %v55
  %v190 = vunpack.c.l.b16 %v56
  %v191 = vunpack.c.l.b16 %v57
  %v192 = vunpack.c.l.b16 %v58
  %v193 = vunpack.c.l.b16 %v59
  %v194 = vunpack.c.l.b16 %v60
  %v195 = vunpack.c.l.b16 %v61
  %v196 = vunpack.c.l.b16 %v62
  %v197 = vunpack.c.l.b16 %v63
  %v198 = vunpack.c.l.b16 %v64
  %v199 = vpack.c.b16 %v164, %v163
  %v200 = vpack.c.b16 %v166, %v165
  %v201 = vpack.c.b16 %v168, %v167
  %v202 = vpack.c.b16 %v170, %v169
  %v203 = vpack.c.b16 %v172, %v171
  %v204 = vpack.c.b16 %v174, %v173
  %v205 = vpack.c.b16 %v176, %v175
  %v206 = vpack.c.b16 %v178, %v177
  %v207 = vpack.c.b16 %v180, %v179
  %v208 = vpack.c.b16 %v182, %v181
  %v209 = vpack.c.b16 %v184, %v183
  %v210 = vpack.c.b16 %v186, %v185
  %v211 = vpack.c.b16 %v188, %v187
  %v212 = vpack.c.b16 %v190, %v189
  %v213 = vpack.c.b16 %v192, %v191
  %v214 = vpack.c.b16 %v194, %v193
  %v215 = vpack.c.b16 %v196, %v195
  %v216 = vpack.c.b16 %v198, %v197
  %vm235 = vcmask 261120
  %v237 = vsel %vm235, %v109, 0
  %v240 = vsel %vm235, %v112, 0
  %v243 = vsel %vm235, %v115, 0
  %v246 = vsel %vm235, %v118, 0
  %248 = vmatprep.subr.bf16.mxu0 0
  %249 = vmatpush1.bf16.msra.mxu0 %v199
  %250 = vmatprep.subr.bf16.mxu0 0
  %251 = vmatpush1.bf16.msra.mxu0 %v200
  %252 = vmatprep.subr.bf16.mxu0 0
  %253 = vmatpush1.bf16.msra.mxu0 %v201
  %254 = vmatprep.subr.bf16.mxu0 0
  %255 = vmatpush1.bf16.msra.mxu0 %v202
  %256 = vmatprep.subr.bf16.mxu0 0
  %257 = vmatpush1.bf16.msra.mxu0 %v203
  %258 = vmatprep.subr.bf16.mxu0 0
  %259 = vmatpush1.bf16.msra.mxu0 %v204
  %260 = vmatprep.subr.bf16.mxu0 0
  %261 = vmatpush1.bf16.msra.mxu0 %v205
  %262 = vmatprep.subr.bf16.mxu0 0
  %263 = vmatpush1.bf16.msra.mxu0 %v206
  %264 = vmatprep.subr.bf16.mxu0 0
  %265 = vmatpush1.bf16.msra.mxu0 %v207
  %266 = vmatprep.subr.bf16.mxu0 0
  %267 = vmatpush1.bf16.msra.mxu0 %v208
  %268 = vmatprep.subr.bf16.mxu0 0
  %269 = vmatpush1.bf16.msra.mxu0 %v209
  %270 = vmatprep.subr.bf16.mxu0 0
  %271 = vmatpush1.bf16.msra.mxu0 %v210
  %272 = vmatprep.subr.bf16.mxu0 0
  %273 = vmatpush1.bf16.msra.mxu0 %v211
  %274 = vmatprep.subr.bf16.mxu0 0
  %275 = vmatpush1.bf16.msra.mxu0 %v212
  %276 = vmatprep.subr.bf16.mxu0 0
  %277 = vmatpush1.bf16.msra.mxu0 %v213
  %278 = vmatprep.subr.bf16.mxu0 0
  %279 = vmatpush1.bf16.msra.mxu0 %v214
  %280 = vmatprep.mubr.bf16.mxu0 %v108
  %281 = vmatmul.mubr.bf16.gmra.mrb[0].mxu0 %v107
  %v282 = vpop.f32.mrb[0].mxu0
  %v283 = vadd.f32 %v70, %v282
  %v284 = vpop.f32.mrb[0].mxu0
  %v285 = vpop.f32.mrb[0].mxu0
  %v286 = vadd.f32 %v70, %v285
  %v287 = vpop.f32.mrb[0].mxu0
  %288 = vmatprep.mubr.bf16.mxu0 %v111
  %289 = vmatmul.mubr.bf16.gmra.mrb[0].mxu0 %v110
  %v290 = vpop.f32.mrb[0].mxu0
  %v291 = vadd.f32 %v70, %v290
  %v292 = vpop.f32.mrb[0].mxu0
  %v293 = vpop.f32.mrb[0].mxu0
  %v294 = vadd.f32 %v70, %v293
  %v295 = vpop.f32.mrb[0].mxu0
  %296 = vmatprep.mubr.bf16.mxu0 %v114
  %297 = vmatmul.mubr.bf16.gmra.mrb[0].mxu0 %v113
  %v298 = vpop.f32.mrb[0].mxu0
  %v299 = vadd.f32 %v70, %v298
  %v300 = vpop.f32.mrb[0].mxu0
  %v301 = vpop.f32.mrb[0].mxu0
  %v302 = vadd.f32 %v70, %v301
  %v303 = vpop.f32.mrb[0].mxu0
  %304 = vmatprep.mubr.bf16.mxu0 %v117
  %305 = vmatmul.mubr.bf16.gmra.mrb[0].mxu0 %v116
  %v306 = vpop.f32.mrb[0].mxu0
  %v307 = vadd.f32 %v70, %v306
  %v308 = vpop.f32.mrb[0].mxu0
  %v309 = vpop.f32.mrb[0].mxu0
  %v310 = vpop.f32.mrb[0].mxu0
  %311 = vdwg.mxu0
  %312 = vmatprep.subr.bf16.mxu0 0
  %313 = vmatpush1.bf16.msra.mxu0 %v215
  %314 = vmatprep.subr.bf16.mxu0 0
  %315 = vmatpush1.bf16.msra.mxu0 %v216
  %316 = vmatprep.subr.bf16.mxu0 0
  %317 = vmatpush1.bf16.msra.mxu0 0
  %318 = vmatprep.subr.bf16.mxu0 0
  %319 = vmatpush1.bf16.msra.mxu0 0
  %320 = vmatprep.subr.bf16.mxu0 0
  %321 = vmatpush1.bf16.msra.mxu0 0
  %322 = vmatprep.subr.bf16.mxu0 0
  %323 = vmatpush1.bf16.msra.mxu0 0
  %324 = vmatprep.subr.bf16.mxu0 0
  %325 = vmatpush1.bf16.msra.mxu0 0
  %326 = vmatprep.subr.bf16.mxu0 0
  %327 = vmatpush1.bf16.msra.mxu0 0
  %328 = vmatprep.subr.bf16.mxu0 0
  %329 = vmatpush1.bf16.msra.mxu0 0
  %330 = vmatprep.subr.bf16.mxu0 0
  %331 = vmatpush1.bf16.msra.mxu0 0
  %332 = vmatprep.subr.bf16.mxu0 0
  %333 = vmatpush1.bf16.msra.mxu0 0
  %334 = vmatprep.subr.bf16.mxu0 0
  %335 = vmatpush1.bf16.msra.mxu0 0
  %336 = vmatprep.subr.bf16.mxu0 0
  %337 = vmatpush1.bf16.msra.mxu0 0
  %338 = vmatprep.subr.bf16.mxu0 0
  %339 = vmatpush1.bf16.msra.mxu0 0
  %340 = vmatprep.subr.bf16.mxu0 0
  %341 = vmatpush1.bf16.msra.mxu0 0
  %342 = vmatprep.subr.bf16.mxu0 0
  %343 = vmatpush1.bf16.msra.mxu0 0
  %344 = vmatprep.mubr.bf16.mxu0 0
  %345 = vmatmul.mubr.bf16.gmra.mrb[0].mxu0 %v237
  %v346 = vpop.f32.mrb[0].mxu0
  %v347 = vadd.f32 %v283, %v346
  %v348 = vpop.f32.mrb[0].mxu0
  %v349 = vpop.f32.mrb[0].mxu0
  %v350 = vadd.f32 %v286, %v349
  %v351 = vpop.f32.mrb[0].mxu0
  %352 = vmatprep.mubr.bf16.mxu0 0
  %353 = vmatmul.mubr.bf16.gmra.mrb[0].mxu0 %v240
  %v354 = vpop.f32.mrb[0].mxu0
  %v355 = vadd.f32 %v291, %v354
  %v356 = vpop.f32.mrb[0].mxu0
  %v357 = vpop.f32.mrb[0].mxu0
  %v358 = vadd.f32 %v294, %v357
  %v359 = vpop.f32.mrb[0].mxu0
  %360 = vmatprep.mubr.bf16.mxu0 0
  %361 = vmatmul.mubr.bf16.gmra.mrb[0].mxu0 %v243
  %v362 = vpop.f32.mrb[0].mxu0
  %v363 = vadd.f32 %v299, %v362
  %v364 = vpop.f32.mrb[0].mxu0
  %v365 = vpop.f32.mrb[0].mxu0
  %v366 = vadd.f32 %v302, %v365
  %v367 = vpop.f32.mrb[0].mxu0
  %368 = vmatprep.mubr.bf16.mxu0 0
  %369 = vmatmul.mubr.bf16.gmra.mrb[0].mxu0 %v246
  %v370 = vpop.f32.mrb[0].mxu0
  %v371 = vadd.f32 %v307, %v370
  %v372 = vpop.f32.mrb[0].mxu0
  %v373 = vpop.f32.mrb[0].mxu0
  %v374 = vpop.f32.mrb[0].mxu0
  %375 = vdwg.mxu0
  %v376 = vmax.f32 %v347, 0.0
  %v377 = vmax.f32 %v350, 0.0
  %v378 = vmax.f32 %v355, 0.0
  %v379 = vmax.f32 %v358, 0.0
  %v380 = vmax.f32 %v363, 0.0
  %v381 = vmax.f32 %v366, 0.0
  %v382 = vmax.f32 %v371, 0.0
  %v383 = vpack.c.bf16 %v377, %v376
  %v384 = vpack.c.bf16 %v379, %v378
  %v385 = vpack.c.bf16 %v381, %v380
  %v386 = vpack.c.bf16 %v382, %v382
  %v391 = vunpack.c.l.b16 %v383
  %v392 = vunpack.c.h.b16 %v383
  %v393 = vunpack.c.l.b16 %v384
  %v394 = vunpack.c.h.b16 %v384
  %v395 = vunpack.c.l.b16 %v385
  %v396 = vunpack.c.h.b16 %v385
  %v397 = vunpack.c.l.b16 %v386
  %v398 = vpack.c.b16 %v391, %v391
  %v399 = vpack.c.b16 %v392, %v392
  %v400 = vpack.c.b16 %v393, %v393
  %v401 = vpack.c.b16 %v394, %v394
  %v402 = vpack.c.b16 %v395, %v395
  %v403 = vpack.c.b16 %v396, %v396
  %v404 = vpack.c.b16 %v397, %v397
  %vm412 = vcmask 519168
  %413 = vst.msk [vmem:[%s3] sm:$0xf] %vm412, %v398
  %414 = vst.msk [vmem:[%s3 + $0x4] sm:$0xf] %vm412, %v399
  %415 = vst.msk [vmem:[%s3 + $0x8] sm:$0xf] %vm412, %v400
  %416 = vst.msk [vmem:[%s3 + $0xc] sm:$0xf] %vm412, %v401
  %417 = vst.msk [vmem:[%s3 + $0x10] sm:$0xf] %vm412, %v402
  %418 = vst.msk [vmem:[%s3 + $0x14] sm:$0xf] %vm412, %v403
  %vm419 = vcmask 516096
  %420 = vst.msk [vmem:[%s3 + $0x18] sm:$0x1] %vm419, %v404
  // Predicated region
  $region14: #{net_forward.8} parent=0 // pred_check
    _
  $region15: #{net_forward.8} parent=0 // pred_check_branch
    %422 = sbr.rel (0) target = $region17
  $region16: #{net_forward.8} parent=0 // pred_region
    _
  $region17: #{net_forward.8} parent=0 // pred_fallthru
    _
  // Predicated region
  $region18: #{net_forward.8} parent=0 // pred_check
    _
  $region19: #{net_forward.8} parent=0 // pred_check_branch
    %424 = sbr.rel (0) target = $region21
  $region20: #{net_forward.8} parent=0 // pred_region
    _
  $region21: #{net_forward.8} parent=0 // pred_fallthru
    _

// kernel: net_forward.9
$region0: #{net_forward.9}
  #allocation0 [shape = 'u32[]', space=smem, size = 0x4, offset = 0x4, fixed_abs, tag = 'smem constant byte address 0x4 - core index']
  #allocation1 [shape = 'u32[144,128]{1,0:T(1,128)}', space=vmem, size = 0x12000, scoped, tag = 'internal scratch']
  #allocation2 [shape = 'bf16[2,1152]{1,0:T(2,128)(2,1)}', space=vmem, size = 0x1200, scoped, tag = 'scratch operand']
  %s0 = inlined_call_operand.vmem [shape: bf16[18,576], index: 0, kind: input, shape index: {}]
  %s1 = inlined_call_operand.vmem [shape: bf16[576,128], index: 1, kind: input, shape index: {}]
  %s2 = inlined_call_operand.vmem [shape: f32[1,128], index: 2, kind: input, shape index: {}]
  %s3 = inlined_call_operand.vmem [shape: bf16[1152,256], index: 3, kind: input, shape index: {}]
  %s4 = inlined_call_operand.vmem [shape: f32[1,256], index: 4, kind: input, shape index: {}]
  %s5 = inlined_call_operand.vmem [shape: bf16[256,256], index: 5, kind: input, shape index: {}]
  %s6 = inlined_call_operand.vmem [shape: f32[1,256], index: 6, kind: input, shape index: {}]
  %s7 = inlined_call_operand.vmem [shape: bf16[256,8], index: 7, kind: input, shape index: {}]
  %s8 = inlined_call_operand.vmem [shape: f32[1,8], index: 8, kind: input, shape index: {}]
  %s9 = inlined_call_operand.vmem [shape: f32[2,8], index: 9, kind: output, shape index: {}]
  %s10 = sld [smem:[#allocation0]]
  $region46: #{net_forward.9} parent=0
    _
  %s12 = ssub.s32 1, %s10
  %s13 = scalar_select 0, %s12, %s10
  // Predicated region
  $region2: #{net_forward.9} parent=0 // pred_check
    _
  $region3: #{net_forward.9} parent=0 // pred_check_branch
    %15 = sbr.rel (0) target = $region5
  $region4: #{net_forward.9} parent=0 // pred_region
    _
  $region5: #{net_forward.9} parent=0 // pred_fallthru
    _
  // Predicated region
  $region6: #{net_forward.9} parent=0 // pred_check
    _
  $region7: #{net_forward.9} parent=0 // pred_check_branch
    %17 = sbr.rel (0) target = $region9
  $region8: #{net_forward.9} parent=0 // pred_region
    _
  $region9: #{net_forward.9} parent=0 // pred_fallthru
    _
  // Predicated region
  $region10: #{net_forward.9} parent=0 // pred_check
    _
  $region11: #{net_forward.9} parent=0 // pred_check_branch
    %19 = sbr.rel (0) target = $region13
  $region12: #{net_forward.9} parent=0 // pred_region
    _
  $region13: #{net_forward.9} parent=0 // pred_fallthru
    _
  // Predicated region
  $region14: #{net_forward.9} parent=0 // pred_check
    _
  $region15: #{net_forward.9} parent=0 // pred_check_branch
    %21 = sbr.rel (0) target = $region17
  $region16: #{net_forward.9} parent=0 // pred_region
    _
  $region17: #{net_forward.9} parent=0 // pred_fallthru
    _
  // Predicated region
  $region18: #{net_forward.9} parent=0 // pred_check
    _
  $region19: #{net_forward.9} parent=0 // pred_check_branch
    %23 = sbr.rel (0) target = $region21
  $region20: #{net_forward.9} parent=0 // pred_region
    _
  $region21: #{net_forward.9} parent=0 // pred_fallthru
    _
  // Predicated region
  $region22: #{net_forward.9} parent=0 // pred_check
    _
  $region23: #{net_forward.9} parent=0 // pred_check_branch
    %25 = sbr.rel (0) target = $region25
  $region24: #{net_forward.9} parent=0 // pred_region
    _
  $region25: #{net_forward.9} parent=0 // pred_fallthru
    _
  // Predicated region
  $region26: #{net_forward.9} parent=0 // pred_check
    _
  $region27: #{net_forward.9} parent=0 // pred_check_branch
    %27 = sbr.rel (0) target = $region29
  $region28: #{net_forward.9} parent=0 // pred_region
    _
  $region29: #{net_forward.9} parent=0 // pred_fallthru
    _
  // Predicated region
  $region30: #{net_forward.9} parent=0 // pred_check
    _
  $region31: #{net_forward.9} parent=0 // pred_check_branch
    %29 = sbr.rel (0) target = $region33
  $region32: #{net_forward.9} parent=0 // pred_region
    _
  $region33: #{net_forward.9} parent=0 // pred_fallthru
    _
  // Predicated region
  $region34: #{net_forward.9} parent=0 // pred_check
    _
  $region35: #{net_forward.9} parent=0 // pred_check_branch
    %31 = sbr.rel (0) target = $region37
  $region36: #{net_forward.9} parent=0 // pred_region
    _
  $region37: #{net_forward.9} parent=0 // pred_fallthru
    _
  %v33 = vld [vmem:[%s0] sm:$0xff]
  %v34 = vld [vmem:[%s0 + $0x8] sm:$0xff]
  %v35 = vld [vmem:[%s0 + $0x10] sm:$0xf]
  %v36 = vld [vmem:[%s0 + $0x14] sm:$0xff]
  %v37 = vld [vmem:[%s0 + $0x1c] sm:$0xff]
  %v38 = vld [vmem:[%s0 + $0x24] sm:$0xf]
  %v39 = vld [vmem:[%s0 + $0x28] sm:$0x11]
  %v40 = vld [vmem:[%s0 + $0x30] sm:$0x11]
  %v41 = vld [vmem:[%s0 + $0x38] sm:$0x1]
  %v42 = vld [vmem:[%s1] sm:$0xf]
  %v43 = vld [vmem:[%s1 + $0x4] sm:$0xf]
  %v44 = vld [vmem:[%s1 + $0x8] sm:$0xf]
  %v45 = vld [vmem:[%s1 + $0xc] sm:$0xf]
  %v46 = vld [vmem:[%s1 + $0x10] sm:$0xf]
  %v47 = vld [vmem:[%s1 + $0x14] sm:$0xf]
  %v48 = vld [vmem:[%s1 + $0x18] sm:$0xf]
  %v49 = vld [vmem:[%s1 + $0x1c] sm:$0xf]
  %v50 = vld [vmem:[%s1 + $0x20] sm:$0xf]
  %v51 = vld [vmem:[%s1 + $0x24] sm:$0xf]
  %v52 = vld [vmem:[%s1 + $0x28] sm:$0xf]
  %v53 = vld [vmem:[%s1 + $0x2c] sm:$0xf]
  %v54 = vld [vmem:[%s1 + $0x30] sm:$0xf]
  %v55 = vld [vmem:[%s1 + $0x34] sm:$0xf]
  %v56 = vld [vmem:[%s1 + $0x38] sm:$0xf]
  %v57 = vld [vmem:[%s1 + $0x3c] sm:$0xf]
  %v58 = vld [vmem:[%s1 + $0x40] sm:$0xf]
  %v59 = vld [vmem:[%s1 + $0x44] sm:$0xf]
  %v60 = vld [vmem:[%s1 + $0x48] sm:$0xf]
  %v61 = vld [vmem:[%s1 + $0x4c] sm:$0xf]
  %v62 = vld [vmem:[%s1 + $0x50] sm:$0xf]
  %v63 = vld [vmem:[%s1 + $0x54] sm:$0xf]
  %v64 = vld [vmem:[%s1 + $0x58] sm:$0xf]
  %v65 = vld [vmem:[%s1 + $0x5c] sm:$0xf]
  %v66 = vld [vmem:[%s1 + $0x60] sm:$0xf]
  %v67 = vld [vmem:[%s1 + $0x64] sm:$0xf]
  %v68 = vld [vmem:[%s1 + $0x68] sm:$0xf]
  %v69 = vld [vmem:[%s1 + $0x6c] sm:$0xf]
  %v70 = vld [vmem:[%s1 + $0x70] sm:$0xf]
  %v71 = vld [vmem:[%s1 + $0x74] sm:$0xf]
  %v72 = vld [vmem:[%s1 + $0x78] sm:$0xf]
  %v73 = vld [vmem:[%s1 + $0x7c] sm:$0xf]
  %v74 = vld [vmem:[%s1 + $0x80] sm:$0xf]
  %v75 = vld [vmem:[%s1 + $0x84] sm:$0xf]
  %v76 = vld [vmem:[%s1 + $0x88] sm:$0xf]
  %v77 = vld [vmem:[%s1 + $0x8c] sm:$0xf]
  %v78 = vld [vmem:[%s1 + $0x90] sm:$0xf]
  %v79 = vld [vmem:[%s1 + $0x94] sm:$0xf]
  %v80 = vld [vmem:[%s1 + $0x98] sm:$0xf]
  %v81 = vld [vmem:[%s1 + $0x9c] sm:$0xf]
  %v82 = vld [vmem:[%s1 + $0xa0] sm:$0xf]
  %v83 = vld [vmem:[%s1 + $0xa4] sm:$0xf]
  %v84 = vld [vmem:[%s1 + $0xa8] sm:$0xf]
  %v85 = vld [vmem:[%s1 + $0xac] sm:$0xf]
  %v86 = vld [vmem:[%s1 + $0xb0] sm:$0xf]
  %v87 = vld [vmem:[%s1 + $0xb4] sm:$0xf]
  %v88 = vld [vmem:[%s1 + $0xb8] sm:$0xf]
  %v89 = vld [vmem:[%s1 + $0xbc] sm:$0xf]
  %v90 = vld [vmem:[%s1 + $0xc0] sm:$0xf]
  %v91 = vld [vmem:[%s1 + $0xc4] sm:$0xf]
  %v92 = vld [vmem:[%s1 + $0xc8] sm:$0xf]
  %v93 = vld [vmem:[%s1 + $0xcc] sm:$0xf]
  %v94 = vld [vmem:[%s1 + $0xd0] sm:$0xf]
  %v95 = vld [vmem:[%s1 + $0xd4] sm:$0xf]
  %v96 = vld [vmem:[%s1 + $0xd8] sm:$0xf]
  %v97 = vld [vmem:[%s1 + $0xdc] sm:$0xf]
  %v98 = vld [vmem:[%s1 + $0xe0] sm:$0xf]
  %v99 = vld [vmem:[%s1 + $0xe4] sm:$0xf]
  %v100 = vld [vmem:[%s1 + $0xe8] sm:$0xf]
  %v101 = vld [vmem:[%s1 + $0xec] sm:$0xf]
  %v102 = vld [vmem:[%s1 + $0xf0] sm:$0xf]
  %v103 = vld [vmem:[%s1 + $0xf4] sm:$0xf]
  %v104 = vld [vmem:[%s1 + $0xf8] sm:$0xf]
  %v105 = vld [vmem:[%s1 + $0xfc] sm:$0xf]
  %v106 = vld [vmem:[%s1 + $0x100] sm:$0xf]
  %v107 = vld [vmem:[%s1 + $0x104] sm:$0xf]
  %v108 = vld [vmem:[%s1 + $0x108] sm:$0xf]
  %v109 = vld [vmem:[%s1 + $0x10c] sm:$0xf]
  %v110 = vld [vmem:[%s1 + $0x110] sm:$0xf]
  %v111 = vld [vmem:[%s1 + $0x114] sm:$0xf]
  %v112 = vld [vmem:[%s1 + $0x118] sm:$0xf]
  %v113 = vld [vmem:[%s1 + $0x11c] sm:$0xf]
  %v114 = vld [vmem:[%s2] sm:$0x1]
  %v116 = vlaneseq
  %v117 = vshrl.u32 %v116, 7
  %v118 = vsub.s32 0, %v117
  %v119 = vrot.slane %v114, %v118
  %v130 = vunpack.c.l.b16 %v33
  %v131 = vunpack.c.h.b16 %v33
  %v132 = vunpack.c.l.b16 %v34
  %v133 = vunpack.c.h.b16 %v34
  %v134 = vunpack.c.l.b16 %v35
  %v135 = vunpack.c.l.b16 %v36
  %v136 = vunpack.c.h.b16 %v36
  %v137 = vunpack.c.l.b16 %v37
  %v138 = vunpack.c.h.b16 %v37
  %v139 = vunpack.c.l.b16 %v38
  %v140 = vunpack.c.l.b16 %v39
  %v141 = vunpack.c.h.b16 %v39
  %v142 = vunpack.c.l.b16 %v40
  %v143 = vunpack.c.h.b16 %v40
  %v144 = vunpack.c.l.b16 %v41
  %v145 = vpack.c.b16 %v135, %v130
  %v146 = vpack.c.b16 %v136, %v131
  %v147 = vpack.c.b16 %v137, %v132
  %v148 = vpack.c.b16 %v138, %v133
  %v149 = vpack.c.b16 %v139, %v134
  %v150 = vpack.c.b16 %v140, %v140
  %v151 = vpack.c.b16 %v141, %v141
  %v152 = vpack.c.b16 %v142, %v142
  %v153 = vpack.c.b16 %v143, %v143
  %v154 = vpack.c.b16 %v144, %v144
  %v235 = vunpack.c.l.b16 %v42
  %v236 = vunpack.c.l.b16 %v43
  %v237 = vunpack.c.l.b16 %v44
  %v238 = vunpack.c.l.b16 %v45
  %v239 = vunpack.c.l.b16 %v46
  %v240 = vunpack.c.l.b16 %v47
  %v241 = vunpack.c.l.b16 %v48
  %v242 = vunpack.c.l.b16 %v49
  %v243 = vunpack.c.l.b16 %v50
  %v244 = vunpack.c.l.b16 %v51
  %v245 = vunpack.c.l.b16 %v52
  %v246 = vunpack.c.l.b16 %v53
  %v247 = vunpack.c.l.b16 %v54
  %v248 = vunpack.c.l.b16 %v55
  %v249 = vunpack.c.l.b16 %v56
  %v250 = vunpack.c.l.b16 %v57
  %v251 = vunpack.c.l.b16 %v58
  %v252 = vunpack.c.l.b16 %v59
  %v253 = vunpack.c.l.b16 %v60
  %v254 = vunpack.c.l.b16 %v61
  %v255 = vunpack.c.l.b16 %v62
  %v256 = vunpack.c.l.b16 %v63
  %v257 = vunpack.c.l.b16 %v64
  %v258 = vunpack.c.l.b16 %v65
  %v259 = vunpack.c.l.b16 %v66
  %v260 = vunpack.c.l.b16 %v67
  %v261 = vunpack.c.l.b16 %v68
  %v262 = vunpack.c.l.b16 %v69
  %v263 = vunpack.c.l.b16 %v70
  %v264 = vunpack.c.l.b16 %v71
  %v265 = vunpack.c.l.b16 %v72
  %v266 = vunpack.c.l.b16 %v73
  %v267 = vunpack.c.l.b16 %v74
  %v268 = vunpack.c.l.b16 %v75
  %v269 = vunpack.c.l.b16 %v76
  %v270 = vunpack.c.l.b16 %v77
  %v271 = vunpack.c.l.b16 %v78
  %v272 = vunpack.c.l.b16 %v79
  %v273 = vunpack.c.l.b16 %v80
  %v274 = vunpack.c.l.b16 %v81
  %v275 = vunpack.c.l.b16 %v82
  %v276 = vunpack.c.l.b16 %v83
  %v277 = vunpack.c.l.b16 %v84
  %v278 = vunpack.c.l.b16 %v85
  %v279 = vunpack.c.l.b16 %v86
  %v280 = vunpack.c.l.b16 %v87
  %v281 = vunpack.c.l.b16 %v88
  %v282 = vunpack.c.l.b16 %v89
  %v283 = vunpack.c.l.b16 %v90
  %v284 = vunpack.c.l.b16 %v91
  %v285 = vunpack.c.l.b16 %v92
  %v286 = vunpack.c.l.b16 %v93
  %v287 = vunpack.c.l.b16 %v94
  %v288 = vunpack.c.l.b16 %v95
  %v289 = vunpack.c.l.b16 %v96
  %v290 = vunpack.c.l.b16 %v97
  %v291 = vunpack.c.l.b16 %v98
  %v292 = vunpack.c.l.b16 %v99
  %v293 = vunpack.c.l.b16 %v100
  %v294 = vunpack.c.l.b16 %v101
  %v295 = vunpack.c.l.b16 %v102
  %v296 = vunpack.c.l.b16 %v103
  %v297 = vunpack.c.l.b16 %v104
  %v298 = vunpack.c.l.b16 %v105
  %v299 = vunpack.c.l.b16 %v106
  %v300 = vunpack.c.l.b16 %v107
  %v301 = vunpack.c.l.b16 %v108
  %v302 = vunpack.c.l.b16 %v109
  %v303 = vunpack.c.l.b16 %v110
  %v304 = vunpack.c.l.b16 %v111
  %v305 = vunpack.c.l.b16 %v112
  %v306 = vunpack.c.l.b16 %v113
  %v307 = vpack.c.b16 %v236, %v235
  %v308 = vpack.c.b16 %v238, %v237
  %v309 = vpack.c.b16 %v240, %v239
  %v310 = vpack.c.b16 %v242, %v241
  %v311 = vpack.c.b16 %v244, %v243
  %v312 = vpack.c.b16 %v246, %v245
  %v313 = vpack.c.b16 %v248, %v247
  %v314 = vpack.c.b16 %v250, %v249
  %v315 = vpack.c.b16 %v252, %v251
  %v316 = vpack.c.b16 %v254, %v253
  %v317 = vpack.c.b16 %v256, %v255
  %v318 = vpack.c.b16 %v258, %v257
  %v319 = vpack.c.b16 %v260, %v259
  %v320 = vpack.c.b16 %v262, %v261
  %v321 = vpack.c.b16 %v264, %v263
  %v322 = vpack.c.b16 %v266, %v265
  %v323 = vpack.c.b16 %v268, %v267
  %v324 = vpack.c.b16 %v270, %v269
  %v325 = vpack.c.b16 %v272, %v271
  %v326 = vpack.c.b16 %v274, %v273
  %v327 = vpack.c.b16 %v276, %v275
  %v328 = vpack.c.b16 %v278, %v277
  %v329 = vpack.c.b16 %v280, %v279
  %v330 = vpack.c.b16 %v282, %v281
  %v331 = vpack.c.b16 %v284, %v283
  %v332 = vpack.c.b16 %v286, %v285
  %v333 = vpack.c.b16 %v288, %v287
  %v334 = vpack.c.b16 %v290, %v289
  %v335 = vpack.c.b16 %v292, %v291
  %v336 = vpack.c.b16 %v294, %v293
  %v337 = vpack.c.b16 %v296, %v295
  %v338 = vpack.c.b16 %v298, %v297
  %v339 = vpack.c.b16 %v300, %v299
  %v340 = vpack.c.b16 %v302, %v301
  %v341 = vpack.c.b16 %v304, %v303
  %v342 = vpack.c.b16 %v306, %v305
  %vm379 = vcmask 523264
  %v381 = vsel %vm379, %v149, 0
  %v384 = vsel %vm379, %v154, 0
  %386 = vmatprep.subr.bf16.mxu0 0
  %387 = vmatpush1.bf16.msra.mxu0 %v307
  %388 = vmatprep.subr.bf16.mxu0 0
  %389 = vmatpush1.bf16.msra.mxu0 %v308
  %390 = vmatprep.subr.bf16.mxu0 0
  %391 = vmatpush1.bf16.msra.mxu0 %v309
  %392 = vmatprep.subr.bf16.mxu0 0
  %393 = vmatpush1.bf16.msra.mxu0 %v310
  %394 = vmatprep.subr.bf16.mxu0 0
  %395 = vmatpush1.bf16.msra.mxu0 %v311
  %396 = vmatprep.subr.bf16.mxu0 0
  %397 = vmatpush1.bf16.msra.mxu0 %v312
  %398 = vmatprep.subr.bf16.mxu0 0
  %399 = vmatpush1.bf16.msra.mxu0 %v313
  %400 = vmatprep.subr.bf16.mxu0 0
  %401 = vmatpush1.bf16.msra.mxu0 %v314
  %402 = vmatprep.subr.bf16.mxu0 0
  %403 = vmatpush1.bf16.msra.mxu0 %v315
  %404 = vmatprep.subr.bf16.mxu0 0
  %405 = vmatpush1.bf16.msra.mxu0 %v316
  %406 = vmatprep.subr.bf16.mxu0 0
  %407 = vmatpush1.bf16.msra.mxu0 %v317
  %408 = vmatprep.subr.bf16.mxu0 0
  %409 = vmatpush1.bf16.msra.mxu0 %v318
  %410 = vmatprep.subr.bf16.mxu0 0
  %411 = vmatpush1.bf16.msra.mxu0 %v319
  %412 = vmatprep.subr.bf16.mxu0 0
  %413 = vmatpush1.bf16.msra.mxu0 %v320
  %414 = vmatprep.subr.bf16.mxu0 0
  %415 = vmatpush1.bf16.msra.mxu0 %v321
  %416 = vmatprep.subr.bf16.mxu0 0
  %417 = vmatpush1.bf16.msra.mxu0 %v322
  %418 = vmatprep.mubr.bf16.mxu0 %v146
  %419 = vmatmul.mubr.bf16.gmra.mrb[0].mxu0 %v145
  %v420 = vpop.f32.mrb[0].mxu0
  %v421 = vadd.f32 %v119, %v420
  %v422 = vpop.f32.mrb[0].mxu0
  %v423 = vpop.f32.mrb[0].mxu0
  %v424 = vadd.f32 %v119, %v423
  %v425 = vpop.f32.mrb[0].mxu0
  %426 = vmatprep.mubr.bf16.mxu0 %v151
  %427 = vmatmul.mubr.bf16.gmra.mrb[0].mxu0 %v150
  %v428 = vpop.f32.mrb[0].mxu0
  %v429 = vadd.f32 %v119, %v428
  %v430 = vpop.f32.mrb[0].mxu0
  %v431 = vpop.f32.mrb[0].mxu0
  %v432 = vpop.f32.mrb[0].mxu0
  %433 = vdwg.mxu0
  %434 = vmatprep.subr.bf16.mxu0 0
  %435 = vmatpush1.bf16.msra.mxu0 %v323
  %436 = vmatprep.subr.bf16.mxu0 0
  %437 = vmatpush1.bf16.msra.mxu0 %v324
  %438 = vmatprep.subr.bf16.mxu0 0
  %439 = vmatpush1.bf16.msra.mxu0 %v325
  %440 = vmatprep.subr.bf16.mxu0 0
  %441 = vmatpush1.bf16.msra.mxu0 %v326
  %442 = vmatprep.subr.bf16.mxu0 0
  %443 = vmatpush1.bf16.msra.mxu0 %v327
  %444 = vmatprep.subr.bf16.mxu0 0
  %445 = vmatpush1.bf16.msra.mxu0 %v328
  %446 = vmatprep.subr.bf16.mxu0 0
  %447 = vmatpush1.bf16.msra.mxu0 %v329
  %448 = vmatprep.subr.bf16.mxu0 0
  %449 = vmatpush1.bf16.msra.mxu0 %v330
  %450 = vmatprep.subr.bf16.mxu0 0
  %451 = vmatpush1.bf16.msra.mxu0 %v331
  %452 = vmatprep.subr.bf16.mxu0 0
  %453 = vmatpush1.bf16.msra.mxu0 %v332
  %454 = vmatprep.subr.bf16.mxu0 0
  %455 = vmatpush1.bf16.msra.mxu0 %v333
  %456 = vmatprep.subr.bf16.mxu0 0
  %457 = vmatpush1.bf16.msra.mxu0 %v334
  %458 = vmatprep.subr.bf16.mxu0 0
  %459 = vmatpush1.bf16.msra.mxu0 %v335
  %460 = vmatprep.subr.bf16.mxu0 0
  %461 = vmatpush1.bf16.msra.mxu0 %v336
  %462 = vmatprep.subr.bf16.mxu0 0
  %463 = vmatpush1.bf16.msra.mxu0 %v337
  %464 = vmatprep.subr.bf16.mxu0 0
  %465 = vmatpush1.bf16.msra.mxu0 %v338
  %466 = vmatprep.mubr.bf16.mxu0 %v148
  %467 = vmatmul.mubr.bf16.gmra.mrb[0].mxu0 %v147
  %v468 = vpop.f32.mrb[0].mxu0
  %v469 = vadd.f32 %v421, %v468
  %v470 = vpop.f32.mrb[0].mxu0
  %v471 = vpop.f32.mrb[0].mxu0
  %v472 = vadd.f32 %v424, %v471
  %v473 = vpop.f32.mrb[0].mxu0
  %474 = vmatprep.mubr.bf16.mxu0 %v153
  %475 = vmatmul.mubr.bf16.gmra.mrb[0].mxu0 %v152
  %v476 = vpop.f32.mrb[0].mxu0
  %v477 = vadd.f32 %v429, %v476
  %v478 = vpop.f32.mrb[0].mxu0
  %v479 = vpop.f32.mrb[0].mxu0
  %v480 = vpop.f32.mrb[0].mxu0
  %481 = vdwg.mxu0
  %482 = vmatprep.subr.bf16.mxu0 0
  %483 = vmatpush1.bf16.msra.mxu0 %v339
  %484 = vmatprep.subr.bf16.mxu0 0
  %485 = vmatpush1.bf16.msra.mxu0 %v340
  %486 = vmatprep.subr.bf16.mxu0 0
  %487 = vmatpush1.bf16.msra.mxu0 %v341
  %488 = vmatprep.subr.bf16.mxu0 0
  %489 = vmatpush1.bf16.msra.mxu0 %v342
  %490 = vmatprep.subr.bf16.mxu0 0
  %491 = vmatpush1.bf16.msra.mxu0 0
  %492 = vmatprep.subr.bf16.mxu0 0
  %493 = vmatpush1.bf16.msra.mxu0 0
  %494 = vmatprep.subr.bf16.mxu0 0
  %495 = vmatpush1.bf16.msra.mxu0 0
  %496 = vmatprep.subr.bf16.mxu0 0
  %497 = vmatpush1.bf16.msra.mxu0 0
  %498 = vmatprep.subr.bf16.mxu0 0
  %499 = vmatpush1.bf16.msra.mxu0 0
  %500 = vmatprep.subr.bf16.mxu0 0
  %501 = vmatpush1.bf16.msra.mxu0 0
  %502 = vmatprep.subr.bf16.mxu0 0
  %503 = vmatpush1.bf16.msra.mxu0 0
  %504 = vmatprep.subr.bf16.mxu0 0
  %505 = vmatpush1.bf16.msra.mxu0 0
  %506 = vmatprep.subr.bf16.mxu0 0
  %507 = vmatpush1.bf16.msra.mxu0 0
  %508 = vmatprep.subr.bf16.mxu0 0
  %509 = vmatpush1.bf16.msra.mxu0 0
  %510 = vmatprep.subr.bf16.mxu0 0
  %511 = vmatpush1.bf16.msra.mxu0 0
  %512 = vmatprep.subr.bf16.mxu0 0
  %513 = vmatpush1.bf16.msra.mxu0 0
  %514 = vmatprep.mubr.bf16.mxu0 0
  %515 = vmatmul.mubr.bf16.gmra.mrb[0].mxu0 %v381
  %v516 = vpop.f32.mrb[0].mxu0
  %v517 = vadd.f32 %v469, %v516
  %v518 = vpop.f32.mrb[0].mxu0
  %v519 = vpop.f32.mrb[0].mxu0
  %v520 = vadd.f32 %v472, %v519
  %v521 = vpop.f32.mrb[0].mxu0
  %522 = vmatprep.mubr.bf16.mxu0 0
  %523 = vmatmul.mubr.bf16.gmra.mrb[0].mxu0 %v384
  %v524 = vpop.f32.mrb[0].mxu0
  %v525 = vadd.f32 %v477, %v524
  %v526 = vpop.f32.mrb[0].mxu0
  %v527 = vpop.f32.mrb[0].mxu0
  %v528 = vpop.f32.mrb[0].mxu0
  %529 = vdwg.mxu0
  %v530 = vmax.f32 %v517, 0.0
  %v531 = vmax.f32 %v520, 0.0
  %v532 = vmax.f32 %v525, 0.0
  %v533 = vpack.c.bf16 %v531, %v530
  %v534 = vpack.c.bf16 %v532, %v532
  %535 = vst [vmem:[#allocation2] sm:$0x1] %v533
  %v538 = vunpack.c.l.s4 1966171168
  %v539 = vunpack.c.0.s8 %v538
  %v540 = vlaneseq
  %v541 = vshrl.u32 %v540, 7
  %v542 = vsub.s32 %v539, %v541
  %v543 = vrot.slane %v533, %v542
  %v544 = vcombine.high %v543, %v543
  %v546 = vunpack.c.l.s4 1966171168
  %v547 = vunpack.c.0.s8 %v546
  %v548 = vlaneseq
  %v549 = vshrl.u32 %v548, 7
  %v550 = vsub.s32 %v547, %v549
  %v551 = vrot.slane %v543, %v550
  %v553 = vunpack.c.l.s4 1966171168
  %v554 = vunpack.c.0.s8 %v553
  %v555 = vlaneseq
  %v556 = vshrl.u32 %v555, 7
  %v557 = vsub.s32 %v554, %v556
  %v558 = vrot.slane %v544, %v557
  %560 = vst [vmem:[#allocation2 + $0x1] sm:$0x1] %v558
  %v561 = vcombine.high %v551, %v551
  %563 = vst [vmem:[#allocation2 + $0x2] sm:$0x1] %v561
  %v564 = vcombine.high %v558, %v558
  %566 = vst [vmem:[#allocation2 + $0x3] sm:$0x1] %v564
  %v567 = vcombine.high %v533, %v533
  %v569 = vunpack.c.l.s4 1966171168
  %v570 = vunpack.c.0.s8 %v569
  %v571 = vlaneseq
  %v572 = vshrl.u32 %v571, 7
  %v573 = vsub.s32 %v570, %v572
  %v574 = vrot.slane %v567, %v573
  %v576 = vunpack.c.l.s4 1966171168
  %v577 = vunpack.c.0.s8 %v576
  %v578 = vlaneseq
  %v579 = vshrl.u32 %v578, 7
  %v580 = vsub.s32 %v577, %v579
  %v581 = vrot.slane %v574, %v580
  %583 = vst [vmem:[#allocation2 + $0x4] sm:$0x1] %v581
  %v584 = vcombine.high %v574, %v574
  %v586 = vunpack.c.l.s4 1966171168
  %v587 = vunpack.c.0.s8 %v586
  %v588 = vlaneseq
  %v589 = vshrl.u32 %v588, 7
  %v590 = vsub.s32 %v587, %v589
  %v591 = vrot.slane %v584, %v590
  %593 = vst [vmem:[#allocation2 + $0x5] sm:$0x1] %v591
  %v594 = vcombine.high %v581, %v581
  %596 = vst [vmem:[#allocation2 + $0x6] sm:$0x1] %v594
  %v597 = vcombine.high %v591, %v591
  %599 = vst [vmem:[#allocation2 + $0x7] sm:$0x1] %v597
  %600 = vst [vmem:[#allocation2 + $0x8] sm:$0x1] %v534
  %v601 = vld [vmem:[#allocation2] sm:$0xff]
  %v602 = vld [vmem:[#allocation2 + $0x8] sm:$0x1]
  %v603 = vld [vmem:[%s3] sm:$0xff]
  %v604 = vld [vmem:[%s3 + $0x8] sm:$0xff]
  %v605 = vld [vmem:[%s3 + $0x10] sm:$0xff]
  %v606 = vld [vmem:[%s3 + $0x18] sm:$0xff]
  %v607 = vld [vmem:[%s3 + $0x20] sm:$0xff]
  %v608 = vld [vmem:[%s3 + $0x28] sm:$0xff]
  %v609 = vld [vmem:[%s3 + $0x30] sm:$0xff]
  %v610 = vld [vmem:[%s3 + $0x38] sm:$0xff]
  %v611 = vld [vmem:[%s3 + $0x40] sm:$0xff]
  %v612 = vld [vmem:[%s3 + $0x48] sm:$0xff]
  %v613 = vld [vmem:[%s3 + $0x50] sm:$0xff]
  %v614 = vld [vmem:[%s3 + $0x58] sm:$0xff]
  %v615 = vld [vmem:[%s3 + $0x60] sm:$0xff]
  %v616 = vld [vmem:[%s3 + $0x68] sm:$0xff]
  %v617 = vld [vmem:[%s3 + $0x70] sm:$0xff]
  %v618 = vld [vmem:[%s3 + $0x78] sm:$0xff]
  %v619 = vld [vmem:[%s3 + $0x80] sm:$0xff]
  %v620 = vld [vmem:[%s3 + $0x88] sm:$0xff]
  %v621 = vld [vmem:[%s3 + $0x90] sm:$0xff]
  %v622 = vld [vmem:[%s3 + $0x98] sm:$0xff]
  %v623 = vld [vmem:[%s3 + $0xa0] sm:$0xff]
  %v624 = vld [vmem:[%s3 + $0xa8] sm:$0xff]
  %v625 = vld [vmem:[%s3 + $0xb0] sm:$0xff]
  %v626 = vld [vmem:[%s3 + $0xb8] sm:$0xff]
  %v627 = vld [vmem:[%s3 + $0xc0] sm:$0xff]
  %v628 = vld [vmem:[%s3 + $0xc8] sm:$0xff]
  %v629 = vld [vmem:[%s3 + $0xd0] sm:$0xff]
  %v630 = vld [vmem:[%s3 + $0xd8] sm:$0xff]
  %v631 = vld [vmem:[%s3 + $0xe0] sm:$0xff]
  %v632 = vld [vmem:[%s3 + $0xe8] sm:$0xff]
  %v633 = vld [vmem:[%s3 + $0xf0] sm:$0xff]
  %v634 = vld [vmem:[%s3 + $0xf8] sm:$0xff]
  %v635 = vld [vmem:[%s3 + $0x100] sm:$0xff]
  %v636 = vld [vmem:[%s3 + $0x108] sm:$0xff]
  %v637 = vld [vmem:[%s3 + $0x110] sm:$0xff]
  %v638 = vld [vmem:[%s3 + $0x118] sm:$0xff]
  %v639 = vld [vmem:[%s3 + $0x120] sm:$0xff]
  %v640 = vld [vmem:[%s3 + $0x128] sm:$0xff]
  %v641 = vld [vmem:[%s3 + $0x130] sm:$0xff]
  %v642 = vld [vmem:[%s3 + $0x138] sm:$0xff]
  %v643 = vld [vmem:[%s3 + $0x140] sm:$0xff]
  %v644 = vld [vmem:[%s3 + $0x148] sm:$0xff]
  %v645 = vld [vmem:[%s3 + $0x150] sm:$0xff]
  %v646 = vld [vmem:[%s3 + $0x158] sm:$0xff]
  %v647 = vld [vmem:[%s3 + $0x160] sm:$0xff]
  %v648 = vld [vmem:[%s3 + $0x168] sm:$0xff]
  %v649 = vld [vmem:[%s3 + $0x170] sm:$0xff]
  %v650 = vld [vmem:[%s3 + $0x178] sm:$0xff]
  %v651 = vld [vmem:[%s3 + $0x180] sm:$0xff]
  %v652 = vld [vmem:[%s3 + $0x188] sm:$0xff]
  %v653 = vld [vmem:[%s3 + $0x190] sm:$0xff]
  %v654 = vld [vmem:[%s3 + $0x198] sm:$0xff]
  %v655 = vld [vmem:[%s3 + $0x1a0] sm:$0xff]
  %v656 = vld [vmem:[%s3 + $0x1a8] sm:$0xff]
  %v657 = vld [vmem:[%s3 + $0x1b0] sm:$0xff]
  %v658 = vld [vmem:[%s3 + $0x1b8] sm:$0xff]
  %v659 = vld [vmem:[%s3 + $0x1c0] sm:$0xff]
  %v660 = vld [vmem:[%s3 + $0x1c8] sm:$0xff]
  %v661 = vld [vmem:[%s3 + $0x1d0] sm:$0xff]
  %v662 = vld [vmem:[%s3 + $0x1d8] sm:$0xff]
  %v663 = vld [vmem:[%s3 + $0x1e0] sm:$0xff]
  %v664 = vld [vmem:[%s3 + $0x1e8] sm:$0xff]
  %v665 = vld [vmem:[%s3 + $0x1f0] sm:$0xff]
  %v666 = vld [vmem:[%s3 + $0x1f8] sm:$0xff]
  %v667 = vld [vmem:[%s3 + $0x200] sm:$0xff]
  %v668 = vld [vmem:[%s3 + $0x208] sm:$0xff]
  %v669 = vld [vmem:[%s3 + $0x210] sm:$0xff]
  %v670 = vld [vmem:[%s3 + $0x218] sm:$0xff]
  %v671 = vld [vmem:[%s3 + $0x220] sm:$0xff]
  %v672 = vld [vmem:[%s3 + $0x228] sm:$0xff]
  %v673 = vld [vmem:[%s3 + $0x230] sm:$0xff]
  %v674 = vld [vmem:[%s3 + $0x238] sm:$0xff]
  %v675 = vld [vmem:[%s3 + $0x240] sm:$0xff]
  %v676 = vld [vmem:[%s3 + $0x248] sm:$0xff]
  %v677 = vld [vmem:[%s3 + $0x250] sm:$0xff]
  %v678 = vld [vmem:[%s3 + $0x258] sm:$0xff]
  %v679 = vld [vmem:[%s3 + $0x260] sm:$0xff]
  %v680 = vld [vmem:[%s3 + $0x268] sm:$0xff]
  %v681 = vld [vmem:[%s3 + $0x270] sm:$0xff]
  %v682 = vld [vmem:[%s3 + $0x278] sm:$0xff]
  %v683 = vld [vmem:[%s3 + $0x280] sm:$0xff]
  %v684 = vld [vmem:[%s3 + $0x288] sm:$0xff]
  %v685 = vld [vmem:[%s3 + $0x290] sm:$0xff]
  %v686 = vld [vmem:[%s3 + $0x298] sm:$0xff]
  %v687 = vld [vmem:[%s3 + $0x2a0] sm:$0xff]
  %v688 = vld [vmem:[%s3 + $0x2a8] sm:$0xff]
  %v689 = vld [vmem:[%s3 + $0x2b0] sm:$0xff]
  %v690 = vld [vmem:[%s3 + $0x2b8] sm:$0xff]
  %v691 = vld [vmem:[%s3 + $0x2c0] sm:$0xff]
  %v692 = vld [vmem:[%s3 + $0x2c8] sm:$0xff]
  %v693 = vld [vmem:[%s3 + $0x2d0] sm:$0xff]
  %v694 = vld [vmem:[%s3 + $0x2d8] sm:$0xff]
  %v695 = vld [vmem:[%s3 + $0x2e0] sm:$0xff]
  %v696 = vld [vmem:[%s3 + $0x2e8] sm:$0xff]
  %v697 = vld [vmem:[%s3 + $0x2f0] sm:$0xff]
  %v698 = vld [vmem:[%s3 + $0x2f8] sm:$0xff]
  %v699 = vld [vmem:[%s3 + $0x300] sm:$0xff]
  %v700 = vld [vmem:[%s3 + $0x308] sm:$0xff]
  %v701 = vld [vmem:[%s3 + $0x310] sm:$0xff]
  %v702 = vld [vmem:[%s3 + $0x318] sm:$0xff]
  %v703 = vld [vmem:[%s3 + $0x320] sm:$0xff]
  %v704 = vld [vmem:[%s3 + $0x328] sm:$0xff]
  %v705 = vld [vmem:[%s3 + $0x330] sm:$0xff]
  %v706 = vld [vmem:[%s3 + $0x338] sm:$0xff]
  %v707 = vld [vmem:[%s3 + $0x340] sm:$0xff]
  %v708 = vld [vmem:[%s3 + $0x348] sm:$0xff]
  %v709 = vld [vmem:[%s3 + $0x350] sm:$0xff]
  %v710 = vld [vmem:[%s3 + $0x358] sm:$0xff]
  %v711 = vld [vmem:[%s3 + $0x360] sm:$0xff]
  %v712 = vld [vmem:[%s3 + $0x368] sm:$0xff]
  %v713 = vld [vmem:[%s3 + $0x370] sm:$0xff]
  %v714 = vld [vmem:[%s3 + $0x378] sm:$0xff]
  %v715 = vld [vmem:[%s3 + $0x380] sm:$0xff]
  %v716 = vld [vmem:[%s3 + $0x388] sm:$0xff]
  %v717 = vld [vmem:[%s3 + $0x390] sm:$0xff]
  %v718 = vld [vmem:[%s3 + $0x398] sm:$0xff]
  %v719 = vld [vmem:[%s3 + $0x3a0] sm:$0xff]
  %v720 = vld [vmem:[%s3 + $0x3a8] sm:$0xff]
  %v721 = vld [vmem:[%s3 + $0x3b0] sm:$0xff]
  %v722 = vld [vmem:[%s3 + $0x3b8] sm:$0xff]
  %v723 = vld [vmem:[%s3 + $0x3c0] sm:$0xff]
  %v724 = vld [vmem:[%s3 + $0x3c8] sm:$0xff]
  %v725 = vld [vmem:[%s3 + $0x3d0] sm:$0xff]
  %v726 = vld [vmem:[%s3 + $0x3d8] sm:$0xff]
  %v727 = vld [vmem:[%s3 + $0x3e0] sm:$0xff]
  %v728 = vld [vmem:[%s3 + $0x3e8] sm:$0xff]
  %v729 = vld [vmem:[%s3 + $0x3f0] sm:$0xff]
  %v730 = vld [vmem:[%s3 + $0x3f8] sm:$0xff]
  %v731 = vld [vmem:[%s3 + $0x400] sm:$0xff]
  %v732 = vld [vmem:[%s3 + $0x408] sm:$0xff]
  %v733 = vld [vmem:[%s3 + $0x410] sm:$0xff]
  %v734 = vld [vmem:[%s3 + $0x418] sm:$0xff]
  %v735 = vld [vmem:[%s3 + $0x420] sm:$0xff]
  %v736 = vld [vmem:[%s3 + $0x428] sm:$0xff]
  %v737 = vld [vmem:[%s3 + $0x430] sm:$0xff]
  %v738 = vld [vmem:[%s3 + $0x438] sm:$0xff]
  %v739 = vld [vmem:[%s3 + $0x440] sm:$0xff]
  %v740 = vld [vmem:[%s3 + $0x448] sm:$0xff]
  %v741 = vld [vmem:[%s3 + $0x450] sm:$0xff]
  %v742 = vld [vmem:[%s3 + $0x458] sm:$0xff]
  %v743 = vld [vmem:[%s3 + $0x460] sm:$0xff]
  %v744 = vld [vmem:[%s3 + $0x468] sm:$0xff]
  %v745 = vld [vmem:[%s3 + $0x470] sm:$0xff]
  %v746 = vld [vmem:[%s3 + $0x478] sm:$0xff]
  %v747 = vld [vmem:[%s4] sm:$0x3]
  %v749 = vlaneseq
  %v750 = vshrl.u32 %v749, 7
  %v751 = vsub.s32 0, %v750
  %v752 = vrot.slane %v747, %v751
  %v753 = vlaneseq
  %v754 = vshrl.u32 %v753, 7
  %v755 = vsub.s32 1, %v754
  %v756 = vrot.slane %v747, %v755
  %v761 = vcombine.high %v601, %v601
  %v763 = vunpack.c.l.s4 1966171168
  %v764 = vunpack.c.0.s8 %v763
  %v765 = vlaneseq
  %v766 = vshrl.u32 %v765, 7
  %v767 = vsub.s32 %v764, %v766
  %v768 = vrot.slane %v601, %v767
  %v770 = vunpack.c.l.s4 1966171168
  %v771 = vunpack.c.0.s8 %v770
  %v772 = vlaneseq
  %v773 = vshrl.u32 %v772, 7
  %v774 = vsub.s32 %v771, %v773
  %v775 = vrot.slane %v761, %v774
  %v776 = vcombine.high %v768, %v768
  %v777 = vcombine.high %v775, %v775
  %v779 = vunpack.c.l.s4 1966171168
  %v780 = vunpack.c.0.s8 %v779
  %v781 = vlaneseq
  %v782 = vshrl.u32 %v781, 7
  %v783 = vsub.s32 %v780, %v782
  %v784 = vrot.slane %v768, %v783
  %v786 = vunpack.c.l.s4 1966171168
  %v787 = vunpack.c.0.s8 %v786
  %v788 = vlaneseq
  %v789 = vshrl.u32 %v788, 7
  %v790 = vsub.s32 %v787, %v789
  %v791 = vrot.slane %v775, %v790
  %v793 = vunpack.c.l.s4 1966171168
  %v794 = vunpack.c.0.s8 %v793
  %v795 = vlaneseq
  %v796 = vshrl.u32 %v795, 7
  %v797 = vsub.s32 %v794, %v796
  %v798 = vrot.slane %v776, %v797
  %v800 = vunpack.c.l.s4 1966171168
  %v801 = vunpack.c.0.s8 %v800
  %v802 = vlaneseq
  %v803 = vshrl.u32 %v802, 7
  %v804 = vsub.s32 %v801, %v803
  %v805 = vrot.slane %v777, %v804
  %v806 = vcombine.high %v784, %v784
  %v807 = vcombine.high %v791, %v791
  %v808 = vcombine.high %v798, %v798
  %v809 = vcombine.high %v805, %v805
  %v811 = vunpack.c.l.s4 1966171168
  %v812 = vunpack.c.0.s8 %v811
  %v813 = vlaneseq
  %v814 = vshrl.u32 %v813, 7
  %v815 = vsub.s32 %v812, %v814
  %v816 = vrot.slane %v602, %v815
  %v818 = vunpack.c.l.s4 1966171168
  %v819 = vunpack.c.0.s8 %v818
  %v820 = vlaneseq
  %v821 = vshrl.u32 %v820, 7
  %v822 = vsub.s32 %v819, %v821
  %v823 = vrot.slane %v816, %v822
  %v977 = vunpack.c.l.b16 %v603
  %v978 = vunpack.c.h.b16 %v603
  %v979 = vunpack.c.l.b16 %v604
  %v980 = vunpack.c.h.b16 %v604
  %v981 = vunpack.c.l.b16 %v605
  %v982 = vunpack.c.h.b16 %v605
  %v983 = vunpack.c.l.b16 %v606
  %v984 = vunpack.c.h.b16 %v606
  %v985 = vunpack.c.l.b16 %v607
  %v986 = vunpack.c.h.b16 %v607
  %v987 = vunpack.c.l.b16 %v608
  %v988 = vunpack.c.h.b16 %v608
  %v989 = vunpack.c.l.b16 %v609
  %v990 = vunpack.c.h.b16 %v609
  %v991 = vunpack.c.l.b16 %v610
  %v992 = vunpack.c.h.b16 %v610
  %v993 = vunpack.c.l.b16 %v611
  %v994 = vunpack.c.h.b16 %v611
  %v995 = vunpack.c.l.b16 %v612
  %v996 = vunpack.c.h.b16 %v612
  %v997 = vunpack.c.l.b16 %v613
  %v998 = vunpack.c.h.b16 %v613
  %v999 = vunpack.c.l.b16 %v614
  %v1000 = vunpack.c.h.b16 %v614
  %v1001 = vunpack.c.l.b16 %v615
  %v1002 = vunpack.c.h.b16 %v615
  %v1003 = vunpack.c.l.b16 %v616
  %v1004 = vunpack.c.h.b16 %v616
  %v1005 = vunpack.c.l.b16 %v617
  %v1006 = vunpack.c.h.b16 %v617
  %v1007 = vunpack.c.l.b16 %v618
  %v1008 = vunpack.c.h.b16 %v618
  %v1009 = vunpack.c.l.b16 %v619
  %v1010 = vunpack.c.h.b16 %v619
  %v1011 = vunpack.c.l.b16 %v620
  %v1012 = vunpack.c.h.b16 %v620
  %v1013 = vunpack.c.l.b16 %v621
  %v1014 = vunpack.c.h.b16 %v621
  %v1015 = vunpack.c.l.b16 %v622
  %v1016 = vunpack.c.h.b16 %v622
  %v1017 = vunpack.c.l.b16 %v623
  %v1018 = vunpack.c.h.b16 %v623
  %v1019 = vunpack.c.l.b16 %v624
  %v1020 = vunpack.c.h.b16 %v624
  %v1021 = vunpack.c.l.b16 %v625
  %v1022 = vunpack.c.h.b16 %v625
  %v1023 = vunpack.c.l.b16 %v626
  %v1024 = vunpack.c.h.b16 %v626
  %v1025 = vunpack.c.l.b16 %v627
  %v1026 = vunpack.c.h.b16 %v627
  %v1027 = vunpack.c.l.b16 %v628
  %v1028 = vunpack.c.h.b16 %v628
  %v1029 = vunpack.c.l.b16 %v629
  %v1030 = vunpack.c.h.b16 %v629
  %v1031 = vunpack.c.l.b16 %v630
  %v1032 = vunpack.c.h.b16 %v630
  %v1033 = vunpack.c.l.b16 %v631
  %v1034 = vunpack.c.h.b16 %v631
  %v1035 = vunpack.c.l.b16 %v632
  %v1036 = vunpack.c.h.b16 %v632
  %v1037 = vunpack.c.l.b16 %v633
  %v1038 = vunpack.c.h.b16 %v633
  %v1039 = vunpack.c.l.b16 %v634
  %v1040 = vunpack.c.h.b16 %v634
  %v1041 = vunpack.c.l.b16 %v635
  %v1042 = vunpack.c.h.b16 %v635
  %v1043 = vunpack.c.l.b16 %v636
  %v1044 = vunpack.c.h.b16 %v636
  %v1045 = vunpack.c.l.b16 %v637
  %v1046 = vunpack.c.h.b16 %v637
  %v1047 = vunpack.c.l.b16 %v638
  %v1048 = vunpack.c.h.b16 %v638
  %v1049 = vunpack.c.l.b16 %v639
  %v1050 = vunpack.c.h.b16 %v639
  %v1051 = vunpack.c.l.b16 %v640
  %v1052 = vunpack.c.h.b16 %v640
  %v1053 = vunpack.c.l.b16 %v641
  %v1054 = vunpack.c.h.b16 %v641
  %v1055 = vunpack.c.l.b16 %v642
  %v1056 = vunpack.c.h.b16 %v642
  %v1057 = vunpack.c.l.b16 %v643
  %v1058 = vunpack.c.h.b16 %v643
  %v1059 = vunpack.c.l.b16 %v644
  %v1060 = vunpack.c.h.b16 %v644
  %v1061 = vunpack.c.l.b16 %v645
  %v1062 = vunpack.c.h.b16 %v645
  %v1063 = vunpack.c.l.b16 %v646
  %v1064 = vunpack.c.h.b16 %v646
  %v1065 = vunpack.c.l.b16 %v647
  %v1066 = vunpack.c.h.b16 %v647
  %v1067 = vunpack.c.l.b16 %v648
  %v1068 = vunpack.c.h.b16 %v648
  %v1069 = vunpack.c.l.b16 %v649
  %v1070 = vunpack.c.h.b16 %v649
  %v1071 = vunpack.c.l.b16 %v650
  %v1072 = vunpack.c.h.b16 %v650
  %v1073 = vunpack.c.l.b16 %v651
  %v1074 = vunpack.c.h.b16 %v651
  %v1075 = vunpack.c.l.b16 %v652
  %v1076 = vunpack.c.h.b16 %v652
  %v1077 = vunpack.c.l.b16 %v653
  %v1078 = vunpack.c.h.b16 %v653
  %v1079 = vunpack.c.l.b16 %v654
  %v1080 = vunpack.c.h.b16 %v654
  %v1081 = vunpack.c.l.b16 %v655
  %v1082 = vunpack.c.h.b16 %v655
  %v1083 = vunpack.c.l.b16 %v656
  %v1084 = vunpack.c.h.b16 %v656
  %v1085 = vunpack.c.l.b16 %v657
  %v1086 = vunpack.c.h.b16 %v657
  %v1087 = vunpack.c.l.b16 %v658
  %v1088 = vunpack.c.h.b16 %v658
  %v1089 = vunpack.c.l.b16 %v659
  %v1090 = vunpack.c.h.b16 %v659
  %v1091 = vunpack.c.l.b16 %v660
  %v1092 = vunpack.c.h.b16 %v660
  %v1093 = vunpack.c.l.b16 %v661
  %v1094 = vunpack.c.h.b16 %v661
  %v1095 = vunpack.c.l.b16 %v662
  %v1096 = vunpack.c.h.b16 %v662
  %v1097 = vunpack.c.l.b16 %v663
  %v1098 = vunpack.c.h.b16 %v663
  %v1099 = vunpack.c.l.b16 %v664
  %v1100 = vunpack.c.h.b16 %v664
  %v1101 = vunpack.c.l.b16 %v665
  %v1102 = vunpack.c.h.b16 %v665
  %v1103 = vunpack.c.l.b16 %v666
  %v1104 = vunpack.c.h.b16 %v666
  %v1105 = vunpack.c.l.b16 %v667
  %v1106 = vunpack.c.h.b16 %v667
  %v1107 = vunpack.c.l.b16 %v668
  %v1108 = vunpack.c.h.b16 %v668
  %v1109 = vunpack.c.l.b16 %v669
  %v1110 = vunpack.c.h.b16 %v669
  %v1111 = vunpack.c.l.b16 %v670
  %v1112 = vunpack.c.h.b16 %v670
  %v1113 = vunpack.c.l.b16 %v671
  %v1114 = vunpack.c.h.b16 %v671
  %v1115 = vunpack.c.l.b16 %v672
  %v1116 = vunpack.c.h.b16 %v672
  %v1117 = vunpack.c.l.b16 %v673
  %v1118 = vunpack.c.h.b16 %v673
  %v1119 = vunpack.c.l.b16 %v674
  %v1120 = vunpack.c.h.b16 %v674
  %v1121 = vunpack.c.l.b16 %v675
  %v1122 = vunpack.c.h.b16 %v675
  %v1123 = vunpack.c.l.b16 %v676
  %v1124 = vunpack.c.h.b16 %v676
  %v1125 = vunpack.c.l.b16 %v677
  %v1126 = vunpack.c.h.b16 %v677
  %v1127 = vunpack.c.l.b16 %v678
  %v1128 = vunpack.c.h.b16 %v678
  %v1129 = vunpack.c.l.b16 %v679
  %v1130 = vunpack.c.h.b16 %v679
  %v1131 = vunpack.c.l.b16 %v680
  %v1132 = vunpack.c.h.b16 %v680
  %v1133 = vunpack.c.l.b16 %v681
  %v1134 = vunpack.c.h.b16 %v681
  %v1135 = vunpack.c.l.b16 %v682
  %v1136 = vunpack.c.h.b16 %v682
  %v1137 = vunpack.c.l.b16 %v683
  %v1138 = vunpack.c.h.b16 %v683
  %v1139 = vunpack.c.l.b16 %v684
  %v1140 = vunpack.c.h.b16 %v684
  %v1141 = vunpack.c.l.b16 %v685
  %v1142 = vunpack.c.h.b16 %v685
  %v1143 = vunpack.c.l.b16 %v686
  %v1144 = vunpack.c.h.b16 %v686
  %v1145 = vunpack.c.l.b16 %v687
  %v1146 = vunpack.c.h.b16 %v687
  %v1147 = vunpack.c.l.b16 %v688
  %v1148 = vunpack.c.h.b16 %v688
  %v1149 = vunpack.c.l.b16 %v689
  %v1150 = vunpack.c.h.b16 %v689
  %v1151 = vunpack.c.l.b16 %v690
  %v1152 = vunpack.c.h.b16 %v690
  %v1153 = vunpack.c.l.b16 %v691
  %v1154 = vunpack.c.h.b16 %v691
  %v1155 = vunpack.c.l.b16 %v692
  %v1156 = vunpack.c.h.b16 %v692
  %v1157 = vunpack.c.l.b16 %v693
  %v1158 = vunpack.c.h.b16 %v693
  %v1159 = vunpack.c.l.b16 %v694
  %v1160 = vunpack.c.h.b16 %v694
  %v1161 = vunpack.c.l.b16 %v695
  %v1162 = vunpack.c.h.b16 %v695
  %v1163 = vunpack.c.l.b16 %v696
  %v1164 = vunpack.c.h.b16 %v696
  %v1165 = vunpack.c.l.b16 %v697
  %v1166 = vunpack.c.h.b16 %v697
  %v1167 = vunpack.c.l.b16 %v698
  %v1168 = vunpack.c.h.b16 %v698
  %v1169 = vunpack.c.l.b16 %v699
  %v1170 = vunpack.c.h.b16 %v699
  %v1171 = vunpack.c.l.b16 %v700
  %v1172 = vunpack.c.h.b16 %v700
  %v1173 = vunpack.c.l.b16 %v701
  %v1174 = vunpack.c.h.b16 %v701
  %v1175 = vunpack.c.l.b16 %v702
  %v1176 = vunpack.c.h.b16 %v702
  %v1177 = vunpack.c.l.b16 %v703
  %v1178 = vunpack.c.h.b16 %v703
  %v1179 = vunpack.c.l.b16 %v704
  %v1180 = vunpack.c.h.b16 %v704
  %v1181 = vunpack.c.l.b16 %v705
  %v1182 = vunpack.c.h.b16 %v705
  %v1183 = vunpack.c.l.b16 %v706
  %v1184 = vunpack.c.h.b16 %v706
  %v1185 = vunpack.c.l.b16 %v707
  %v1186 = vunpack.c.h.b16 %v707
  %v1187 = vunpack.c.l.b16 %v708
  %v1188 = vunpack.c.h.b16 %v708
  %v1189 = vunpack.c.l.b16 %v709
  %v1190 = vunpack.c.h.b16 %v709
  %v1191 = vunpack.c.l.b16 %v710
  %v1192 = vunpack.c.h.b16 %v710
  %v1193 = vunpack.c.l.b16 %v711
  %v1194 = vunpack.c.h.b16 %v711
  %v1195 = vunpack.c.l.b16 %v712
  %v1196 = vunpack.c.h.b16 %v712
  %v1197 = vunpack.c.l.b16 %v713
  %v1198 = vunpack.c.h.b16 %v713
  %v1199 = vunpack.c.l.b16 %v714
  %v1200 = vunpack.c.h.b16 %v714
  %v1201 = vunpack.c.l.b16 %v715
  %v1202 = vunpack.c.h.b16 %v715
  %v1203 = vunpack.c.l.b16 %v716
  %v1204 = vunpack.c.h.b16 %v716
  %v1205 = vunpack.c.l.b16 %v717
  %v1206 = vunpack.c.h.b16 %v717
  %v1207 = vunpack.c.l.b16 %v718
  %v1208 = vunpack.c.h.b16 %v718
  %v1209 = vunpack.c.l.b16 %v719
  %v1210 = vunpack.c.h.b16 %v719
  %v1211 = vunpack.c.l.b16 %v720
  %v1212 = vunpack.c.h.b16 %v720
  %v1213 = vunpack.c.l.b16 %v721
  %v1214 = vunpack.c.h.b16 %v721
  %v1215 = vunpack.c.l.b16 %v722
  %v1216 = vunpack.c.h.b16 %v722
  %v1217 = vunpack.c.l.b16 %v723
  %v1218 = vunpack.c.h.b16 %v723
  %v1219 = vunpack.c.l.b16 %v724
  %v1220 = vunpack.c.h.b16 %v724
  %v1221 = vunpack.c.l.b16 %v725
  %v1222 = vunpack.c.h.b16 %v725
  %v1223 = vunpack.c.l.b16 %v726
  %v1224 = vunpack.c.h.b16 %v726
  %v1225 = vunpack.c.l.b16 %v727
  %v1226 = vunpack.c.h.b16 %v727
  %v1227 = vunpack.c.l.b16 %v728
  %v1228 = vunpack.c.h.b16 %v728
  %v1229 = vunpack.c.l.b16 %v729
  %v1230 = vunpack.c.h.b16 %v729
  %v1231 = vunpack.c.l.b16 %v730
  %v1232 = vunpack.c.h.b16 %v730
  %v1233 = vunpack.c.l.b16 %v731
  %v1234 = vunpack.c.h.b16 %v731
  %v1235 = vunpack.c.l.b16 %v732
  %v1236 = vunpack.c.h.b16 %v732
  %v1237 = vunpack.c.l.b16 %v733
  %v1238 = vunpack.c.h.b16 %v733
  %v1239 = vunpack.c.l.b16 %v734
  %v1240 = vunpack.c.h.b16 %v734
  %v1241 = vunpack.c.l.b16 %v735
  %v1242 = vunpack.c.h.b16 %v735
  %v1243 = vunpack.c.l.b16 %v736
  %v1244 = vunpack.c.h.b16 %v736
  %v1245 = vunpack.c.l.b16 %v737
  %v1246 = vunpack.c.h.b16 %v737
  %v1247 = vunpack.c.l.b16 %v738
  %v1248 = vunpack.c.h.b16 %v738
  %v1249 = vunpack.c.l.b16 %v739
  %v1250 = vunpack.c.h.b16 %v739
  %v1251 = vunpack.c.l.b16 %v740
  %v1252 = vunpack.c.h.b16 %v740
  %v1253 = vunpack.c.l.b16 %v741
  %v1254 = vunpack.c.h.b16 %v741
  %v1255 = vunpack.c.l.b16 %v742
  %v1256 = vunpack.c.h.b16 %v742
  %v1257 = vunpack.c.l.b16 %v743
  %v1258 = vunpack.c.h.b16 %v743
  %v1259 = vunpack.c.l.b16 %v744
  %v1260 = vunpack.c.h.b16 %v744
  %v1261 = vunpack.c.l.b16 %v745
  %v1262 = vunpack.c.h.b16 %v745
  %v1263 = vunpack.c.l.b16 %v746
  %v1264 = vunpack.c.h.b16 %v746
  %v1265 = vpack.c.b16 %v979, %v977
  %v1266 = vpack.c.b16 %v980, %v978
  %v1267 = vpack.c.b16 %v983, %v981
  %v1268 = vpack.c.b16 %v984, %v982
  %v1269 = vpack.c.b16 %v987, %v985
  %v1270 = vpack.c.b16 %v988, %v986
  %v1271 = vpack.c.b16 %v991, %v989
  %v1272 = vpack.c.b16 %v992, %v990
  %v1273 = vpack.c.b16 %v995, %v993
  %v1274 = vpack.c.b16 %v996, %v994
  %v1275 = vpack.c.b16 %v999, %v997
  %v1276 = vpack.c.b16 %v1000, %v998
  %v1277 = vpack.c.b16 %v1003, %v1001
  %v1278 = vpack.c.b16 %v1004, %v1002
  %v1279 = vpack.c.b16 %v1007, %v1005
  %v1280 = vpack.c.b16 %v1008, %v1006
  %v1281 = vpack.c.b16 %v1011, %v1009
  %v1282 = vpack.c.b16 %v1012, %v1010
  %v1283 = vpack.c.b16 %v1015, %v1013
  %v1284 = vpack.c.b16 %v1016, %v1014
  %v1285 = vpack.c.b16 %v1019, %v1017
  %v1286 = vpack.c.b16 %v1020, %v1018
  %v1287 = vpack.c.b16 %v1023, %v1021
  %v1288 = vpack.c.b16 %v1024, %v1022
  %v1289 = vpack.c.b16 %v1027, %v1025
  %v1290 = vpack.c.b16 %v1028, %v1026
  %v1291 = vpack.c.b16 %v1031, %v1029
  %v1292 = vpack.c.b16 %v1032, %v1030
  %v1293 = vpack.c.b16 %v1035, %v1033
  %v1294 = vpack.c.b16 %v1036, %v1034
  %v1295 = vpack.c.b16 %v1039, %v1037
  %v1296 = vpack.c.b16 %v1040, %v1038
  %v1297 = vpack.c.b16 %v1043, %v1041
  %v1298 = vpack.c.b16 %v1044, %v1042
  %v1299 = vpack.c.b16 %v1047, %v1045
  %v1300 = vpack.c.b16 %v1048, %v1046
  %v1301 = vpack.c.b16 %v1051, %v1049
  %v1302 = vpack.c.b16 %v1052, %v1050
  %v1303 = vpack.c.b16 %v1055, %v1053
  %v1304 = vpack.c.b16 %v1056, %v1054
  %v1305 = vpack.c.b16 %v1059, %v1057
  %v1306 = vpack.c.b16 %v1060, %v1058
  %v1307 = vpack.c.b16 %v1063, %v1061
  %v1308 = vpack.c.b16 %v1064, %v1062
  %v1309 = vpack.c.b16 %v1067, %v1065
  %v1310 = vpack.c.b16 %v1068, %v1066
  %v1311 = vpack.c.b16 %v1071, %v1069
  %v1312 = vpack.c.b16 %v1072, %v1070
  %v1313 = vpack.c.b16 %v1075, %v1073
  %v1314 = vpack.c.b16 %v1076, %v1074
  %v1315 = vpack.c.b16 %v1079, %v1077
  %v1316 = vpack.c.b16 %v1080, %v1078
  %v1317 = vpack.c.b16 %v1083, %v1081
  %v1318 = vpack.c.b16 %v1084, %v1082
  %v1319 = vpack.c.b16 %v1087, %v1085
  %v1320 = vpack.c.b16 %v1088, %v1086
  %v1321 = vpack.c.b16 %v1091, %v1089
  %v1322 = vpack.c.b16 %v1092, %v1090
  %v1323 = vpack.c.b16 %v1095, %v1093
  %v1324 = vpack.c.b16 %v1096, %v1094
  %v1325 = vpack.c.b16 %v1099, %v1097
  %v1326 = vpack.c.b16 %v1100, %v1098
  %v1327 = vpack.c.b16 %v1103, %v1101
  %v1328 = vpack.c.b16 %v1104, %v1102
  %v1329 = vpack.c.b16 %v1107, %v1105
  %v1330 = vpack.c.b16 %v1108, %v1106
  %v1331 = vpack.c.b16 %v1111, %v1109
  %v1332 = vpack.c.b16 %v1112, %v1110
  %v1333 = vpack.c.b16 %v1115, %v1113
  %v1334 = vpack.c.b16 %v1116, %v1114
  %v1335 = vpack.c.b16 %v1119, %v1117
  %v1336 = vpack.c.b16 %v1120, %v1118
  %v1337 = vpack.c.b16 %v1123, %v1121
  %v1338 = vpack.c.b16 %v1124, %v1122
  %v1339 = vpack.c.b16 %v1127, %v1125
  %v1340 = vpack.c.b16 %v1128, %v1126
  %v1341 = vpack.c.b16 %v1131, %v1129
  %v1342 = vpack.c.b16 %v1132, %v1130
  %v1343 = vpack.c.b16 %v1135, %v1133
  %v1344 = vpack.c.b16 %v1136, %v1134
  %v1345 = vpack.c.b16 %v1139, %v1137
  %v1346 = vpack.c.b16 %v1140, %v1138
  %v1347 = vpack.c.b16 %v1143, %v1141
  %v1348 = vpack.c.b16 %v1144, %v1142
  %v1349 = vpack.c.b16 %v1147, %v1145
  %v1350 = vpack.c.b16 %v1148, %v1146
  %v1351 = vpack.c.b16 %v1151, %v1149
  %v1352 = vpack.c.b16 %v1152, %v1150
  %v1353 = vpack.c.b16 %v1155, %v1153
  %v1354 = vpack.c.b16 %v1156, %v1154
  %v1355 = vpack.c.b16 %v1159, %v1157
  %v1356 = vpack.c.b16 %v1160, %v1158
  %v1357 = vpack.c.b16 %v1163, %v1161
  %v1358 = vpack.c.b16 %v1164, %v1162
  %v1359 = vpack.c.b16 %v1167, %v1165
  %v1360 = vpack.c.b16 %v1168, %v1166
  %v1361 = vpack.c.b16 %v1171, %v1169
  %v1362 = vpack.c.b16 %v1172, %v1170
  %v1363 = vpack.c.b16 %v1175, %v1173
  %v1364 = vpack.c.b16 %v1176, %v1174
  %v1365 = vpack.c.b16 %v1179, %v1177
  %v1366 = vpack.c.b16 %v1180, %v1178
  %v1367 = vpack.c.b16 %v1183, %v1181
  %v1368 = vpack.c.b16 %v1184, %v1182
  %v1369 = vpack.c.b16 %v1187, %v1185
  %v1370 = vpack.c.b16 %v1188, %v1186
  %v1371 = vpack.c.b16 %v1191, %v1189
  %v1372 = vpack.c.b16 %v1192, %v1190
  %v1373 = vpack.c.b16 %v1195, %v1193
  %v1374 = vpack.c.b16 %v1196, %v1194
  %v1375 = vpack.c.b16 %v1199, %v1197
  %v1376 = vpack.c.b16 %v1200, %v1198
  %v1377 = vpack.c.b16 %v1203, %v1201
  %v1378 = vpack.c.b16 %v1204, %v1202
  %v1379 = vpack.c.b16 %v1207, %v1205
  %v1380 = vpack.c.b16 %v1208, %v1206
  %v1381 = vpack.c.b16 %v1211, %v1209
  %v1382 = vpack.c.b16 %v1212, %v1210
  %v1383 = vpack.c.b16 %v1215, %v1213
  %v1384 = vpack.c.b16 %v1216, %v1214
  %v1385 = vpack.c.b16 %v1219, %v1217
  %v1386 = vpack.c.b16 %v1220, %v1218
  %v1387 = vpack.c.b16 %v1223, %v1221
  %v1388 = vpack.c.b16 %v1224, %v1222
  %v1389 = vpack.c.b16 %v1227, %v1225
  %v1390 = vpack.c.b16 %v1228, %v1226
  %v1391 = vpack.c.b16 %v1231, %v1229
  %v1392 = vpack.c.b16 %v1232, %v1230
  %v1393 = vpack.c.b16 %v1235, %v1233
  %v1394 = vpack.c.b16 %v1236, %v1234
  %v1395 = vpack.c.b16 %v1239, %v1237
  %v1396 = vpack.c.b16 %v1240, %v1238
  %v1397 = vpack.c.b16 %v1243, %v1241
  %v1398 = vpack.c.b16 %v1244, %v1242
  %v1399 = vpack.c.b16 %v1247, %v1245
  %v1400 = vpack.c.b16 %v1248, %v1246
  %v1401 = vpack.c.b16 %v1251, %v1249
  %v1402 = vpack.c.b16 %v1252, %v1250
  %v1403 = vpack.c.b16 %v1255, %v1253
  %v1404 = vpack.c.b16 %v1256, %v1254
  %v1405 = vpack.c.b16 %v1259, %v1257
  %v1406 = vpack.c.b16 %v1260, %v1258
  %v1407 = vpack.c.b16 %v1263, %v1261
  %v1408 = vpack.c.b16 %v1264, %v1262
  %1553 = vmatprep.subr.bf16.mxu0 %v1266
  %1554 = vmatpush1.bf16.msra.mxu0 %v1265
  %1555 = vmatprep.subr.bf16.mxu0 %v1268
  %1556 = vmatpush1.bf16.msra.mxu0 %v1267
  %1557 = vmatprep.subr.bf16.mxu0 %v1270
  %1558 = vmatpush1.bf16.msra.mxu0 %v1269
  %1559 = vmatprep.subr.bf16.mxu0 %v1272
  %1560 = vmatpush1.bf16.msra.mxu0 %v1271
  %1561 = vmatprep.subr.bf16.mxu0 %v1274
  %1562 = vmatpush1.bf16.msra.mxu0 %v1273
  %1563 = vmatprep.subr.bf16.mxu0 %v1276
  %1564 = vmatpush1.bf16.msra.mxu0 %v1275
  %1565 = vmatprep.subr.bf16.mxu0 %v1278
  %1566 = vmatpush1.bf16.msra.mxu0 %v1277
  %1567 = vmatprep.subr.bf16.mxu0 %v1280
  %1568 = vmatpush1.bf16.msra.mxu0 %v1279
  %1569 = vmatprep.subr.bf16.mxu0 %v1282
  %1570 = vmatpush1.bf16.msra.mxu0 %v1281
  %1571 = vmatprep.subr.bf16.mxu0 %v1284
  %1572 = vmatpush1.bf16.msra.mxu0 %v1283
  %1573 = vmatprep.subr.bf16.mxu0 %v1286
  %1574 = vmatpush1.bf16.msra.mxu0 %v1285
  %1575 = vmatprep.subr.bf16.mxu0 %v1288
  %1576 = vmatpush1.bf16.msra.mxu0 %v1287
  %1577 = vmatprep.subr.bf16.mxu0 %v1290
  %1578 = vmatpush1.bf16.msra.mxu0 %v1289
  %1579 = vmatprep.subr.bf16.mxu0 %v1292
  %1580 = vmatpush1.bf16.msra.mxu0 %v1291
  %1581 = vmatprep.subr.bf16.mxu0 %v1294
  %1582 = vmatpush1.bf16.msra.mxu0 %v1293
  %1583 = vmatprep.subr.bf16.mxu0 %v1296
  %1584 = vmatpush1.bf16.msra.mxu0 %v1295
  %1585 = vmatprep.mubr.bf16.mxu0 %v798
  %1586 = vmatmul.mubr.bf16.gmra.mrb[0].mxu0 %v784
  %v1587 = vpop.f32.mrb[0].mxu0
  %v1588 = vadd.f32 %v752, %v1587
  %v1589 = vpop.f32.mrb[0].mxu0
  %v1590 = vadd.f32 %v756, %v1589
  %v1591 = vpop.f32.mrb[0].mxu0
  %v1592 = vpop.f32.mrb[0].mxu0
  %1593 = vdwg.mxu0
  %1594 = vmatprep.subr.bf16.mxu0 %v1298
  %1595 = vmatpush1.bf16.msra.mxu0 %v1297
  %1596 = vmatprep.subr.bf16.mxu0 %v1300
  %1597 = vmatpush1.bf16.msra.mxu0 %v1299
  %1598 = vmatprep.subr.bf16.mxu0 %v1302
  %1599 = vmatpush1.bf16.msra.mxu0 %v1301
  %1600 = vmatprep.subr.bf16.mxu0 %v1304
  %1601 = vmatpush1.bf16.msra.mxu0 %v1303
  %1602 = vmatprep.subr.bf16.mxu0 %v1306
  %1603 = vmatpush1.bf16.msra.mxu0 %v1305
  %1604 = vmatprep.subr.bf16.mxu0 %v1308
  %1605 = vmatpush1.bf16.msra.mxu0 %v1307
  %1606 = vmatprep.subr.bf16.mxu0 %v1310
  %1607 = vmatpush1.bf16.msra.mxu0 %v1309
  %1608 = vmatprep.subr.bf16.mxu0 %v1312
  %1609 = vmatpush1.bf16.msra.mxu0 %v1311
  %1610 = vmatprep.subr.bf16.mxu0 %v1314
  %1611 = vmatpush1.bf16.msra.mxu0 %v1313
  %1612 = vmatprep.subr.bf16.mxu0 %v1316
  %1613 = vmatpush1.bf16.msra.mxu0 %v1315
  %1614 = vmatprep.subr.bf16.mxu0 %v1318
  %1615 = vmatpush1.bf16.msra.mxu0 %v1317
  %1616 = vmatprep.subr.bf16.mxu0 %v1320
  %1617 = vmatpush1.bf16.msra.mxu0 %v1319
  %1618 = vmatprep.subr.bf16.mxu0 %v1322
  %1619 = vmatpush1.bf16.msra.mxu0 %v1321
  %1620 = vmatprep.subr.bf16.mxu0 %v1324
  %1621 = vmatpush1.bf16.msra.mxu0 %v1323
  %1622 = vmatprep.subr.bf16.mxu0 %v1326
  %1623 = vmatpush1.bf16.msra.mxu0 %v1325
  %1624 = vmatprep.subr.bf16.mxu0 %v1328
  %1625 = vmatpush1.bf16.msra.mxu0 %v1327
  %1626 = vmatprep.mubr.bf16.mxu0 %v808
  %1627 = vmatmul.mubr.bf16.gmra.mrb[0].mxu0 %v806
  %v1628 = vpop.f32.mrb[0].mxu0
  %v1629 = vadd.f32 %v1588, %v1628
  %v1630 = vpop.f32.mrb[0].mxu0
  %v1631 = vadd.f32 %v1590, %v1630
  %v1632 = vpop.f32.mrb[0].mxu0
  %v1633 = vpop.f32.mrb[0].mxu0
  %1634 = vdwg.mxu0
  %1635 = vmatprep.subr.bf16.mxu0 %v1330
  %1636 = vmatpush1.bf16.msra.mxu0 %v1329
  %1637 = vmatprep.subr.bf16.mxu0 %v1332
  %1638 = vmatpush1.bf16.msra.mxu0 %v1331
  %1639 = vmatprep.subr.bf16.mxu0 %v1334
  %1640 = vmatpush1.bf16.msra.mxu0 %v1333
  %1641 = vmatprep.subr.bf16.mxu0 %v1336
  %1642 = vmatpush1.bf16.msra.mxu0 %v1335
  %1643 = vmatprep.subr.bf16.mxu0 %v1338
  %1644 = vmatpush1.bf16.msra.mxu0 %v1337
  %1645 = vmatprep.subr.bf16.mxu0 %v1340
  %1646 = vmatpush1.bf16.msra.mxu0 %v1339
  %1647 = vmatprep.subr.bf16.mxu0 %v1342
  %1648 = vmatpush1.bf16.msra.mxu0 %v1341
  %1649 = vmatprep.subr.bf16.mxu0 %v1344
  %1650 = vmatpush1.bf16.msra.mxu0 %v1343
  %1651 = vmatprep.subr.bf16.mxu0 %v1346
  %1652 = vmatpush1.bf16.msra.mxu0 %v1345
  %1653 = vmatprep.subr.bf16.mxu0 %v1348
  %1654 = vmatpush1.bf16.msra.mxu0 %v1347
  %1655 = vmatprep.subr.bf16.mxu0 %v1350
  %1656 = vmatpush1.bf16.msra.mxu0 %v1349
  %1657 = vmatprep.subr.bf16.mxu0 %v1352
  %1658 = vmatpush1.bf16.msra.mxu0 %v1351
  %1659 = vmatprep.subr.bf16.mxu0 %v1354
  %1660 = vmatpush1.bf16.msra.mxu0 %v1353
  %1661 = vmatprep.subr.bf16.mxu0 %v1356
  %1662 = vmatpush1.bf16.msra.mxu0 %v1355
  %1663 = vmatprep.subr.bf16.mxu0 %v1358
  %1664 = vmatpush1.bf16.msra.mxu0 %v1357
  %1665 = vmatprep.subr.bf16.mxu0 %v1360
  %1666 = vmatpush1.bf16.msra.mxu0 %v1359
  %1667 = vmatprep.mubr.bf16.mxu0 %v805
  %1668 = vmatmul.mubr.bf16.gmra.mrb[0].mxu0 %v791
  %v1669 = vpop.f32.mrb[0].mxu0
  %v1670 = vadd.f32 %v1629, %v1669
  %v1671 = vpop.f32.mrb[0].mxu0
  %v1672 = vadd.f32 %v1631, %v1671
  %v1673 = vpop.f32.mrb[0].mxu0
  %v1674 = vpop.f32.mrb[0].mxu0
  %1675 = vdwg.mxu0
  %1676 = vmatprep.subr.bf16.mxu0 %v1362
  %1677 = vmatpush1.bf16.msra.mxu0 %v1361
  %1678 = vmatprep.subr.bf16.mxu0 %v1364
  %1679 = vmatpush1.bf16.msra.mxu0 %v1363
  %1680 = vmatprep.subr.bf16.mxu0 %v1366
  %1681 = vmatpush1.bf16.msra.mxu0 %v1365
  %1682 = vmatprep.subr.bf16.mxu0 %v1368
  %1683 = vmatpush1.bf16.msra.mxu0 %v1367
  %1684 = vmatprep.subr.bf16.mxu0 %v1370
  %1685 = vmatpush1.bf16.msra.mxu0 %v1369
  %1686 = vmatprep.subr.bf16.mxu0 %v1372
  %1687 = vmatpush1.bf16.msra.mxu0 %v1371
  %1688 = vmatprep.subr.bf16.mxu0 %v1374
  %1689 = vmatpush1.bf16.msra.mxu0 %v1373
  %1690 = vmatprep.subr.bf16.mxu0 %v1376
  %1691 = vmatpush1.bf16.msra.mxu0 %v1375
  %1692 = vmatprep.subr.bf16.mxu0 %v1378
  %1693 = vmatpush1.bf16.msra.mxu0 %v1377
  %1694 = vmatprep.subr.bf16.mxu0 %v1380
  %1695 = vmatpush1.bf16.msra.mxu0 %v1379
  %1696 = vmatprep.subr.bf16.mxu0 %v1382
  %1697 = vmatpush1.bf16.msra.mxu0 %v1381
  %1698 = vmatprep.subr.bf16.mxu0 %v1384
  %1699 = vmatpush1.bf16.msra.mxu0 %v1383
  %1700 = vmatprep.subr.bf16.mxu0 %v1386
  %1701 = vmatpush1.bf16.msra.mxu0 %v1385
  %1702 = vmatprep.subr.bf16.mxu0 %v1388
  %1703 = vmatpush1.bf16.msra.mxu0 %v1387
  %1704 = vmatprep.subr.bf16.mxu0 %v1390
  %1705 = vmatpush1.bf16.msra.mxu0 %v1389
  %1706 = vmatprep.subr.bf16.mxu0 %v1392
  %1707 = vmatpush1.bf16.msra.mxu0 %v1391
  %1708 = vmatprep.mubr.bf16.mxu0 %v809
  %1709 = vmatmul.mubr.bf16.gmra.mrb[0].mxu0 %v807
  %v1710 = vpop.f32.mrb[0].mxu0
  %v1711 = vadd.f32 %v1670, %v1710
  %v1712 = vpop.f32.mrb[0].mxu0
  %v1713 = vadd.f32 %v1672, %v1712
  %v1714 = vpop.f32.mrb[0].mxu0
  %v1715 = vpop.f32.mrb[0].mxu0
  %1716 = vdwg.mxu0
  %1717 = vmatprep.subr.bf16.mxu0 %v1394
  %1718 = vmatpush1.bf16.msra.mxu0 %v1393
  %1719 = vmatprep.subr.bf16.mxu0 %v1396
  %1720 = vmatpush1.bf16.msra.mxu0 %v1395
  %1721 = vmatprep.subr.bf16.mxu0 %v1398
  %1722 = vmatpush1.bf16.msra.mxu0 %v1397
  %1723 = vmatprep.subr.bf16.mxu0 %v1400
  %1724 = vmatpush1.bf16.msra.mxu0 %v1399
  %1725 = vmatprep.subr.bf16.mxu0 %v1402
  %1726 = vmatpush1.bf16.msra.mxu0 %v1401
  %1727 = vmatprep.subr.bf16.mxu0 %v1404
  %1728 = vmatpush1.bf16.msra.mxu0 %v1403
  %1729 = vmatprep.subr.bf16.mxu0 %v1406
  %1730 = vmatpush1.bf16.msra.mxu0 %v1405
  %1731 = vmatprep.subr.bf16.mxu0 %v1408
  %1732 = vmatpush1.bf16.msra.mxu0 %v1407
  %1733 = vmatprep.subr.bf16.mxu0 0
  %1734 = vmatpush1.bf16.msra.mxu0 0
  %1735 = vmatprep.subr.bf16.mxu0 0
  %1736 = vmatpush1.bf16.msra.mxu0 0
  %1737 = vmatprep.subr.bf16.mxu0 0
  %1738 = vmatpush1.bf16.msra.mxu0 0
  %1739 = vmatprep.subr.bf16.mxu0 0
  %1740 = vmatpush1.bf16.msra.mxu0 0
  %1741 = vmatprep.subr.bf16.mxu0 0
  %1742 = vmatpush1.bf16.msra.mxu0 0
  %1743 = vmatprep.subr.bf16.mxu0 0
  %1744 = vmatpush1.bf16.msra.mxu0 0
  %1745 = vmatprep.subr.bf16.mxu0 0
  %1746 = vmatpush1.bf16.msra.mxu0 0
  %1747 = vmatprep.subr.bf16.mxu0 0
  %1748 = vmatpush1.bf16.msra.mxu0 0
  %1749 = vmatprep.mubr.bf16.mxu0 0
  %1750 = vmatmul.mubr.bf16.gmra.mrb[0].mxu0 %v823
  %v1751 = vpop.f32.mrb[0].mxu0
  %v1752 = vadd.f32 %v1711, %v1751
  %v1753 = vpop.f32.mrb[0].mxu0
  %v1754 = vadd.f32 %v1713, %v1753
  %v1755 = vpop.f32.mrb[0].mxu0
  %v1756 = vpop.f32.mrb[0].mxu0
  %1757 = vdwg.mxu0
  %v1758 = vmax.f32 %v1752, 0.0
  %v1759 = vmax.f32 %v1754, 0.0
  %v1760 = vpack.c.bf16 %v1758, %v1758
  %v1761 = vpack.c.bf16 %v1759, %v1759
  %v1762 = vld [vmem:[%s5] sm:$0xff]
  %v1763 = vld [vmem:[%s5 + $0x8] sm:$0xff]
  %v1764 = vld [vmem:[%s5 + $0x10] sm:$0xff]
  %v1765 = vld [vmem:[%s5 + $0x18] sm:$0xff]
  %v1766 = vld [vmem:[%s5 + $0x20] sm:$0xff]
  %v1767 = vld [vmem:[%s5 + $0x28] sm:$0xff]
  %v1768 = vld [vmem:[%s5 + $0x30] sm:$0xff]
  %v1769 = vld [vmem:[%s5 + $0x38] sm:$0xff]
  %v1770 = vld [vmem:[%s5 + $0x40] sm:$0xff]
  %v1771 = vld [vmem:[%s5 + $0x48] sm:$0xff]
  %v1772 = vld [vmem:[%s5 + $0x50] sm:$0xff]
  %v1773 = vld [vmem:[%s5 + $0x58] sm:$0xff]
  %v1774 = vld [vmem:[%s5 + $0x60] sm:$0xff]
  %v1775 = vld [vmem:[%s5 + $0x68] sm:$0xff]
  %v1776 = vld [vmem:[%s5 + $0x70] sm:$0xff]
  %v1777 = vld [vmem:[%s5 + $0x78] sm:$0xff]
  %v1778 = vld [vmem:[%s5 + $0x80] sm:$0xff]
  %v1779 = vld [vmem:[%s5 + $0x88] sm:$0xff]
  %v1780 = vld [vmem:[%s5 + $0x90] sm:$0xff]
  %v1781 = vld [vmem:[%s5 + $0x98] sm:$0xff]
  %v1782 = vld [vmem:[%s5 + $0xa0] sm:$0xff]
  %v1783 = vld [vmem:[%s5 + $0xa8] sm:$0xff]
  %v1784 = vld [vmem:[%s5 + $0xb0] sm:$0xff]
  %v1785 = vld [vmem:[%s5 + $0xb8] sm:$0xff]
  %v1786 = vld [vmem:[%s5 + $0xc0] sm:$0xff]
  %v1787 = vld [vmem:[%s5 + $0xc8] sm:$0xff]
  %v1788 = vld [vmem:[%s5 + $0xd0] sm:$0xff]
  %v1789 = vld [vmem:[%s5 + $0xd8] sm:$0xff]
  %v1790 = vld [vmem:[%s5 + $0xe0] sm:$0xff]
  %v1791 = vld [vmem:[%s5 + $0xe8] sm:$0xff]
  %v1792 = vld [vmem:[%s5 + $0xf0] sm:$0xff]
  %v1793 = vld [vmem:[%s5 + $0xf8] sm:$0xff]
  %v1794 = vld [vmem:[%s6] sm:$0x3]
  %v1796 = vlaneseq
  %v1797 = vshrl.u32 %v1796, 7
  %v1798 = vsub.s32 0, %v1797
  %v1799 = vrot.slane %v1794, %v1798
  %v1800 = vlaneseq
  %v1801 = vshrl.u32 %v1800, 7
  %v1802 = vsub.s32 1, %v1801
  %v1803 = vrot.slane %v1794, %v1802
  %v1838 = vunpack.c.l.b16 %v1762
  %v1839 = vunpack.c.h.b16 %v1762
  %v1840 = vunpack.c.l.b16 %v1763
  %v1841 = vunpack.c.h.b16 %v1763
  %v1842 = vunpack.c.l.b16 %v1764
  %v1843 = vunpack.c.h.b16 %v1764
  %v1844 = vunpack.c.l.b16 %v1765
  %v1845 = vunpack.c.h.b16 %v1765
  %v1846 = vunpack.c.l.b16 %v1766
  %v1847 = vunpack.c.h.b16 %v1766
  %v1848 = vunpack.c.l.b16 %v1767
  %v1849 = vunpack.c.h.b16 %v1767
  %v1850 = vunpack.c.l.b16 %v1768
  %v1851 = vunpack.c.h.b16 %v1768
  %v1852 = vunpack.c.l.b16 %v1769
  %v1853 = vunpack.c.h.b16 %v1769
  %v1854 = vunpack.c.l.b16 %v1770
  %v1855 = vunpack.c.h.b16 %v1770
  %v1856 = vunpack.c.l.b16 %v1771
  %v1857 = vunpack.c.h.b16 %v1771
  %v1858 = vunpack.c.l.b16 %v1772
  %v1859 = vunpack.c.h.b16 %v1772
  %v1860 = vunpack.c.l.b16 %v1773
  %v1861 = vunpack.c.h.b16 %v1773
  %v1862 = vunpack.c.l.b16 %v1774
  %v1863 = vunpack.c.h.b16 %v1774
  %v1864 = vunpack.c.l.b16 %v1775
  %v1865 = vunpack.c.h.b16 %v1775
  %v1866 = vunpack.c.l.b16 %v1776
  %v1867 = vunpack.c.h.b16 %v1776
  %v1868 = vunpack.c.l.b16 %v1777
  %v1869 = vunpack.c.h.b16 %v1777
  %v1870 = vunpack.c.l.b16 %v1778
  %v1871 = vunpack.c.h.b16 %v1778
  %v1872 = vunpack.c.l.b16 %v1779
  %v1873 = vunpack.c.h.b16 %v1779
  %v1874 = vunpack.c.l.b16 %v1780
  %v1875 = vunpack.c.h.b16 %v1780
  %v1876 = vunpack.c.l.b16 %v1781
  %v1877 = vunpack.c.h.b16 %v1781
  %v1878 = vunpack.c.l.b16 %v1782
  %v1879 = vunpack.c.h.b16 %v1782
  %v1880 = vunpack.c.l.b16 %v1783
  %v1881 = vunpack.c.h.b16 %v1783
  %v1882 = vunpack.c.l.b16 %v1784
  %v1883 = vunpack.c.h.b16 %v1784
  %v1884 = vunpack.c.l.b16 %v1785
  %v1885 = vunpack.c.h.b16 %v1785
  %v1886 = vunpack.c.l.b16 %v1786
  %v1887 = vunpack.c.h.b16 %v1786
  %v1888 = vunpack.c.l.b16 %v1787
  %v1889 = vunpack.c.h.b16 %v1787
  %v1890 = vunpack.c.l.b16 %v1788
  %v1891 = vunpack.c.h.b16 %v1788
  %v1892 = vunpack.c.l.b16 %v1789
  %v1893 = vunpack.c.h.b16 %v1789
  %v1894 = vunpack.c.l.b16 %v1790
  %v1895 = vunpack.c.h.b16 %v1790
  %v1896 = vunpack.c.l.b16 %v1791
  %v1897 = vunpack.c.h.b16 %v1791
  %v1898 = vunpack.c.l.b16 %v1792
  %v1899 = vunpack.c.h.b16 %v1792
  %v1900 = vunpack.c.l.b16 %v1793
  %v1901 = vunpack.c.h.b16 %v1793
  %v1902 = vpack.c.b16 %v1840, %v1838
  %v1903 = vpack.c.b16 %v1841, %v1839
  %v1904 = vpack.c.b16 %v1844, %v1842
  %v1905 = vpack.c.b16 %v1845, %v1843
  %v1906 = vpack.c.b16 %v1848, %v1846
  %v1907 = vpack.c.b16 %v1849, %v1847
  %v1908 = vpack.c.b16 %v1852, %v1850
  %v1909 = vpack.c.b16 %v1853, %v1851
  %v1910 = vpack.c.b16 %v1856, %v1854
  %v1911 = vpack.c.b16 %v1857, %v1855
  %v1912 = vpack.c.b16 %v1860, %v1858
  %v1913 = vpack.c.b16 %v1861, %v1859
  %v1914 = vpack.c.b16 %v1864, %v1862
  %v1915 = vpack.c.b16 %v1865, %v1863
  %v1916 = vpack.c.b16 %v1868, %v1866
  %v1917 = vpack.c.b16 %v1869, %v1867
  %v1918 = vpack.c.b16 %v1872, %v1870
  %v1919 = vpack.c.b16 %v1873, %v1871
  %v1920 = vpack.c.b16 %v1876, %v1874
  %v1921 = vpack.c.b16 %v1877, %v1875
  %v1922 = vpack.c.b16 %v1880, %v1878
  %v1923 = vpack.c.b16 %v1881, %v1879
  %v1924 = vpack.c.b16 %v1884, %v1882
  %v1925 = vpack.c.b16 %v1885, %v1883
  %v1926 = vpack.c.b16 %v1888, %v1886
  %v1927 = vpack.c.b16 %v1889, %v1887
  %v1928 = vpack.c.b16 %v1892, %v1890
  %v1929 = vpack.c.b16 %v1893, %v1891
  %v1930 = vpack.c.b16 %v1896, %v1894
  %v1931 = vpack.c.b16 %v1897, %v1895
  %v1932 = vpack.c.b16 %v1900, %v1898
  %v1933 = vpack.c.b16 %v1901, %v1899
  %1966 = vmatprep.subr.bf16.mxu0 %v1903
  %1967 = vmatpush1.bf16.msra.mxu0 %v1902
  %1968 = vmatprep.subr.bf16.mxu0 %v1905
  %1969 = vmatpush1.bf16.msra.mxu0 %v1904
  %1970 = vmatprep.subr.bf16.mxu0 %v1907
  %1971 = vmatpush1.bf16.msra.mxu0 %v1906
  %1972 = vmatprep.subr.bf16.mxu0 %v1909
  %1973 = vmatpush1.bf16.msra.mxu0 %v1908
  %1974 = vmatprep.subr.bf16.mxu0 %v1911
  %1975 = vmatpush1.bf16.msra.mxu0 %v1910
  %1976 = vmatprep.subr.bf16.mxu0 %v1913
  %1977 = vmatpush1.bf16.msra.mxu0 %v1912
  %1978 = vmatprep.subr.bf16.mxu0 %v1915
  %1979 = vmatpush1.bf16.msra.mxu0 %v1914
  %1980 = vmatprep.subr.bf16.mxu0 %v1917
  %1981 = vmatpush1.bf16.msra.mxu0 %v1916
  %1982 = vmatprep.subr.bf16.mxu0 %v1919
  %1983 = vmatpush1.bf16.msra.mxu0 %v1918
  %1984 = vmatprep.subr.bf16.mxu0 %v1921
  %1985 = vmatpush1.bf16.msra.mxu0 %v1920
  %1986 = vmatprep.subr.bf16.mxu0 %v1923
  %1987 = vmatpush1.bf16.msra.mxu0 %v1922
  %1988 = vmatprep.subr.bf16.mxu0 %v1925
  %1989 = vmatpush1.bf16.msra.mxu0 %v1924
  %1990 = vmatprep.subr.bf16.mxu0 %v1927
  %1991 = vmatpush1.bf16.msra.mxu0 %v1926
  %1992 = vmatprep.subr.bf16.mxu0 %v1929
  %1993 = vmatpush1.bf16.msra.mxu0 %v1928
  %1994 = vmatprep.subr.bf16.mxu0 %v1931
  %1995 = vmatpush1.bf16.msra.mxu0 %v1930
  %1996 = vmatprep.subr.bf16.mxu0 %v1933
  %1997 = vmatpush1.bf16.msra.mxu0 %v1932
  %1998 = vmatprep.mubr.bf16.mxu0 %v1761
  %1999 = vmatmul.mubr.bf16.gmra.mrb[0].mxu0 %v1760
  %v2000 = vpop.f32.mrb[0].mxu0
  %v2001 = vadd.f32 %v1799, %v2000
  %v2002 = vpop.f32.mrb[0].mxu0
  %v2003 = vadd.f32 %v1803, %v2002
  %v2004 = vpop.f32.mrb[0].mxu0
  %v2005 = vpop.f32.mrb[0].mxu0
  %2006 = vdwg.mxu0
  %v2007 = vmax.f32 %v2001, 0.0
  %v2008 = vmax.f32 %v2003, 0.0
  %v2009 = vpack.c.bf16 %v2007, %v2007
  %v2010 = vpack.c.bf16 %v2008, %v2008
  %v2011 = vld [vmem:[%s7] sm:$0xf]
  %v2012 = vld [vmem:[%s7 + $0x4] sm:$0xf]
  %v2013 = vld [vmem:[%s7 + $0x8] sm:$0xf]
  %v2014 = vld [vmem:[%s7 + $0xc] sm:$0xf]
  %v2015 = vld [vmem:[%s7 + $0x10] sm:$0xf]
  %v2016 = vld [vmem:[%s7 + $0x14] sm:$0xf]
  %v2017 = vld [vmem:[%s7 + $0x18] sm:$0xf]
  %v2018 = vld [vmem:[%s7 + $0x1c] sm:$0xf]
  %v2019 = vld [vmem:[%s7 + $0x20] sm:$0xf]
  %v2020 = vld [vmem:[%s7 + $0x24] sm:$0xf]
  %v2021 = vld [vmem:[%s7 + $0x28] sm:$0xf]
  %v2022 = vld [vmem:[%s7 + $0x2c] sm:$0xf]
  %v2023 = vld [vmem:[%s7 + $0x30] sm:$0xf]
  %v2024 = vld [vmem:[%s7 + $0x34] sm:$0xf]
  %v2025 = vld [vmem:[%s7 + $0x38] sm:$0xf]
  %v2026 = vld [vmem:[%s7 + $0x3c] sm:$0xf]
  %v2027 = vld [vmem:[%s7 + $0x40] sm:$0xf]
  %v2028 = vld [vmem:[%s7 + $0x44] sm:$0xf]
  %v2029 = vld [vmem:[%s7 + $0x48] sm:$0xf]
  %v2030 = vld [vmem:[%s7 + $0x4c] sm:$0xf]
  %v2031 = vld [vmem:[%s7 + $0x50] sm:$0xf]
  %v2032 = vld [vmem:[%s7 + $0x54] sm:$0xf]
  %v2033 = vld [vmem:[%s7 + $0x58] sm:$0xf]
  %v2034 = vld [vmem:[%s7 + $0x5c] sm:$0xf]
  %v2035 = vld [vmem:[%s7 + $0x60] sm:$0xf]
  %v2036 = vld [vmem:[%s7 + $0x64] sm:$0xf]
  %v2037 = vld [vmem:[%s7 + $0x68] sm:$0xf]
  %v2038 = vld [vmem:[%s7 + $0x6c] sm:$0xf]
  %v2039 = vld [vmem:[%s7 + $0x70] sm:$0xf]
  %v2040 = vld [vmem:[%s7 + $0x74] sm:$0xf]
  %v2041 = vld [vmem:[%s7 + $0x78] sm:$0xf]
  %v2042 = vld [vmem:[%s7 + $0x7c] sm:$0xf]
  %v2043 = vld [vmem:[%s8] sm:$0x1]
  %v2045 = vlaneseq
  %v2046 = vshrl.u32 %v2045, 7
  %v2047 = vsub.s32 0, %v2046
  %v2048 = vrot.slane %v2043, %v2047
  %v2082 = vunpack.c.l.b16 %v2011
  %v2083 = vunpack.c.l.b16 %v2012
  %v2084 = vunpack.c.l.b16 %v2013
  %v2085 = vunpack.c.l.b16 %v2014
  %v2086 = vunpack.c.l.b16 %v2015
  %v2087 = vunpack.c.l.b16 %v2016
  %v2088 = vunpack.c.l.b16 %v2017
  %v2089 = vunpack.c.l.b16 %v2018
  %v2090 = vunpack.c.l.b16 %v2019
  %v2091 = vunpack.c.l.b16 %v2020
  %v2092 = vunpack.c.l.b16 %v2021
  %v2093 = vunpack.c.l.b16 %v2022
  %v2094 = vunpack.c.l.b16 %v2023
  %v2095 = vunpack.c.l.b16 %v2024
  %v2096 = vunpack.c.l.b16 %v2025
  %v2097 = vunpack.c.l.b16 %v2026
  %v2098 = vunpack.c.l.b16 %v2027
  %v2099 = vunpack.c.l.b16 %v2028
  %v2100 = vunpack.c.l.b16 %v2029
  %v2101 = vunpack.c.l.b16 %v2030
  %v2102 = vunpack.c.l.b16 %v2031
  %v2103 = vunpack.c.l.b16 %v2032
  %v2104 = vunpack.c.l.b16 %v2033
  %v2105 = vunpack.c.l.b16 %v2034
  %v2106 = vunpack.c.l.b16 %v2035
  %v2107 = vunpack.c.l.b16 %v2036
  %v2108 = vunpack.c.l.b16 %v2037
  %v2109 = vunpack.c.l.b16 %v2038
  %v2110 = vunpack.c.l.b16 %v2039
  %v2111 = vunpack.c.l.b16 %v2040
  %v2112 = vunpack.c.l.b16 %v2041
  %v2113 = vunpack.c.l.b16 %v2042
  %v2114 = vpack.c.b16 %v2083, %v2082
  %v2115 = vpack.c.b16 %v2085, %v2084
  %v2116 = vpack.c.b16 %v2087, %v2086
  %v2117 = vpack.c.b16 %v2089, %v2088
  %v2118 = vpack.c.b16 %v2091, %v2090
  %v2119 = vpack.c.b16 %v2093, %v2092
  %v2120 = vpack.c.b16 %v2095, %v2094
  %v2121 = vpack.c.b16 %v2097, %v2096
  %v2122 = vpack.c.b16 %v2099, %v2098
  %v2123 = vpack.c.b16 %v2101, %v2100
  %v2124 = vpack.c.b16 %v2103, %v2102
  %v2125 = vpack.c.b16 %v2105, %v2104
  %v2126 = vpack.c.b16 %v2107, %v2106
  %v2127 = vpack.c.b16 %v2109, %v2108
  %v2128 = vpack.c.b16 %v2111, %v2110
  %v2129 = vpack.c.b16 %v2113, %v2112
  %2146 = vmatprep.subr.bf16.mxu0 0
  %2147 = vmatpush1.bf16.msra.mxu0 %v2114
  %2148 = vmatprep.subr.bf16.mxu0 0
  %2149 = vmatpush1.bf16.msra.mxu0 %v2115
  %2150 = vmatprep.subr.bf16.mxu0 0
  %2151 = vmatpush1.bf16.msra.mxu0 %v2116
  %2152 = vmatprep.subr.bf16.mxu0 0
  %2153 = vmatpush1.bf16.msra.mxu0 %v2117
  %2154 = vmatprep.subr.bf16.mxu0 0
  %2155 = vmatpush1.bf16.msra.mxu0 %v2118
  %2156 = vmatprep.subr.bf16.mxu0 0
  %2157 = vmatpush1.bf16.msra.mxu0 %v2119
  %2158 = vmatprep.subr.bf16.mxu0 0
  %2159 = vmatpush1.bf16.msra.mxu0 %v2120
  %2160 = vmatprep.subr.bf16.mxu0 0
  %2161 = vmatpush1.bf16.msra.mxu0 %v2121
  %2162 = vmatprep.subr.bf16.mxu0 0
  %2163 = vmatpush1.bf16.msra.mxu0 %v2122
  %2164 = vmatprep.subr.bf16.mxu0 0
  %2165 = vmatpush1.bf16.msra.mxu0 %v2123
  %2166 = vmatprep.subr.bf16.mxu0 0
  %2167 = vmatpush1.bf16.msra.mxu0 %v2124
  %2168 = vmatprep.subr.bf16.mxu0 0
  %2169 = vmatpush1.bf16.msra.mxu0 %v2125
  %2170 = vmatprep.subr.bf16.mxu0 0
  %2171 = vmatpush1.bf16.msra.mxu0 %v2126
  %2172 = vmatprep.subr.bf16.mxu0 0
  %2173 = vmatpush1.bf16.msra.mxu0 %v2127
  %2174 = vmatprep.subr.bf16.mxu0 0
  %2175 = vmatpush1.bf16.msra.mxu0 %v2128
  %2176 = vmatprep.subr.bf16.mxu0 0
  %2177 = vmatpush1.bf16.msra.mxu0 %v2129
  %2178 = vmatprep.mubr.bf16.mxu0 %v2010
  %2179 = vmatmul.mubr.bf16.gmra.mrb[0].mxu0 %v2009
  %v2180 = vpop.f32.mrb[0].mxu0
  %v2181 = vadd.f32 %v2048, %v2180
  %v2182 = vpop.f32.mrb[0].mxu0
  %v2183 = vpop.f32.mrb[0].mxu0
  %v2184 = vpop.f32.mrb[0].mxu0
  %2185 = vdwg.mxu0
  %v2186 = vmax.f32 %v2181, 0.0
  %v2187 = vand.u32 2147483647, %v2181
  %v2188 = vsub.f32 0.0, %v2187
  %v2189 = vmul.f32 %v2188, 1.442695
  %v2190 = vpow.pop %v2189
  %v2191 = vadd.f32 %v2190, 1.0
  %v2192 = vlog2.pop %v2191
  %v2193 = vmul.f32 %v2192, 0.6931472
  %v2194 = vmul.f32 -0.5, %v2190
  %v2195 = vadd.f32 %v2194, 1.0
  %v2196 = vmul.f32 %v2195, %v2190
  %v2197 = vand.u32 2147483647, %v2190
  %vm2198 = vcmp.lt.f32.partialorder %v2197, 0.0004427343
  %v2199 = vsel %vm2198, %v2196, %v2193
  %v2200 = vadd.f32 %v2186, %v2199
  %v2201 = vadd.f32 %v2200, 1.0
  %v2202 = vlaneseq
  %v2203 = vand.u32 %v2202, 127
  %vm2204 = vcmp.lt.s32.totalorder %v2203, 6
  %v2205 = vsel %vm2204, %v2201, %v2181
  %vm2206 = vcmask 58368
  %2207 = vst.msk [vmem:[%s9] sm:$0x3] %vm2206, %v2205
  // Predicated region
  $region38: #{net_forward.9} parent=0 // pred_check
    _
  $region39: #{net_forward.9} parent=0 // pred_check_branch
    %2209 = sbr.rel (0) target = $region41
  $region40: #{net_forward.9} parent=0 // pred_region
    _
  $region41: #{net_forward.9} parent=0 // pred_fallthru
    _
  // Predicated region
  $region42: #{net_forward.9} parent=0 // pred_check
    _
  $region43: #{net_forward.9} parent=0 // pred_check_branch
    %2211 = sbr.rel (0) target = $region45
  $region44: #{net_forward.9} parent=0 // pred_region
    _
  $region45: #{net_forward.9} parent=0 // pred_fallthru
    _

</llo_original>
